<compile_context>
chip_gen: v5e
topology: v5e:2x2
jax: 0.10.0
libtpu: 0.0.40
codegen_flags: <defaults>
</compile_context>

<pallas_src>
import functools

import jax
import jax.numpy as jnp
from jax.experimental import pallas as pl
from jax.experimental.pallas import tpu as pltpu

BN_EPS = 1e-5


# ------------------------------------------------------------------ Pallas kernel

def _bottleneck_kernel(x_ref, w1_ref, b1_ref, w2_ref, b2_ref, w3_ref, b3_ref,
                       o_ref, pad_ref, imcol_ref, lhs_ref,
                       *, H, W, planes, rh, has_downsample):
    """Fused Bottleneck block for one batch element.

    refs:
      x    (1,H,W,Cin)  bf16   activation tile
      w1   (Cin,P)      bf16   conv1 (BN folded)        b1 (1,P)    f32
      w2   (9P,P)       bf16   conv2 as im2col matmul   b2 (1,P)    f32
      w3   (K3,4P)      bf16   conv3 [stacked with downsample proj if present]
      b3   (1,4P)       f32    b3 (+ bd if downsample)
      out  (1,H,W,4P)   f32
    scratch:
      pad   (H+2,W+2,P) bf16   zero-padded h1
      imcol (M,9P)      bf16   im2col of pad
      lhs   (M,K3)      bf16   [h2] or [h2 | x] for the fused conv3(+shortcut) matmul
    """
    P = planes
    cin = x_ref.shape[-1]
    cout = o_ref.shape[-1]
    M = H * W
    CH = rh * W                      # rows of M per epilogue chunk
    n_chunks = H // rh

    x_flat = x_ref[0].reshape(M, cin)                              # bf16

    # ---- conv1 (1x1) + bn1 (folded) + relu -------------------------------------------
    h1 = jnp.dot(x_flat, w1_ref[...], preferred_element_type=jnp.float32)
    h1 = jnp.maximum(h1 + b1_ref[...], 0.0)                        # (M, P) f32

    # ---- conv2 (3x3, pad=1, stride=1) + bn2 (folded) + relu ---------------------------
    # bf16 padded scratch -> bf16 im2col (M, 9P) -> ONE MXU matmul with K = 9P.
    # Full re-zero each step keeps correctness when the batch grid is core-sharded.
    pad_ref[...] = jnp.zeros_like(pad_ref)
    pad_ref[1:H + 1, 1:W + 1, :] = h1.reshape(H, W, P).astype(jnp.bfloat16)
    for t in range(9):                                             # one-time window copies
        ki, kj = divmod(t, 3)
        imcol_ref[:, t * P:(t + 1) * P] = pad_ref[ki:ki + H, kj:kj + W, :].reshape(M, P)
    h2 = jnp.dot(imcol_ref[...], w2_ref[...], preferred_element_type=jnp.float32)
    h2 = jnp.maximum(h2 + b2_ref[...], 0.0)                        # (M, P) f32

    # ---- epilogue lhs: [h2] (identity shortcut) or [h2 | x] (fused downsample) --------
    lhs_ref[:, :P] = h2.astype(jnp.bfloat16)
    if has_downsample:
        lhs_ref[:, P:] = x_flat

    w3 = w3_ref[...]
    b3 = b3_ref[...]

    # ---- conv3 (1x1) + bn3 (+ shortcut) + relu, chunked over row blocks ---------------
    def epilogue(c, carry):
        m0 = pl.multiple_of(c * CH, CH)
        r0 = pl.multiple_of(c * rh, rh)
        out_c = jnp.dot(lhs_ref[pl.ds(m0, CH), :], w3,
                        preferred_element_type=jnp.float32) + b3   # (CH, 4P) f32
        if not has_downsample:
            res = x_ref[0, pl.ds(r0, rh), :, :].reshape(CH, cout).astype(jnp.float32)
            out_c = out_c + res
        out_c = jnp.maximum(out_c, 0.0)
        o_ref[0, pl.ds(r0, rh), :, :] = out_c.reshape(rh, W, cout).astype(o_ref.dtype)
        return carry

    jax.lax.fori_loop(0, n_chunks, epilogue, 0, unroll=True)


# ------------------------------------------------------------------ wrapper

def _pick_row_chunk(H, W, cout):
    """Largest divisor of H such that one f32 output chunk stays ~<=64 KB (<=16 vregs)."""
    target_m = max(8, (64 * 1024) // (4 * cout))
    rh = max(1, min(H, target_m // W))
    while H % rh:
        rh -= 1
    return rh


def bottleneck_forward(x_nchw, prep):
    """NCHW in / NCHW out, matching the PyTorch module's forward (eval mode)."""
    x = jnp.transpose(x_nchw, (0, 2, 3, 1)).astype(jnp.bfloat16)   # NCHW -> NHWC, bf16
    N, H, W, cin = x.shape
    P = prep['w2'].shape[-1]
    K3 = prep['w3'].shape[0]
    cout = prep['w3'].shape[1]
    has_down = (K3 != P)                                           # downsample fused into w3
    if not has_down:
        assert cin == cout, "identity shortcut requires inplanes == 4*planes"
    M = H * W
    rh = _pick_row_chunk(H, W, cout)

    kern = functools.partial(_bottleneck_kernel, H=H, W=W, planes=P, rh=rh,
                             has_downsample=has_down)

    in_specs = [
        pl.BlockSpec((1, H, W, cin), lambda n: (n, 0, 0, 0)),      # per-batch activation tile
        pl.BlockSpec((cin, P), lambda n: (0, 0)),                  # weights stay VMEM-resident
        pl.BlockSpec((1, P), lambda n: (0, 0)),
        pl.BlockSpec((9 * P, P), lambda n: (0, 0)),
        pl.BlockSpec((1, P), lambda n: (0, 0)),
        pl.BlockSpec((K3, cout), lambda n: (0, 0)),
        pl.BlockSpec((1, cout), lambda n: (0, 0)),
    ]

    out_nhwc = pl.pallas_call(
        kern,
        grid=(N,),
        in_specs=in_specs,
        out_specs=pl.BlockSpec((1, H, W, cout), lambda n: (n, 0, 0, 0)),
        out_shape=jax.ShapeDtypeStruct((N, H, W, cout), jnp.float32),
        scratch_shapes=[
            pltpu.VMEM((H + 2, W + 2, P), jnp.bfloat16),           # padded h1
            pltpu.VMEM((M, 9 * P), jnp.bfloat16),                  # im2col
            pltpu.VMEM((M, K3), jnp.bfloat16),                     # conv3 lhs ([h2] or [h2|x])
        ],
        compiler_params=pltpu.CompilerParams(
            dimension_semantics=("parallel",),                     # megacore: batch over TCs
            vmem_limit_bytes=32 * 1024 * 1024),                    # v7x-safe VMEM budget
    )(x, prep['w1'], prep['b1'], prep['w2'], prep['b2'], prep['w3'], prep['b3'])
    return jnp.transpose(out_nhwc, (0, 3, 1, 2))                   # NHWC -> NCHW


# ------------------------------------------------------------------ parameters

def _fold_bn(w_oihw, bn):
    gamma, beta, mean, var = bn
    s = gamma / jnp.sqrt(var + BN_EPS)                             # eval-mode BN scale
    return w_oihw * s[:, None, None, None], beta - mean * s


def init_bottleneck_params(key, inplanes, planes, with_downsample):
    """Raw parameters mirroring the PyTorch module (OIHW conv weights + BN stats)."""
    ks = list(jax.random.split(key, 8))

    def conv_w(k, o, i, kh, kw):
        std = (2.0 / (o * kh * kw)) ** 0.5
        return std * jax.random.normal(k, (o, i, kh, kw), jnp.float32)

    def bn_params(k, c):
        k1, k2, k3, k4 = jax.random.split(k, 4)
        gamma = 1.0 + 0.1 * jax.random.normal(k1, (c,), jnp.float32)
        beta = 0.1 * jax.random.normal(k2, (c,), jnp.float32)
        mean = 0.1 * jax.random.normal(k3, (c,), jnp.float32)
        var = 1.0 + 0.2 * jax.random.uniform(k4, (c,), jnp.float32)
        return gamma, beta, mean, var

    p = {'conv1_w': conv_w(ks[0], planes, inplanes, 1, 1), 'bn1': bn_params(ks[1], planes),
         'conv2_w': conv_w(ks[2], planes, planes, 3, 3),   'bn2': bn_params(ks[3], planes),
         'conv3_w': conv_w(ks[4], 4 * planes, planes, 1, 1), 'bn3': bn_params(ks[5], 4 * planes)}
    if with_downsample:
        p['down_w'] = conv_w(ks[6], 4 * planes, inplanes, 1, 1)
        p['dbn'] = bn_params(ks[7], 4 * planes)
    return p


def prepare_params(raw):
    """One-time prep: fold BN, reshape to matmul form (im2col w2, fused conv3+shortcut),
    cast weights to bf16."""
    prep = {}
    w1, b1 = _fold_bn(raw['conv1_w'], raw['bn1'])
    prep['w1'] = jnp.transpose(w1[:, :, 0, 0], (1, 0)).astype(jnp.bfloat16)       # (Cin, P)
    prep['b1'] = b1.reshape(1, -1).astype(jnp.float32)

    w2, b2 = _fold_bn(raw['conv2_w'], raw['bn2'])
    P = w2.shape[0]
    prep['w2'] = jnp.transpose(w2, (2, 3, 1, 0)).reshape(9 * P, P).astype(jnp.bfloat16)  # (9P,P)
    prep['b2'] = b2.reshape(1, -1).astype(jnp.float32)

    w3, b3 = _fold_bn(raw['conv3_w'], raw['bn3'])
    w3m = jnp.transpose(w3[:, :, 0, 0], (1, 0))                                   # (P, 4P)
    b3v = b3
    if 'down_w' in raw:
        wd, bd = _fold_bn(raw['down_w'], raw['dbn'])
        wdm = jnp.transpose(wd[:, :, 0, 0], (1, 0))                               # (Cin, 4P)
        w3m = jnp.concatenate([w3m, wdm], axis=0)                                 # (P+Cin, 4P)
        b3v = b3 + bd                                                             # pre-summed bias
    prep['w3'] = w3m.astype(jnp.bfloat16)
    prep['b3'] = b3v.reshape(1, -1).astype(jnp.float32)
    return prep


# ------------------------------------------------------------------ plain-XLA reference

def reference_forward(x_nchw, raw):
    """Un-fused f32 reference: conv -> BN (eval) -> ReLU chain, for numeric validation."""
    x = jnp.transpose(x_nchw, (0, 2, 3, 1)).astype(jnp.float32)
    dn = ('NHWC', 'HWIO', 'NHWC')

    def conv(h, w_oihw, pad='VALID'):
        w = jnp.transpose(w_oihw, (2, 3, 1, 0))
        return jax.lax.conv_general_dilated(h, w, (1, 1), pad, dimension_numbers=dn)

    def bn(h, p):
        gamma, beta, mean, var = p
        return (h - mean) * (gamma / jnp.sqrt(var + BN_EPS)) + beta

    h = jax.nn.relu(bn(conv(x, raw['conv1_w']), raw['bn1']))
    h = jax.nn.relu(bn(conv(h, raw['conv2_w'], pad=((1, 1), (1, 1))), raw['bn2']))
    h = bn(conv(h, raw['conv3_w']), raw['bn3'])
    res = x if 'down_w' not in raw else bn(conv(x, raw['down_w']), raw['dbn'])
    return jnp.transpose(jax.nn.relu(h + res), (0, 3, 1, 2))


# ------------------------------------------------------------------ main

if __name__ == "__main__":
    key = jax.random.PRNGKey(0)
    kp1, kp2, kx1, kx2 = jax.random.split(key, 4)

    fwd = jax.jit(bottleneck_forward)

    # Config A: identity shortcut (downsample=None) -> inplanes == 4*planes.
    planes_a, inplanes_a = 64, 256
    raw_a = init_bottleneck_params(kp1, inplanes_a, planes_a, with_downsample=False)
    prep_a = prepare_params(raw_a)
    x_a = jax.random.normal(kx1, (4, inplanes_a, 16, 16), dtype=jnp.float32)   # NCHW
    out_a = jax.block_until_ready(fwd(x_a, prep_a))
    ref_a = reference_forward(x_a, raw_a)
    err_a = float(jnp.max(jnp.abs(out_a - ref_a)) / (jnp.max(jnp.abs(ref_a)) + 1e-6))

    # Config B: 1x1-conv+BN downsample on the shortcut (inplanes != 4*planes).
    planes_b, inplanes_b = 32, 64
    raw_b = init_bottleneck_params(kp2, inplanes_b, planes_b, with_downsample=True)
    prep_b = prepare_params(raw_b)
    x_b = jax.random.normal(kx2, (2, inplanes_b, 16, 16), dtype=jnp.float32)
    out_b = jax.block_until_ready(fwd(x_b, prep_b))
    ref_b = reference_forward(x_b, raw_b)
    err_b = float(jnp.max(jnp.abs(out_b - ref_b)) / (jnp.max(jnp.abs(ref_b)) + 1e-6))

    assert out_a.shape == (4, 4 * planes_a, 16, 16) and out_a.dtype == jnp.float32
    assert out_b.shape == (2, 4 * planes_b, 16, 16) and out_b.dtype == jnp.float32
    assert bool(jnp.all(jnp.isfinite(out_a))) and bool(jnp.all(jnp.isfinite(out_b)))
    assert err_a < 5e-2 and err_b < 5e-2, (err_a, err_b)
    print("KERNEL_OK")
</pallas_src>

<mosaic_0001>
module attributes {stable_mosaic.version = 11 : i64} {
  func.func @_bottleneck_kernel(%arg0: i32, %arg1: memref<1x16x16x256xbf16, #tpu.memory_space<vmem>>, %arg2: memref<256x64xbf16, #tpu.memory_space<vmem>>, %arg3: memref<1x64xf32, #tpu.memory_space<vmem>>, %arg4: memref<576x64xbf16, #tpu.memory_space<vmem>>, %arg5: memref<1x64xf32, #tpu.memory_space<vmem>>, %arg6: memref<64x256xbf16, #tpu.memory_space<vmem>>, %arg7: memref<1x256xf32, #tpu.memory_space<vmem>>, %arg8: memref<1x16x16x256xf32, #tpu.memory_space<vmem>>, %arg9: memref<18x18x64xbf16, #tpu.memory_space<vmem>>, %arg10: memref<256x576xbf16, #tpu.memory_space<vmem>>, %arg11: memref<256x64xbf16, #tpu.memory_space<vmem>>) attributes {dimension_semantics = [#tpu.dimension_semantics<parallel>], iteration_bounds = array<i64: 4>, scalar_prefetch = 0 : i64, scratch_operands = 3 : i64, tpu.core_type = #tpu.core_type<tc>, window_params = [{transform_indices = @transform_0, window_bounds = array<i64: 1, 16, 16, 256>}, {pipeline_mode = #tpu.pipeline_mode<synchronous>, transform_indices = @transform_1, window_bounds = array<i64: 256, 64>}, {pipeline_mode = #tpu.pipeline_mode<synchronous>, transform_indices = @transform_2, window_bounds = array<i64: 1, 64>}, {pipeline_mode = #tpu.pipeline_mode<synchronous>, transform_indices = @transform_3, window_bounds = array<i64: 576, 64>}, {pipeline_mode = #tpu.pipeline_mode<synchronous>, transform_indices = @transform_4, window_bounds = array<i64: 1, 64>}, {pipeline_mode = #tpu.pipeline_mode<synchronous>, transform_indices = @transform_5, window_bounds = array<i64: 64, 256>}, {pipeline_mode = #tpu.pipeline_mode<synchronous>, transform_indices = @transform_6, window_bounds = array<i64: 1, 256>}, {transform_indices = @transform_7, window_bounds = array<i64: 1, 16, 16, 256>}]} {
    %c0 = arith.constant 0 : index
    %c0_0 = arith.constant 0 : index
    %c0_1 = arith.constant 0 : index
    %c0_2 = arith.constant 0 : index
    %0 = vector.load %arg1[%c0, %c0_0, %c0_1, %c0_2] : memref<1x16x16x256xbf16, #tpu.memory_space<vmem>>, vector<1x16x16x256xbf16>
    %1 = vector.shape_cast %0 : vector<1x16x16x256xbf16> to vector<16x16x256xbf16>
    %2 = vector.shape_cast %1 : vector<16x16x256xbf16> to vector<256x256xbf16>
    %c0_3 = arith.constant 0 : index
    %c0_4 = arith.constant 0 : index
    %3 = vector.load %arg2[%c0_3, %c0_4] : memref<256x64xbf16, #tpu.memory_space<vmem>>, vector<256x64xbf16>
    %cst = arith.constant dense<0.000000e+00> : vector<256x64xf32>
    %4 = tpu.matmul %2, %3, %cst {dimension_numbers = #tpu.dot_dimension_numbers<[1], [0], [0], [1], [0, 0, 1, 1], [], []>} : vector<256x256xbf16>, vector<256x64xbf16>, vector<256x64xf32> -> vector<256x64xf32>
    %c0_5 = arith.constant 0 : index
    %c0_6 = arith.constant 0 : index
    %5 = vector.load %arg3[%c0_5, %c0_6] : memref<1x64xf32, #tpu.memory_space<vmem>>, vector<1x64xf32>
    %6 = vector.broadcast %5 : vector<1x64xf32> to vector<256x64xf32>
    %7 = arith.addf %4, %6 : vector<256x64xf32>
    %cst_7 = arith.constant 0.000000e+00 : f32
    %8 = vector.broadcast %cst_7 : f32 to vector<256x64xf32>
    %9 = arith.maximumf %7, %8 : vector<256x64xf32>
    %cst_8 = arith.constant 0.000000e+00 : bf16
    %10 = vector.broadcast %cst_8 : bf16 to vector<18x18x64xbf16>
    %c0_9 = arith.constant 0 : index
    %c0_10 = arith.constant 0 : index
    %c0_11 = arith.constant 0 : index
    %11 = vector.load %arg9[%c0_9, %c0_10, %c0_11] : memref<18x18x64xbf16, #tpu.memory_space<vmem>>, vector<18x18x64xbf16>
    tpu.vector_store %arg9[%c0_9, %c0_10, %c0_11], %10 {strides = array<i32>} : memref<18x18x64xbf16, #tpu.memory_space<vmem>>, vector<18x18x64xbf16>,
    %12 = vector.shape_cast %9 : vector<256x64xf32> to vector<16x16x64xf32>
    %13 = arith.truncf %12 : vector<16x16x64xf32> to vector<16x16x64xbf16>
    %c1 = arith.constant 1 : index
    %c1_12 = arith.constant 1 : index
    %c0_13 = arith.constant 0 : index
    %14 = vector.load %arg9[%c1, %c1_12, %c0_13] : memref<18x18x64xbf16, #tpu.memory_space<vmem>>, vector<16x16x64xbf16>
    tpu.vector_store %arg9[%c1, %c1_12, %c0_13], %13 {strides = array<i32>} : memref<18x18x64xbf16, #tpu.memory_space<vmem>>, vector<16x16x64xbf16>,
    %c0_14 = arith.constant 0 : index
    %c0_15 = arith.constant 0 : index
    %c0_16 = arith.constant 0 : index
    %15 = vector.load %arg9[%c0_14, %c0_15, %c0_16] : memref<18x18x64xbf16, #tpu.memory_space<vmem>>, vector<16x16x64xbf16>
    %16 = vector.shape_cast %15 : vector<16x16x64xbf16> to vector<256x64xbf16>
    %c0_17 = arith.constant 0 : index
    %c0_18 = arith.constant 0 : index
    %17 = vector.load %arg10[%c0_17, %c0_18] : memref<256x576xbf16, #tpu.memory_space<vmem>>, vector<256x64xbf16>
    tpu.vector_store %arg10[%c0_17, %c0_18], %16 {strides = array<i32>} : memref<256x576xbf16, #tpu.memory_space<vmem>>, vector<256x64xbf16>,
    %c0_19 = arith.constant 0 : index
    %c1_20 = arith.constant 1 : index
    %c0_21 = arith.constant 0 : index
    %18 = vector.load %arg9[%c0_19, %c1_20, %c0_21] : memref<18x18x64xbf16, #tpu.memory_space<vmem>>, vector<16x16x64xbf16>
    %19 = vector.shape_cast %18 : vector<16x16x64xbf16> to vector<256x64xbf16>
    %c0_22 = arith.constant 0 : index
    %c64 = arith.constant 64 : index
    %20 = vector.load %arg10[%c0_22, %c64] : memref<256x576xbf16, #tpu.memory_space<vmem>>, vector<256x64xbf16>
    tpu.vector_store %arg10[%c0_22, %c64], %19 {strides = array<i32>} : memref<256x576xbf16, #tpu.memory_space<vmem>>, vector<256x64xbf16>,
    %c0_23 = arith.constant 0 : index
    %c2 = arith.constant 2 : index
    %c0_24 = arith.constant 0 : index
    %21 = vector.load %arg9[%c0_23, %c2, %c0_24] : memref<18x18x64xbf16, #tpu.memory_space<vmem>>, vector<16x16x64xbf16>
    %22 = vector.shape_cast %21 : vector<16x16x64xbf16> to vector<256x64xbf16>
    %c0_25 = arith.constant 0 : index
    %c128 = arith.constant 128 : index
    %23 = vector.load %arg10[%c0_25, %c128] : memref<256x576xbf16, #tpu.memory_space<vmem>>, vector<256x64xbf16>
    tpu.vector_store %arg10[%c0_25, %c128], %22 {strides = array<i32>} : memref<256x576xbf16, #tpu.memory_space<vmem>>, vector<256x64xbf16>,
    %c1_26 = arith.constant 1 : index
    %c0_27 = arith.constant 0 : index
    %c0_28 = arith.constant 0 : index
    %24 = vector.load %arg9[%c1_26, %c0_27, %c0_28] : memref<18x18x64xbf16, #tpu.memory_space<vmem>>, vector<16x16x64xbf16>
    %25 = vector.shape_cast %24 : vector<16x16x64xbf16> to vector<256x64xbf16>
    %c0_29 = arith.constant 0 : index
    %c192 = arith.constant 192 : index
    %26 = vector.load %arg10[%c0_29, %c192] : memref<256x576xbf16, #tpu.memory_space<vmem>>, vector<256x64xbf16>
    tpu.vector_store %arg10[%c0_29, %c192], %25 {strides = array<i32>} : memref<256x576xbf16, #tpu.memory_space<vmem>>, vector<256x64xbf16>,
    %c1_30 = arith.constant 1 : index
    %c1_31 = arith.constant 1 : index
    %c0_32 = arith.constant 0 : index
    %27 = vector.load %arg9[%c1_30, %c1_31, %c0_32] : memref<18x18x64xbf16, #tpu.memory_space<vmem>>, vector<16x16x64xbf16>
    %28 = vector.shape_cast %27 : vector<16x16x64xbf16> to vector<256x64xbf16>
    %c0_33 = arith.constant 0 : index
    %c256 = arith.constant 256 : index
    %29 = vector.load %arg10[%c0_33, %c256] : memref<256x576xbf16, #tpu.memory_space<vmem>>, vector<256x64xbf16>
    tpu.vector_store %arg10[%c0_33, %c256], %28 {strides = array<i32>} : memref<256x576xbf16, #tpu.memory_space<vmem>>, vector<256x64xbf16>,
    %c1_34 = arith.constant 1 : index
    %c2_35 = arith.constant 2 : index
    %c0_36 = arith.constant 0 : index
    %30 = vector.load %arg9[%c1_34, %c2_35, %c0_36] : memref<18x18x64xbf16, #tpu.memory_space<vmem>>, vector<16x16x64xbf16>
    %31 = vector.shape_cast %30 : vector<16x16x64xbf16> to vector<256x64xbf16>
    %c0_37 = arith.constant 0 : index
    %c320 = arith.constant 320 : index
    %32 = vector.load %arg10[%c0_37, %c320] : memref<256x576xbf16, #tpu.memory_space<vmem>>, vector<256x64xbf16>
    tpu.vector_store %arg10[%c0_37, %c320], %31 {strides = array<i32>} : memref<256x576xbf16, #tpu.memory_space<vmem>>, vector<256x64xbf16>,
    %c2_38 = arith.constant 2 : index
    %c0_39 = arith.constant 0 : index
    %c0_40 = arith.constant 0 : index
    %33 = vector.load %arg9[%c2_38, %c0_39, %c0_40] : memref<18x18x64xbf16, #tpu.memory_space<vmem>>, vector<16x16x64xbf16>
    %34 = vector.shape_cast %33 : vector<16x16x64xbf16> to vector<256x64xbf16>
    %c0_41 = arith.constant 0 : index
    %c384 = arith.constant 384 : index
    %35 = vector.load %arg10[%c0_41, %c384] : memref<256x576xbf16, #tpu.memory_space<vmem>>, vector<256x64xbf16>
    tpu.vector_store %arg10[%c0_41, %c384], %34 {strides = array<i32>} : memref<256x576xbf16, #tpu.memory_space<vmem>>, vector<256x64xbf16>,
    %c2_42 = arith.constant 2 : index
    %c1_43 = arith.constant 1 : index
    %c0_44 = arith.constant 0 : index
    %36 = vector.load %arg9[%c2_42, %c1_43, %c0_44] : memref<18x18x64xbf16, #tpu.memory_space<vmem>>, vector<16x16x64xbf16>
    %37 = vector.shape_cast %36 : vector<16x16x64xbf16> to vector<256x64xbf16>
    %c0_45 = arith.constant 0 : index
    %c448 = arith.constant 448 : index
    %38 = vector.load %arg10[%c0_45, %c448] : memref<256x576xbf16, #tpu.memory_space<vmem>>, vector<256x64xbf16>
    tpu.vector_store %arg10[%c0_45, %c448], %37 {strides = array<i32>} : memref<256x576xbf16, #tpu.memory_space<vmem>>, vector<256x64xbf16>,
    %c2_46 = arith.constant 2 : index
    %c2_47 = arith.constant 2 : index
    %c0_48 = arith.constant 0 : index
    %39 = vector.load %arg9[%c2_46, %c2_47, %c0_48] : memref<18x18x64xbf16, #tpu.memory_space<vmem>>, vector<16x16x64xbf16>
    %40 = vector.shape_cast %39 : vector<16x16x64xbf16> to vector<256x64xbf16>
    %c0_49 = arith.constant 0 : index
    %c512 = arith.constant 512 : index
    %41 = vector.load %arg10[%c0_49, %c512] : memref<256x576xbf16, #tpu.memory_space<vmem>>, vector<256x64xbf16>
    tpu.vector_store %arg10[%c0_49, %c512], %40 {strides = array<i32>} : memref<256x576xbf16, #tpu.memory_space<vmem>>, vector<256x64xbf16>,
    %c0_50 = arith.constant 0 : index
    %c0_51 = arith.constant 0 : index
    %42 = vector.load %arg10[%c0_50, %c0_51] : memref<256x576xbf16, #tpu.memory_space<vmem>>, vector<256x576xbf16>
    %c0_52 = arith.constant 0 : index
    %c0_53 = arith.constant 0 : index
    %43 = vector.load %arg4[%c0_52, %c0_53] : memref<576x64xbf16, #tpu.memory_space<vmem>>, vector<576x64xbf16>
    %cst_54 = arith.constant dense<0.000000e+00> : vector<256x64xf32>
    %44 = tpu.matmul %42, %43, %cst_54 {dimension_numbers = #tpu.dot_dimension_numbers<[1], [0], [0], [1], [0, 0, 1, 1], [], []>} : vector<256x576xbf16>, vector<576x64xbf16>, vector<256x64xf32> -> vector<256x64xf32>
    %c0_55 = arith.constant 0 : index
    %c0_56 = arith.constant 0 : index
    %45 = vector.load %arg5[%c0_55, %c0_56] : memref<1x64xf32, #tpu.memory_space<vmem>>, vector<1x64xf32>
    %46 = vector.broadcast %45 : vector<1x64xf32> to vector<256x64xf32>
    %47 = arith.addf %44, %46 : vector<256x64xf32>
    %cst_57 = arith.constant 0.000000e+00 : f32
    %48 = vector.broadcast %cst_57 : f32 to vector<256x64xf32>
    %49 = arith.maximumf %47, %48 : vector<256x64xf32>
    %50 = arith.truncf %49 : vector<256x64xf32> to vector<256x64xbf16>
    %c0_58 = arith.constant 0 : index
    %c0_59 = arith.constant 0 : index
    %51 = vector.load %arg11[%c0_58, %c0_59] : memref<256x64xbf16, #tpu.memory_space<vmem>>, vector<256x64xbf16>
    tpu.vector_store %arg11[%c0_58, %c0_59], %50 {strides = array<i32>} : memref<256x64xbf16, #tpu.memory_space<vmem>>, vector<256x64xbf16>,
    %c0_60 = arith.constant 0 : index
    %c0_61 = arith.constant 0 : index
    %52 = vector.load %arg6[%c0_60, %c0_61] : memref<64x256xbf16, #tpu.memory_space<vmem>>, vector<64x256xbf16>
    %c0_62 = arith.constant 0 : index
    %c0_63 = arith.constant 0 : index
    %53 = vector.load %arg7[%c0_62, %c0_63] : memref<1x256xf32, #tpu.memory_space<vmem>>, vector<1x256xf32>
    %c0_i32 = arith.constant 0 : i32
    %c64_i32 = arith.constant 64 : i32
    %54 = arith.muli %c0_i32, %c64_i32 : i32
    %55 = tpu.assume_multiple %54, 64 : i32
    %c4_i32 = arith.constant 4 : i32
    %56 = arith.muli %c0_i32, %c4_i32 : i32
    %57 = tpu.assume_multiple %56, 4 : i32
    %58 = arith.index_cast %55 : i32 to index
    %c0_64 = arith.constant 0 : index
    %59 = vector.load %arg11[%58, %c0_64] : memref<256x64xbf16, #tpu.memory_space<vmem>>, vector<64x64xbf16>
    %cst_65 = arith.constant dense<0.000000e+00> : vector<64x256xf32>
    %60 = tpu.matmul %59, %52, %cst_65 {dimension_numbers = #tpu.dot_dimension_numbers<[1], [0], [0], [1], [0, 0, 1, 1], [], []>} : vector<64x64xbf16>, vector<64x256xbf16>, vector<64x256xf32> -> vector<64x256xf32>
    %61 = vector.broadcast %53 : vector<1x256xf32> to vector<64x256xf32>
    %62 = arith.addf %60, %61 : vector<64x256xf32>
    %c0_66 = arith.constant 0 : index
    %63 = arith.index_cast %57 : i32 to index
    %c0_67 = arith.constant 0 : index
    %c0_68 = arith.constant 0 : index
    %64 = vector.load %arg1[%c0_66, %63, %c0_67, %c0_68] : memref<1x16x16x256xbf16, #tpu.memory_space<vmem>>, vector<1x4x16x256xbf16>
    %65 = vector.shape_cast %64 : vector<1x4x16x256xbf16> to vector<4x16x256xbf16>
    %66 = vector.shape_cast %65 : vector<4x16x256xbf16> to vector<64x256xbf16>
    %67 = arith.extf %66 : vector<64x256xbf16> to vector<64x256xf32>
    %68 = arith.addf %62, %67 : vector<64x256xf32>
    %cst_69 = arith.constant 0.000000e+00 : f32
    %69 = vector.broadcast %cst_69 : f32 to vector<64x256xf32>
    %70 = arith.maximumf %68, %69 : vector<64x256xf32>
    %71 = vector.shape_cast %70 : vector<64x256xf32> to vector<4x16x256xf32>
    %c0_70 = arith.constant 0 : index
    %72 = arith.index_cast %57 : i32 to index
    %c0_71 = arith.constant 0 : index
    %c0_72 = arith.constant 0 : index
    %73 = vector.load %arg8[%c0_70, %72, %c0_71, %c0_72] : memref<1x16x16x256xf32, #tpu.memory_space<vmem>>, vector<1x4x16x256xf32>
    %74 = vector.shape_cast %73 : vector<1x4x16x256xf32> to vector<4x16x256xf32>
    %75 = vector.shape_cast %71 : vector<4x16x256xf32> to vector<1x4x16x256xf32>
    tpu.vector_store %arg8[%c0_70, %72, %c0_71, %c0_72], %75 {strides = array<i32>} : memref<1x16x16x256xf32, #tpu.memory_space<vmem>>, vector<1x4x16x256xf32>,
    %c1_i32 = arith.constant 1 : i32
    %c64_i32_73 = arith.constant 64 : i32
    %76 = arith.muli %c1_i32, %c64_i32_73 : i32
    %77 = tpu.assume_multiple %76, 64 : i32
    %c4_i32_74 = arith.constant 4 : i32
    %78 = arith.muli %c1_i32, %c4_i32_74 : i32
    %79 = tpu.assume_multiple %78, 4 : i32
    %80 = arith.index_cast %77 : i32 to index
    %c0_75 = arith.constant 0 : index
    %81 = vector.load %arg11[%80, %c0_75] : memref<256x64xbf16, #tpu.memory_space<vmem>>, vector<64x64xbf16>
    %cst_76 = arith.constant dense<0.000000e+00> : vector<64x256xf32>
    %82 = tpu.matmul %81, %52, %cst_76 {dimension_numbers = #tpu.dot_dimension_numbers<[1], [0], [0], [1], [0, 0, 1, 1], [], []>} : vector<64x64xbf16>, vector<64x256xbf16>, vector<64x256xf32> -> vector<64x256xf32>
    %83 = vector.broadcast %53 : vector<1x256xf32> to vector<64x256xf32>
    %84 = arith.addf %82, %83 : vector<64x256xf32>
    %c0_77 = arith.constant 0 : index
    %85 = arith.index_cast %79 : i32 to index
    %c0_78 = arith.constant 0 : index
    %c0_79 = arith.constant 0 : index
    %86 = vector.load %arg1[%c0_77, %85, %c0_78, %c0_79] : memref<1x16x16x256xbf16, #tpu.memory_space<vmem>>, vector<1x4x16x256xbf16>
    %87 = vector.shape_cast %86 : vector<1x4x16x256xbf16> to vector<4x16x256xbf16>
    %88 = vector.shape_cast %87 : vector<4x16x256xbf16> to vector<64x256xbf16>
    %89 = arith.extf %88 : vector<64x256xbf16> to vector<64x256xf32>
    %90 = arith.addf %84, %89 : vector<64x256xf32>
    %cst_80 = arith.constant 0.000000e+00 : f32
    %91 = vector.broadcast %cst_80 : f32 to vector<64x256xf32>
    %92 = arith.maximumf %90, %91 : vector<64x256xf32>
    %93 = vector.shape_cast %92 : vector<64x256xf32> to vector<4x16x256xf32>
    %c0_81 = arith.constant 0 : index
    %94 = arith.index_cast %79 : i32 to index
    %c0_82 = arith.constant 0 : index
    %c0_83 = arith.constant 0 : index
    %95 = vector.load %arg8[%c0_81, %94, %c0_82, %c0_83] : memref<1x16x16x256xf32, #tpu.memory_space<vmem>>, vector<1x4x16x256xf32>
    %96 = vector.shape_cast %95 : vector<1x4x16x256xf32> to vector<4x16x256xf32>
    %97 = vector.shape_cast %93 : vector<4x16x256xf32> to vector<1x4x16x256xf32>
    tpu.vector_store %arg8[%c0_81, %94, %c0_82, %c0_83], %97 {strides = array<i32>} : memref<1x16x16x256xf32, #tpu.memory_space<vmem>>, vector<1x4x16x256xf32>,
    %c2_i32 = arith.constant 2 : i32
    %c64_i32_84 = arith.constant 64 : i32
    %98 = arith.muli %c2_i32, %c64_i32_84 : i32
    %99 = tpu.assume_multiple %98, 64 : i32
    %c4_i32_85 = arith.constant 4 : i32
    %100 = arith.muli %c2_i32, %c4_i32_85 : i32
    %101 = tpu.assume_multiple %100, 4 : i32
    %102 = arith.index_cast %99 : i32 to index
    %c0_86 = arith.constant 0 : index
    %103 = vector.load %arg11[%102, %c0_86] : memref<256x64xbf16, #tpu.memory_space<vmem>>, vector<64x64xbf16>
    %cst_87 = arith.constant dense<0.000000e+00> : vector<64x256xf32>
    %104 = tpu.matmul %103, %52, %cst_87 {dimension_numbers = #tpu.dot_dimension_numbers<[1], [0], [0], [1], [0, 0, 1, 1], [], []>} : vector<64x64xbf16>, vector<64x256xbf16>, vector<64x256xf32> -> vector<64x256xf32>
    %105 = vector.broadcast %53 : vector<1x256xf32> to vector<64x256xf32>
    %106 = arith.addf %104, %105 : vector<64x256xf32>
    %c0_88 = arith.constant 0 : index
    %107 = arith.index_cast %101 : i32 to index
    %c0_89 = arith.constant 0 : index
    %c0_90 = arith.constant 0 : index
    %108 = vector.load %arg1[%c0_88, %107, %c0_89, %c0_90] : memref<1x16x16x256xbf16, #tpu.memory_space<vmem>>, vector<1x4x16x256xbf16>
    %109 = vector.shape_cast %108 : vector<1x4x16x256xbf16> to vector<4x16x256xbf16>
    %110 = vector.shape_cast %109 : vector<4x16x256xbf16> to vector<64x256xbf16>
    %111 = arith.extf %110 : vector<64x256xbf16> to vector<64x256xf32>
    %112 = arith.addf %106, %111 : vector<64x256xf32>
    %cst_91 = arith.constant 0.000000e+00 : f32
    %113 = vector.broadcast %cst_91 : f32 to vector<64x256xf32>
    %114 = arith.maximumf %112, %113 : vector<64x256xf32>
    %115 = vector.shape_cast %114 : vector<64x256xf32> to vector<4x16x256xf32>
    %c0_92 = arith.constant 0 : index
    %116 = arith.index_cast %101 : i32 to index
    %c0_93 = arith.constant 0 : index
    %c0_94 = arith.constant 0 : index
    %117 = vector.load %arg8[%c0_92, %116, %c0_93, %c0_94] : memref<1x16x16x256xf32, #tpu.memory_space<vmem>>, vector<1x4x16x256xf32>
    %118 = vector.shape_cast %117 : vector<1x4x16x256xf32> to vector<4x16x256xf32>
    %119 = vector.shape_cast %115 : vector<4x16x256xf32> to vector<1x4x16x256xf32>
    tpu.vector_store %arg8[%c0_92, %116, %c0_93, %c0_94], %119 {strides = array<i32>} : memref<1x16x16x256xf32, #tpu.memory_space<vmem>>, vector<1x4x16x256xf32>,
    %c3_i32 = arith.constant 3 : i32
    %c64_i32_95 = arith.constant 64 : i32
    %120 = arith.muli %c3_i32, %c64_i32_95 : i32
    %121 = tpu.assume_multiple %120, 64 : i32
    %c4_i32_96 = arith.constant 4 : i32
    %122 = arith.muli %c3_i32, %c4_i32_96 : i32
    %123 = tpu.assume_multiple %122, 4 : i32
    %124 = arith.index_cast %121 : i32 to index
    %c0_97 = arith.constant 0 : index
    %125 = vector.load %arg11[%124, %c0_97] : memref<256x64xbf16, #tpu.memory_space<vmem>>, vector<64x64xbf16>
    %cst_98 = arith.constant dense<0.000000e+00> : vector<64x256xf32>
    %126 = tpu.matmul %125, %52, %cst_98 {dimension_numbers = #tpu.dot_dimension_numbers<[1], [0], [0], [1], [0, 0, 1, 1], [], []>} : vector<64x64xbf16>, vector<64x256xbf16>, vector<64x256xf32> -> vector<64x256xf32>
    %127 = vector.broadcast %53 : vector<1x256xf32> to vector<64x256xf32>
    %128 = arith.addf %126, %127 : vector<64x256xf32>
    %c0_99 = arith.constant 0 : index
    %129 = arith.index_cast %123 : i32 to index
    %c0_100 = arith.constant 0 : index
    %c0_101 = arith.constant 0 : index
    %130 = vector.load %arg1[%c0_99, %129, %c0_100, %c0_101] : memref<1x16x16x256xbf16, #tpu.memory_space<vmem>>, vector<1x4x16x256xbf16>
    %131 = vector.shape_cast %130 : vector<1x4x16x256xbf16> to vector<4x16x256xbf16>
    %132 = vector.shape_cast %131 : vector<4x16x256xbf16> to vector<64x256xbf16>
    %133 = arith.extf %132 : vector<64x256xbf16> to vector<64x256xf32>
    %134 = arith.addf %128, %133 : vector<64x256xf32>
    %cst_102 = arith.constant 0.000000e+00 : f32
    %135 = vector.broadcast %cst_102 : f32 to vector<64x256xf32>
    %136 = arith.maximumf %134, %135 : vector<64x256xf32>
    %137 = vector.shape_cast %136 : vector<64x256xf32> to vector<4x16x256xf32>
    %c0_103 = arith.constant 0 : index
    %138 = arith.index_cast %123 : i32 to index
    %c0_104 = arith.constant 0 : index
    %c0_105 = arith.constant 0 : index
    %139 = vector.load %arg8[%c0_103, %138, %c0_104, %c0_105] : memref<1x16x16x256xf32, #tpu.memory_space<vmem>>, vector<1x4x16x256xf32>
    %140 = vector.shape_cast %139 : vector<1x4x16x256xf32> to vector<4x16x256xf32>
    %141 = vector.shape_cast %137 : vector<4x16x256xf32> to vector<1x4x16x256xf32>
    tpu.vector_store %arg8[%c0_103, %138, %c0_104, %c0_105], %141 {strides = array<i32>} : memref<1x16x16x256xf32, #tpu.memory_space<vmem>>, vector<1x4x16x256xf32>,
    %c4_i32_106 = arith.constant 4 : i32
    return
  }
  func.func @transform_0(%arg0: i32) -> (i32, i32, i32, i32) {
    %c0_i32 = arith.constant 0 : i32
    %c0_i32_0 = arith.constant 0 : i32
    %c0_i32_1 = arith.constant 0 : i32
    %c0_i32_2 = arith.constant 0 : i32
    return %arg0, %c0_i32, %c0_i32_0, %c0_i32_1 : i32, i32, i32, i32
  }
  func.func @transform_1(%arg0: i32) -> (i32, i32) {
    %c0_i32 = arith.constant 0 : i32
    %c0_i32_0 = arith.constant 0 : i32
    %c0_i32_1 = arith.constant 0 : i32
    return %c0_i32, %c0_i32_0 : i32, i32
  }
  func.func @transform_2(%arg0: i32) -> (i32, i32) {
    %c0_i32 = arith.constant 0 : i32
    %c0_i32_0 = arith.constant 0 : i32
    %c0_i32_1 = arith.constant 0 : i32
    return %c0_i32, %c0_i32_0 : i32, i32
  }
  func.func @transform_3(%arg0: i32) -> (i32, i32) {
    %c0_i32 = arith.constant 0 : i32
    %c0_i32_0 = arith.constant 0 : i32
    %c0_i32_1 = arith.constant 0 : i32
    return %c0_i32, %c0_i32_0 : i32, i32
  }
  func.func @transform_4(%arg0: i32) -> (i32, i32) {
    %c0_i32 = arith.constant 0 : i32
    %c0_i32_0 = arith.constant 0 : i32
    %c0_i32_1 = arith.constant 0 : i32
    return %c0_i32, %c0_i32_0 : i32, i32
  }
  func.func @transform_5(%arg0: i32) -> (i32, i32) {
    %c0_i32 = arith.constant 0 : i32
    %c0_i32_0 = arith.constant 0 : i32
    %c0_i32_1 = arith.constant 0 : i32
    return %c0_i32, %c0_i32_0 : i32, i32
  }
  func.func @transform_6(%arg0: i32) -> (i32, i32) {
    %c0_i32 = arith.constant 0 : i32
    %c0_i32_0 = arith.constant 0 : i32
    %c0_i32_1 = arith.constant 0 : i32
    return %c0_i32, %c0_i32_0 : i32, i32
  }
  func.func @transform_7(%arg0: i32) -> (i32, i32, i32, i32) {
    %c0_i32 = arith.constant 0 : i32
    %c0_i32_0 = arith.constant 0 : i32
    %c0_i32_1 = arith.constant 0 : i32
    %c0_i32_2 = arith.constant 0 : i32
    return %arg0, %c0_i32, %c0_i32_0, %c0_i32_1 : i32, i32, i32, i32
  }
}

</mosaic_0001>

<llo_original>
// kernel: bottleneck_forward.1
$region0: #{bottleneck_forward.1}
  #allocation0 [shape = 'u32[]', space=smem, size = 0x4, offset = 0x4, fixed_abs, tag = 'smem constant byte address 0x4 - core index']
  #allocation1 [shape = 'u32[72,128]{1,0:T(1,128)}', space=vmem, size = 0x9000, scoped, tag = 'internal scratch']
  #allocation2 [shape = 'bf16[18,18,64]{2,1,0:T(8,128)(2,1)}', space=vmem, size = 0x1b000, scoped, tag = 'scratch operand']
  #allocation3 [shape = 'bf16[256,576]{1,0:T(8,128)(2,1)}', space=vmem, size = 0x50000, scoped, tag = 'scratch operand']
  #allocation4 [shape = 'bf16[256,64]{1,0:T(8,128)(2,1)}', space=vmem, size = 0x10000, scoped, tag = 'scratch operand']
  %s0 = inlined_call_operand.vmem [shape: bf16[4,16,16,256], index: 0, kind: input, shape index: {}]
  %s1 = inlined_call_operand.vmem [shape: bf16[256,64], index: 1, kind: input, shape index: {}]
  %s2 = inlined_call_operand.vmem [shape: f32[1,64], index: 2, kind: input, shape index: {}]
  %s3 = inlined_call_operand.vmem [shape: bf16[576,64], index: 3, kind: input, shape index: {}]
  %s4 = inlined_call_operand.vmem [shape: f32[1,64], index: 4, kind: input, shape index: {}]
  %s5 = inlined_call_operand.vmem [shape: bf16[64,256], index: 5, kind: input, shape index: {}]
  %s6 = inlined_call_operand.vmem [shape: f32[1,256], index: 6, kind: input, shape index: {}]
  %s7 = inlined_call_operand.hbm [shape: f32[4,16,16,256], index: 7, kind: output, shape index: {}]
  %s8 = sld [smem:[#allocation0]]
  $region61: #{bottleneck_forward.1} parent=0
    _
  %s10 = ssub.s32 1, %s8
  %s11 = scalar_select 0, %s10, %s8
  $region1: #{bottleneck_forward.1} parent=0
    #allocation5 [shape = 'u8[524288]{0}', space=vmem, size = 0x80000, scoped, tag = 'output window, operand 0']
    #allocation6 [shape = 's32[2]{0}', space=sflag, size = 0x8, scoped, tag = 'scoped memory for bottleneck_forward.1']
    %12 = vsyncpa [#allocation6], 0
    %s13 = scalar_lea.sflag [#allocation6], 1
    %14 = vsyncpa %s13, 0
    loop: start=0, step=1, limit=6
    $region2: #{bottleneck_forward.1} parent=1 // loop_pre_header
      _
    $region3: #{bottleneck_forward.1} parent=1 // loop_header
      %s16 = sphi 0, %s20
      %p17 = scmp.ge.s32.totalorder %s16, 6
      %s26 = sphi 0, %s28
      %s29 = sphi 0, %s26
      %s30 = sphi 0, %s29
      %s46 = sphi 0, %s30
      %s50 = sphi 0, %s50
      %s52 = sphi 0, %s50
      %s53 = sphi 0, %s52
      %s67 = sphi 0, %s53
      %s71 = sphi 0, %s71
      %s73 = sphi 0, %s71
      %s74 = sphi 0, %s73
      %s88 = sphi 0, %s74
      %s92 = sphi 0, %s92
      %s94 = sphi 0, %s92
      %s95 = sphi 0, %s94
      %s109 = sphi 0, %s95
      %s113 = sphi 0, %s113
      %s115 = sphi 0, %s113
      %s116 = sphi 0, %s115
      %s130 = sphi 0, %s116
      %s134 = sphi 0, %s134
      %s136 = sphi 0, %s134
      %s137 = sphi 0, %s136
      %s151 = sphi 0, %s137
      %s155 = sphi 0, %s155
      %s157 = sphi 0, %s155
      %s158 = sphi 0, %s157
      %s172 = sphi 0, %s158
      %s178 = sphi 0, %s180
      %s181 = sphi 0, %s178
      %s182 = sphi 0, %s181
      %s198 = sphi 0, %s182
    $region4: #{bottleneck_forward.1} parent=1 // loop_header_branch
      %19 = sbr.rel (%p17) target = $region8
    $region5: #{bottleneck_forward.1} parent=1 // loop_body
      %s21 = ssub.s32 %s16, 1
      %s22 = ssub.s32 %s16, 2
      %s23 = sadd.s32 %s16, 1
      %s24 = ssub.s32 %s16, %s23
      %p25 = scmp.eq.s32.totalorder %s24, 0
      %s27 = sadd.s32 %s26, 1
      %s28 = scalar_select %p25, %s26, %s27
      %p31 = pneg %p25
      %p32 = scmp.eq.s32.totalorder %s16, 3
      %p33 = por %p31, %p32
      %p34 = scmp.ne.s32.totalorder %s26, %s29
      %p35 = scmp.eq.s32.totalorder %s16, 0
      %p36 = por %p34, %p35
      %p37 = scmp.ne.s32.totalorder %s26, %s29
      %p38 = scmp.eq.s32.totalorder %s21, 3
      %p39 = por %p37, %p38
      %p40 = scmp.ne.s32.totalorder %s29, %s30
      %p41 = scmp.eq.s32.totalorder %s21, 0
      %p42 = por %p40, %p41
      %p43 = scmp.ne.s32.totalorder %s29, %s30
      %p44 = scmp.eq.s32.totalorder %s22, 3
      %p45 = por %p43, %p44
      %p47 = scmp.ne.s32.totalorder %s30, %s46
      %p48 = scmp.eq.s32.totalorder %s22, 0
      %p49 = por %p47, %p48
      %s51 = sadd.s32 %s50, 1
      %p54 = scmp.eq.s32.totalorder %s16, 3
      %p55 = scmp.ne.s32.totalorder %s50, %s52
      %p56 = scmp.eq.s32.totalorder %s16, 0
      %p57 = por %p55, %p56
      %p58 = scmp.ne.s32.totalorder %s50, %s52
      %p59 = scmp.eq.s32.totalorder %s21, 3
      %p60 = por %p58, %p59
      %p61 = scmp.ne.s32.totalorder %s52, %s53
      %p62 = scmp.eq.s32.totalorder %s21, 0
      %p63 = por %p61, %p62
      %p64 = scmp.ne.s32.totalorder %s52, %s53
      %p65 = scmp.eq.s32.totalorder %s22, 3
      %p66 = por %p64, %p65
      %p68 = scmp.ne.s32.totalorder %s53, %s67
      %p69 = scmp.eq.s32.totalorder %s22, 0
      %p70 = por %p68, %p69
      %s72 = sadd.s32 %s71, 1
      %p75 = scmp.eq.s32.totalorder %s16, 3
      %p76 = scmp.ne.s32.totalorder %s71, %s73
      %p77 = scmp.eq.s32.totalorder %s16, 0
      %p78 = por %p76, %p77
      %p79 = scmp.ne.s32.totalorder %s71, %s73
      %p80 = scmp.eq.s32.totalorder %s21, 3
      %p81 = por %p79, %p80
      %p82 = scmp.ne.s32.totalorder %s73, %s74
      %p83 = scmp.eq.s32.totalorder %s21, 0
      %p84 = por %p82, %p83
      %p85 = scmp.ne.s32.totalorder %s73, %s74
      %p86 = scmp.eq.s32.totalorder %s22, 3
      %p87 = por %p85, %p86
      %p89 = scmp.ne.s32.totalorder %s74, %s88
      %p90 = scmp.eq.s32.totalorder %s22, 0
      %p91 = por %p89, %p90
      %s93 = sadd.s32 %s92, 1
      %p96 = scmp.eq.s32.totalorder %s16, 3
      %p97 = scmp.ne.s32.totalorder %s92, %s94
      %p98 = scmp.eq.s32.totalorder %s16, 0
      %p99 = por %p97, %p98
      %p100 = scmp.ne.s32.totalorder %s92, %s94
      %p101 = scmp.eq.s32.totalorder %s21, 3
      %p102 = por %p100, %p101
      %p103 = scmp.ne.s32.totalorder %s94, %s95
      %p104 = scmp.eq.s32.totalorder %s21, 0
      %p105 = por %p103, %p104
      %p106 = scmp.ne.s32.totalorder %s94, %s95
      %p107 = scmp.eq.s32.totalorder %s22, 3
      %p108 = por %p106, %p107
      %p110 = scmp.ne.s32.totalorder %s95, %s109
      %p111 = scmp.eq.s32.totalorder %s22, 0
      %p112 = por %p110, %p111
      %s114 = sadd.s32 %s113, 1
      %p117 = scmp.eq.s32.totalorder %s16, 3
      %p118 = scmp.ne.s32.totalorder %s113, %s115
      %p119 = scmp.eq.s32.totalorder %s16, 0
      %p120 = por %p118, %p119
      %p121 = scmp.ne.s32.totalorder %s113, %s115
      %p122 = scmp.eq.s32.totalorder %s21, 3
      %p123 = por %p121, %p122
      %p124 = scmp.ne.s32.totalorder %s115, %s116
      %p125 = scmp.eq.s32.totalorder %s21, 0
      %p126 = por %p124, %p125
      %p127 = scmp.ne.s32.totalorder %s115, %s116
      %p128 = scmp.eq.s32.totalorder %s22, 3
      %p129 = por %p127, %p128
      %p131 = scmp.ne.s32.totalorder %s116, %s130
      %p132 = scmp.eq.s32.totalorder %s22, 0
      %p133 = por %p131, %p132
      %s135 = sadd.s32 %s134, 1
      %p138 = scmp.eq.s32.totalorder %s16, 3
      %p139 = scmp.ne.s32.totalorder %s134, %s136
      %p140 = scmp.eq.s32.totalorder %s16, 0
      %p141 = por %p139, %p140
      %p142 = scmp.ne.s32.totalorder %s134, %s136
      %p143 = scmp.eq.s32.totalorder %s21, 3
      %p144 = por %p142, %p143
      %p145 = scmp.ne.s32.totalorder %s136, %s137
      %p146 = scmp.eq.s32.totalorder %s21, 0
      %p147 = por %p145, %p146
      %p148 = scmp.ne.s32.totalorder %s136, %s137
      %p149 = scmp.eq.s32.totalorder %s22, 3
      %p150 = por %p148, %p149
      %p152 = scmp.ne.s32.totalorder %s137, %s151
      %p153 = scmp.eq.s32.totalorder %s22, 0
      %p154 = por %p152, %p153
      %s156 = sadd.s32 %s155, 1
      %p159 = scmp.eq.s32.totalorder %s16, 3
      %p160 = scmp.ne.s32.totalorder %s155, %s157
      %p161 = scmp.eq.s32.totalorder %s16, 0
      %p162 = por %p160, %p161
      %p163 = scmp.ne.s32.totalorder %s155, %s157
      %p164 = scmp.eq.s32.totalorder %s21, 3
      %p165 = por %p163, %p164
      %p166 = scmp.ne.s32.totalorder %s157, %s158
      %p167 = scmp.eq.s32.totalorder %s21, 0
      %p168 = por %p166, %p167
      %p169 = scmp.ne.s32.totalorder %s157, %s158
      %p170 = scmp.eq.s32.totalorder %s22, 3
      %p171 = por %p169, %p170
      %p173 = scmp.ne.s32.totalorder %s158, %s172
      %p174 = scmp.eq.s32.totalorder %s22, 0
      %p175 = por %p173, %p174
      %s176 = ssub.s32 %s16, %s23
      %p177 = scmp.eq.s32.totalorder %s176, 0
      %s179 = sadd.s32 %s178, 1
      %s180 = scalar_select %p177, %s178, %s179
      %p183 = pneg %p177
      %p184 = scmp.eq.s32.totalorder %s16, 3
      %p185 = por %p183, %p184
      %p186 = scmp.ne.s32.totalorder %s178, %s181
      %p187 = scmp.eq.s32.totalorder %s16, 0
      %p188 = por %p186, %p187
      %p189 = scmp.ne.s32.totalorder %s178, %s181
      %p190 = scmp.eq.s32.totalorder %s21, 3
      %p191 = por %p189, %p190
      %p192 = scmp.ne.s32.totalorder %s181, %s182
      %p193 = scmp.eq.s32.totalorder %s21, 0
      %p194 = por %p192, %p193
      %p195 = scmp.ne.s32.totalorder %s181, %s182
      %p196 = scmp.eq.s32.totalorder %s22, 3
      %p197 = por %p195, %p196
      %p199 = scmp.ne.s32.totalorder %s182, %s198
      %p200 = scmp.eq.s32.totalorder %s22, 0
      %p201 = por %p199, %p200
      %p202 = scmp.le.s32.totalorder 1, %s16
      %p203 = scmp.lt.s32.totalorder %s16, 5
      %p204 = pnand %p202, %p203
      %p205 = pneg %p204
      // Predicated region
      $region9: #{bottleneck_forward.1} parent=5 // pred_check
        _
      $region10: #{bottleneck_forward.1} parent=5 // pred_check_branch
        %207 = sbr.rel (%p204) target = $region12
      $region11: #{bottleneck_forward.1} parent=5 // pred_region
        %s208 = ssub.s32 %s16, 1
        // Predicated region
        $region13: #{bottleneck_forward.1} parent=11 // pred_check
          %p209 = pneg %p63
        $region14: #{bottleneck_forward.1} parent=11 // pred_check_branch
          %211 = sbr.rel (%p209) target = $region16
        $region15: #{bottleneck_forward.1} parent=11 // pred_region
          _
        $region16: #{bottleneck_forward.1} parent=11 // pred_fallthru
          _
        // Predicated region
        $region17: #{bottleneck_forward.1} parent=11 // pred_check
          %p212 = pneg %p84
        $region18: #{bottleneck_forward.1} parent=11 // pred_check_branch
          %214 = sbr.rel (%p212) target = $region20
        $region19: #{bottleneck_forward.1} parent=11 // pred_region
          _
        $region20: #{bottleneck_forward.1} parent=11 // pred_fallthru
          _
        // Predicated region
        $region21: #{bottleneck_forward.1} parent=11 // pred_check
          %p215 = pneg %p105
        $region22: #{bottleneck_forward.1} parent=11 // pred_check_branch
          %217 = sbr.rel (%p215) target = $region24
        $region23: #{bottleneck_forward.1} parent=11 // pred_region
          _
        $region24: #{bottleneck_forward.1} parent=11 // pred_fallthru
          _
        // Predicated region
        $region25: #{bottleneck_forward.1} parent=11 // pred_check
          %p218 = pneg %p126
        $region26: #{bottleneck_forward.1} parent=11 // pred_check_branch
          %220 = sbr.rel (%p218) target = $region28
        $region27: #{bottleneck_forward.1} parent=11 // pred_region
          _
        $region28: #{bottleneck_forward.1} parent=11 // pred_fallthru
          _
        // Predicated region
        $region29: #{bottleneck_forward.1} parent=11 // pred_check
          %p221 = pneg %p147
        $region30: #{bottleneck_forward.1} parent=11 // pred_check_branch
          %223 = sbr.rel (%p221) target = $region32
        $region31: #{bottleneck_forward.1} parent=11 // pred_region
          _
        $region32: #{bottleneck_forward.1} parent=11 // pred_fallthru
          _
        // Predicated region
        $region33: #{bottleneck_forward.1} parent=11 // pred_check
          %p224 = pneg %p168
        $region34: #{bottleneck_forward.1} parent=11 // pred_check_branch
          %226 = sbr.rel (%p224) target = $region36
        $region35: #{bottleneck_forward.1} parent=11 // pred_region
          _
        $region36: #{bottleneck_forward.1} parent=11 // pred_fallthru
          _
      $region12: #{bottleneck_forward.1} parent=5 // pred_fallthru
        _
      %p227 = scmp.lt.s32.totalorder %s16, 4
      // Predicated region
      $region37: #{bottleneck_forward.1} parent=5 // pred_check
        %p228 = pneg %p227
      $region38: #{bottleneck_forward.1} parent=5 // pred_check_branch
        %230 = sbr.rel (%p228) target = $region40
      $region39: #{bottleneck_forward.1} parent=5 // pred_region
        // Predicated region
        $region41: #{bottleneck_forward.1} parent=39 // pred_check
          %p231 = pneg %p36
        $region42: #{bottleneck_forward.1} parent=39 // pred_check_branch
          %233 = sbr.rel (%p231) target = $region44
        $region43: #{bottleneck_forward.1} parent=39 // pred_region
          %p234 = scmp.lt.s32.totalorder %s16, 3
          %s235 = scalar_select %p234, %s16, 3
          %s236 = smul.addr %s235, 64
          %s237 = smul.addr %s236, 4
          %s238 = scalar_lea.vmem %s0, %s237
        $region44: #{bottleneck_forward.1} parent=39 // pred_fallthru
          _
      $region40: #{bottleneck_forward.1} parent=5 // pred_fallthru
        _
      %p239 = scmp.le.s32.totalorder 1, %s16
      %p240 = scmp.lt.s32.totalorder %s16, 5
      %p241 = pnand %p239, %p240
      %p242 = pneg %p241
      // Predicated region
      $region45: #{bottleneck_forward.1} parent=5 // pred_check
        _
      $region46: #{bottleneck_forward.1} parent=5 // pred_check_branch
        %244 = sbr.rel (%p241) target = $region48
      $region47: #{bottleneck_forward.1} parent=5 // pred_region
        %s245 = ssub.s32 %s16, 1
        %p246 = scmp.lt.s32.totalorder %s21, 3
        %s247 = scalar_select %p246, %s21, 3
        %s248 = smul.addr %s247, 64
        %s249 = smul.addr %s248, 4
        %s250 = scalar_lea.vmem %s0, %s249
        %p251 = pneg %p42
        %p252 = pneg %p39
        %p253 = pneg %p63
        %p254 = pneg %p60
        %p255 = pneg %p84
        %p256 = pneg %p81
        %p257 = pneg %p105
        %p258 = pneg %p102
        %p259 = pneg %p126
        %p260 = pneg %p123
        %p261 = pneg %p147
        %p262 = pneg %p144
        %p263 = pneg %p168
        %p264 = pneg %p165
        %p265 = pneg %p194
        %p266 = pneg %p191
        %s267 = sand.u32 %s181, 1
        %s268 = scalar_lea.sflag [#allocation6], %s267
        %s269 = sand.u32 %s181, 1
        %s270 = smul.addr %s269, 512
        %s271 = scalar_lea.vmem [#allocation5], %s270
        %p272 = scmp.lt.s32.totalorder %s21, 3
        %s273 = scalar_select %p272, %s21, 3
        %s274 = smul.addr %s273, 64
        %s275 = smul.addr %s274, 4
        %s276 = scalar_lea.vmem %s0, %s275
        %v278 = vld [vmem:[%s276] sm:$0xff]
        %v279 = vld [vmem:[%s276 + $0x8] sm:$0xff]
        %v280 = vld [vmem:[%s276 + $0x10] sm:$0xff]
        %v281 = vld [vmem:[%s276 + $0x18] sm:$0xff]
        %v282 = vld [vmem:[%s276 + $0x20] sm:$0xff]
        %v283 = vld [vmem:[%s276 + $0x28] sm:$0xff]
        %v284 = vld [vmem:[%s276 + $0x30] sm:$0xff]
        %v285 = vld [vmem:[%s276 + $0x38] sm:$0xff]
        %v286 = vld [vmem:[%s276 + $0x40] sm:$0xff]
        %v287 = vld [vmem:[%s276 + $0x48] sm:$0xff]
        %v288 = vld [vmem:[%s276 + $0x50] sm:$0xff]
        %v289 = vld [vmem:[%s276 + $0x58] sm:$0xff]
        %v290 = vld [vmem:[%s276 + $0x60] sm:$0xff]
        %v291 = vld [vmem:[%s276 + $0x68] sm:$0xff]
        %v292 = vld [vmem:[%s276 + $0x70] sm:$0xff]
        %v293 = vld [vmem:[%s276 + $0x78] sm:$0xff]
        %v294 = vld [vmem:[%s276 + $0x80] sm:$0xff]
        %v295 = vld [vmem:[%s276 + $0x88] sm:$0xff]
        %v296 = vld [vmem:[%s276 + $0x90] sm:$0xff]
        %v297 = vld [vmem:[%s276 + $0x98] sm:$0xff]
        %v298 = vld [vmem:[%s276 + $0xa0] sm:$0xff]
        %v299 = vld [vmem:[%s276 + $0xa8] sm:$0xff]
        %v300 = vld [vmem:[%s276 + $0xb0] sm:$0xff]
        %v301 = vld [vmem:[%s276 + $0xb8] sm:$0xff]
        %v302 = vld [vmem:[%s276 + $0xc0] sm:$0xff]
        %v303 = vld [vmem:[%s276 + $0xc8] sm:$0xff]
        %v304 = vld [vmem:[%s276 + $0xd0] sm:$0xff]
        %v305 = vld [vmem:[%s276 + $0xd8] sm:$0xff]
        %v306 = vld [vmem:[%s276 + $0xe0] sm:$0xff]
        %v307 = vld [vmem:[%s276 + $0xe8] sm:$0xff]
        %v308 = vld [vmem:[%s276 + $0xf0] sm:$0xff]
        %v309 = vld [vmem:[%s276 + $0xf8] sm:$0xff]
        %v310 = vld [vmem:[%s1] sm:$0xf]
        %v311 = vld [vmem:[%s1 + $0x4] sm:$0xf]
        %v312 = vld [vmem:[%s1 + $0x8] sm:$0xf]
        %v313 = vld [vmem:[%s1 + $0xc] sm:$0xf]
        %v314 = vld [vmem:[%s1 + $0x10] sm:$0xf]
        %v315 = vld [vmem:[%s1 + $0x14] sm:$0xf]
        %v316 = vld [vmem:[%s1 + $0x18] sm:$0xf]
        %v317 = vld [vmem:[%s1 + $0x1c] sm:$0xf]
        %v318 = vld [vmem:[%s1 + $0x20] sm:$0xf]
        %v319 = vld [vmem:[%s1 + $0x24] sm:$0xf]
        %v320 = vld [vmem:[%s1 + $0x28] sm:$0xf]
        %v321 = vld [vmem:[%s1 + $0x2c] sm:$0xf]
        %v322 = vld [vmem:[%s1 + $0x30] sm:$0xf]
        %v323 = vld [vmem:[%s1 + $0x34] sm:$0xf]
        %v324 = vld [vmem:[%s1 + $0x38] sm:$0xf]
        %v325 = vld [vmem:[%s1 + $0x3c] sm:$0xf]
        %v326 = vld [vmem:[%s1 + $0x40] sm:$0xf]
        %v327 = vld [vmem:[%s1 + $0x44] sm:$0xf]
        %v328 = vld [vmem:[%s1 + $0x48] sm:$0xf]
        %v329 = vld [vmem:[%s1 + $0x4c] sm:$0xf]
        %v330 = vld [vmem:[%s1 + $0x50] sm:$0xf]
        %v331 = vld [vmem:[%s1 + $0x54] sm:$0xf]
        %v332 = vld [vmem:[%s1 + $0x58] sm:$0xf]
        %v333 = vld [vmem:[%s1 + $0x5c] sm:$0xf]
        %v334 = vld [vmem:[%s1 + $0x60] sm:$0xf]
        %v335 = vld [vmem:[%s1 + $0x64] sm:$0xf]
        %v336 = vld [vmem:[%s1 + $0x68] sm:$0xf]
        %v337 = vld [vmem:[%s1 + $0x6c] sm:$0xf]
        %v338 = vld [vmem:[%s1 + $0x70] sm:$0xf]
        %v339 = vld [vmem:[%s1 + $0x74] sm:$0xf]
        %v340 = vld [vmem:[%s1 + $0x78] sm:$0xf]
        %v341 = vld [vmem:[%s1 + $0x7c] sm:$0xf]
        %v342 = vld [vmem:[%s2] sm:$0x1]
        %v344 = vperm.slane %v342, 0
        %v378 = vunpack.c.l.b16 %v278
        %v379 = vunpack.c.h.b16 %v278
        %v380 = vunpack.c.l.b16 %v279
        %v381 = vunpack.c.h.b16 %v279
        %v382 = vunpack.c.l.b16 %v280
        %v383 = vunpack.c.h.b16 %v280
        %v384 = vunpack.c.l.b16 %v281
        %v385 = vunpack.c.h.b16 %v281
        %v386 = vunpack.c.l.b16 %v282
        %v387 = vunpack.c.h.b16 %v282
        %v388 = vunpack.c.l.b16 %v283
        %v389 = vunpack.c.h.b16 %v283
        %v390 = vunpack.c.l.b16 %v284
        %v391 = vunpack.c.h.b16 %v284
        %v392 = vunpack.c.l.b16 %v285
        %v393 = vunpack.c.h.b16 %v285
        %v394 = vunpack.c.l.b16 %v286
        %v395 = vunpack.c.h.b16 %v286
        %v396 = vunpack.c.l.b16 %v287
        %v397 = vunpack.c.h.b16 %v287
        %v398 = vunpack.c.l.b16 %v288
        %v399 = vunpack.c.h.b16 %v288
        %v400 = vunpack.c.l.b16 %v289
        %v401 = vunpack.c.h.b16 %v289
        %v402 = vunpack.c.l.b16 %v290
        %v403 = vunpack.c.h.b16 %v290
        %v404 = vunpack.c.l.b16 %v291
        %v405 = vunpack.c.h.b16 %v291
        %v406 = vunpack.c.l.b16 %v292
        %v407 = vunpack.c.h.b16 %v292
        %v408 = vunpack.c.l.b16 %v293
        %v409 = vunpack.c.h.b16 %v293
        %v410 = vunpack.c.l.b16 %v294
        %v411 = vunpack.c.h.b16 %v294
        %v412 = vunpack.c.l.b16 %v295
        %v413 = vunpack.c.h.b16 %v295
        %v414 = vunpack.c.l.b16 %v296
        %v415 = vunpack.c.h.b16 %v296
        %v416 = vunpack.c.l.b16 %v297
        %v417 = vunpack.c.h.b16 %v297
        %v418 = vunpack.c.l.b16 %v298
        %v419 = vunpack.c.h.b16 %v298
        %v420 = vunpack.c.l.b16 %v299
        %v421 = vunpack.c.h.b16 %v299
        %v422 = vunpack.c.l.b16 %v300
        %v423 = vunpack.c.h.b16 %v300
        %v424 = vunpack.c.l.b16 %v301
        %v425 = vunpack.c.h.b16 %v301
        %v426 = vunpack.c.l.b16 %v302
        %v427 = vunpack.c.h.b16 %v302
        %v428 = vunpack.c.l.b16 %v303
        %v429 = vunpack.c.h.b16 %v303
        %v430 = vunpack.c.l.b16 %v304
        %v431 = vunpack.c.h.b16 %v304
        %v432 = vunpack.c.l.b16 %v305
        %v433 = vunpack.c.h.b16 %v305
        %v434 = vunpack.c.l.b16 %v306
        %v435 = vunpack.c.h.b16 %v306
        %v436 = vunpack.c.l.b16 %v307
        %v437 = vunpack.c.h.b16 %v307
        %v438 = vunpack.c.l.b16 %v308
        %v439 = vunpack.c.h.b16 %v308
        %v440 = vunpack.c.l.b16 %v309
        %v441 = vunpack.c.h.b16 %v309
        %v442 = vpack.c.b16 %v380, %v378
        %v443 = vpack.c.b16 %v381, %v379
        %v444 = vpack.c.b16 %v384, %v382
        %v445 = vpack.c.b16 %v385, %v383
        %v446 = vpack.c.b16 %v388, %v386
        %v447 = vpack.c.b16 %v389, %v387
        %v448 = vpack.c.b16 %v392, %v390
        %v449 = vpack.c.b16 %v393, %v391
        %v450 = vpack.c.b16 %v396, %v394
        %v451 = vpack.c.b16 %v397, %v395
        %v452 = vpack.c.b16 %v400, %v398
        %v453 = vpack.c.b16 %v401, %v399
        %v454 = vpack.c.b16 %v404, %v402
        %v455 = vpack.c.b16 %v405, %v403
        %v456 = vpack.c.b16 %v408, %v406
        %v457 = vpack.c.b16 %v409, %v407
        %v458 = vpack.c.b16 %v412, %v410
        %v459 = vpack.c.b16 %v413, %v411
        %v460 = vpack.c.b16 %v416, %v414
        %v461 = vpack.c.b16 %v417, %v415
        %v462 = vpack.c.b16 %v420, %v418
        %v463 = vpack.c.b16 %v421, %v419
        %v464 = vpack.c.b16 %v424, %v422
        %v465 = vpack.c.b16 %v425, %v423
        %v466 = vpack.c.b16 %v428, %v426
        %v467 = vpack.c.b16 %v429, %v427
        %v468 = vpack.c.b16 %v432, %v430
        %v469 = vpack.c.b16 %v433, %v431
        %v470 = vpack.c.b16 %v436, %v434
        %v471 = vpack.c.b16 %v437, %v435
        %v472 = vpack.c.b16 %v440, %v438
        %v473 = vpack.c.b16 %v441, %v439
        %v538 = vunpack.c.l.b16 %v310
        %v539 = vunpack.c.l.b16 %v311
        %v540 = vunpack.c.l.b16 %v312
        %v541 = vunpack.c.l.b16 %v313
        %v542 = vunpack.c.l.b16 %v314
        %v543 = vunpack.c.l.b16 %v315
        %v544 = vunpack.c.l.b16 %v316
        %v545 = vunpack.c.l.b16 %v317
        %v546 = vunpack.c.l.b16 %v318
        %v547 = vunpack.c.l.b16 %v319
        %v548 = vunpack.c.l.b16 %v320
        %v549 = vunpack.c.l.b16 %v321
        %v550 = vunpack.c.l.b16 %v322
        %v551 = vunpack.c.l.b16 %v323
        %v552 = vunpack.c.l.b16 %v324
        %v553 = vunpack.c.l.b16 %v325
        %v554 = vunpack.c.l.b16 %v326
        %v555 = vunpack.c.l.b16 %v327
        %v556 = vunpack.c.l.b16 %v328
        %v557 = vunpack.c.l.b16 %v329
        %v558 = vunpack.c.l.b16 %v330
        %v559 = vunpack.c.l.b16 %v331
        %v560 = vunpack.c.l.b16 %v332
        %v561 = vunpack.c.l.b16 %v333
        %v562 = vunpack.c.l.b16 %v334
        %v563 = vunpack.c.l.b16 %v335
        %v564 = vunpack.c.l.b16 %v336
        %v565 = vunpack.c.l.b16 %v337
        %v566 = vunpack.c.l.b16 %v338
        %v567 = vunpack.c.l.b16 %v339
        %v568 = vunpack.c.l.b16 %v340
        %v569 = vunpack.c.l.b16 %v341
        %v570 = vpack.c.b16 %v539, %v538
        %v571 = vpack.c.b16 %v541, %v540
        %v572 = vpack.c.b16 %v543, %v542
        %v573 = vpack.c.b16 %v545, %v544
        %v574 = vpack.c.b16 %v547, %v546
        %v575 = vpack.c.b16 %v549, %v548
        %v576 = vpack.c.b16 %v551, %v550
        %v577 = vpack.c.b16 %v553, %v552
        %v578 = vpack.c.b16 %v555, %v554
        %v579 = vpack.c.b16 %v557, %v556
        %v580 = vpack.c.b16 %v559, %v558
        %v581 = vpack.c.b16 %v561, %v560
        %v582 = vpack.c.b16 %v563, %v562
        %v583 = vpack.c.b16 %v565, %v564
        %v584 = vpack.c.b16 %v567, %v566
        %v585 = vpack.c.b16 %v569, %v568
        %602 = vmatpush.bf16.msra.mxu0 %v577
        %603 = vmatpush.bf16.msra.mxu0 %v576
        %604 = vmatpush.bf16.msra.mxu0 %v575
        %605 = vmatpush.bf16.msra.mxu0 %v574
        %606 = vmatpush.bf16.msra.mxu0 %v573
        %607 = vmatpush.bf16.msra.mxu0 %v572
        %608 = vmatpush.bf16.msra.mxu0 %v571
        %609 = vmatpush.bf16.msra.mxu0 %v570
        %610 = vmatmul.bf16.gmra.mxu0 %v442
        %v611 = vpop.f32.mrf.mxu0
        %v612 = vadd.f32 %v344, %v611
        %v613 = vpop.f32.mrf.mxu0
        %v614 = vadd.f32 %v344, %v613
        %615 = vmatmul.bf16.gmra.mxu0 %v444
        %v616 = vpop.f32.mrf.mxu0
        %v617 = vadd.f32 %v344, %v616
        %v618 = vpop.f32.mrf.mxu0
        %v619 = vadd.f32 %v344, %v618
        %620 = vmatmul.bf16.gmra.mxu0 %v446
        %v621 = vpop.f32.mrf.mxu0
        %v622 = vadd.f32 %v344, %v621
        %v623 = vpop.f32.mrf.mxu0
        %v624 = vadd.f32 %v344, %v623
        %625 = vmatmul.bf16.gmra.mxu0 %v448
        %v626 = vpop.f32.mrf.mxu0
        %v627 = vadd.f32 %v344, %v626
        %v628 = vpop.f32.mrf.mxu0
        %v629 = vadd.f32 %v344, %v628
        %630 = vmatmul.bf16.gmra.mxu0 %v450
        %v631 = vpop.f32.mrf.mxu0
        %v632 = vadd.f32 %v344, %v631
        %v633 = vpop.f32.mrf.mxu0
        %v634 = vadd.f32 %v344, %v633
        %635 = vmatmul.bf16.gmra.mxu0 %v452
        %v636 = vpop.f32.mrf.mxu0
        %v637 = vadd.f32 %v344, %v636
        %v638 = vpop.f32.mrf.mxu0
        %v639 = vadd.f32 %v344, %v638
        %640 = vmatmul.bf16.gmra.mxu0 %v454
        %v641 = vpop.f32.mrf.mxu0
        %v642 = vadd.f32 %v344, %v641
        %v643 = vpop.f32.mrf.mxu0
        %v644 = vadd.f32 %v344, %v643
        %645 = vmatmul.bf16.gmra.mxu0 %v456
        %v646 = vpop.f32.mrf.mxu0
        %v647 = vadd.f32 %v344, %v646
        %v648 = vpop.f32.mrf.mxu0
        %v649 = vadd.f32 %v344, %v648
        %650 = vmatmul.bf16.gmra.mxu0 %v458
        %v651 = vpop.f32.mrf.mxu0
        %v652 = vadd.f32 %v344, %v651
        %v653 = vpop.f32.mrf.mxu0
        %v654 = vadd.f32 %v344, %v653
        %655 = vmatmul.bf16.gmra.mxu0 %v460
        %v656 = vpop.f32.mrf.mxu0
        %v657 = vadd.f32 %v344, %v656
        %v658 = vpop.f32.mrf.mxu0
        %v659 = vadd.f32 %v344, %v658
        %660 = vmatmul.bf16.gmra.mxu0 %v462
        %v661 = vpop.f32.mrf.mxu0
        %v662 = vadd.f32 %v344, %v661
        %v663 = vpop.f32.mrf.mxu0
        %v664 = vadd.f32 %v344, %v663
        %665 = vmatmul.bf16.gmra.mxu0 %v464
        %v666 = vpop.f32.mrf.mxu0
        %v667 = vadd.f32 %v344, %v666
        %v668 = vpop.f32.mrf.mxu0
        %v669 = vadd.f32 %v344, %v668
        %670 = vmatmul.bf16.gmra.mxu0 %v466
        %v671 = vpop.f32.mrf.mxu0
        %v672 = vadd.f32 %v344, %v671
        %v673 = vpop.f32.mrf.mxu0
        %v674 = vadd.f32 %v344, %v673
        %675 = vmatmul.bf16.gmra.mxu0 %v468
        %v676 = vpop.f32.mrf.mxu0
        %v677 = vadd.f32 %v344, %v676
        %v678 = vpop.f32.mrf.mxu0
        %v679 = vadd.f32 %v344, %v678
        %680 = vmatmul.bf16.gmra.mxu0 %v470
        %v681 = vpop.f32.mrf.mxu0
        %v682 = vadd.f32 %v344, %v681
        %v683 = vpop.f32.mrf.mxu0
        %v684 = vadd.f32 %v344, %v683
        %685 = vmatmul.bf16.gmra.mxu0 %v472
        %v686 = vpop.f32.mrf.mxu0
        %v687 = vadd.f32 %v344, %v686
        %v688 = vpop.f32.mrf.mxu0
        %v689 = vadd.f32 %v344, %v688
        %690 = vdwg.mxu0
        %691 = vmatpush.bf16.msra.mxu0 %v585
        %692 = vmatpush.bf16.msra.mxu0 %v584
        %693 = vmatpush.bf16.msra.mxu0 %v583
        %694 = vmatpush.bf16.msra.mxu0 %v582
        %695 = vmatpush.bf16.msra.mxu0 %v581
        %696 = vmatpush.bf16.msra.mxu0 %v580
        %697 = vmatpush.bf16.msra.mxu0 %v579
        %698 = vmatpush.bf16.msra.mxu0 %v578
        %699 = vmatmul.bf16.gmra.mxu0 %v443
        %v700 = vpop.f32.mrf.mxu0
        %v701 = vadd.f32 %v612, %v700
        %v702 = vpop.f32.mrf.mxu0
        %v703 = vadd.f32 %v614, %v702
        %704 = vmatmul.bf16.gmra.mxu0 %v445
        %v705 = vpop.f32.mrf.mxu0
        %v706 = vadd.f32 %v617, %v705
        %v707 = vpop.f32.mrf.mxu0
        %v708 = vadd.f32 %v619, %v707
        %709 = vmatmul.bf16.gmra.mxu0 %v447
        %v710 = vpop.f32.mrf.mxu0
        %v711 = vadd.f32 %v622, %v710
        %v712 = vpop.f32.mrf.mxu0
        %v713 = vadd.f32 %v624, %v712
        %714 = vmatmul.bf16.gmra.mxu0 %v449
        %v715 = vpop.f32.mrf.mxu0
        %v716 = vadd.f32 %v627, %v715
        %v717 = vpop.f32.mrf.mxu0
        %v718 = vadd.f32 %v629, %v717
        %719 = vmatmul.bf16.gmra.mxu0 %v451
        %v720 = vpop.f32.mrf.mxu0
        %v721 = vadd.f32 %v632, %v720
        %v722 = vpop.f32.mrf.mxu0
        %v723 = vadd.f32 %v634, %v722
        %724 = vmatmul.bf16.gmra.mxu0 %v453
        %v725 = vpop.f32.mrf.mxu0
        %v726 = vadd.f32 %v637, %v725
        %v727 = vpop.f32.mrf.mxu0
        %v728 = vadd.f32 %v639, %v727
        %729 = vmatmul.bf16.gmra.mxu0 %v455
        %v730 = vpop.f32.mrf.mxu0
        %v731 = vadd.f32 %v642, %v730
        %v732 = vpop.f32.mrf.mxu0
        %v733 = vadd.f32 %v644, %v732
        %734 = vmatmul.bf16.gmra.mxu0 %v457
        %v735 = vpop.f32.mrf.mxu0
        %v736 = vadd.f32 %v647, %v735
        %v737 = vpop.f32.mrf.mxu0
        %v738 = vadd.f32 %v649, %v737
        %739 = vmatmul.bf16.gmra.mxu0 %v459
        %v740 = vpop.f32.mrf.mxu0
        %v741 = vadd.f32 %v652, %v740
        %v742 = vpop.f32.mrf.mxu0
        %v743 = vadd.f32 %v654, %v742
        %744 = vmatmul.bf16.gmra.mxu0 %v461
        %v745 = vpop.f32.mrf.mxu0
        %v746 = vadd.f32 %v657, %v745
        %v747 = vpop.f32.mrf.mxu0
        %v748 = vadd.f32 %v659, %v747
        %749 = vmatmul.bf16.gmra.mxu0 %v463
        %v750 = vpop.f32.mrf.mxu0
        %v751 = vadd.f32 %v662, %v750
        %v752 = vpop.f32.mrf.mxu0
        %v753 = vadd.f32 %v664, %v752
        %754 = vmatmul.bf16.gmra.mxu0 %v465
        %v755 = vpop.f32.mrf.mxu0
        %v756 = vadd.f32 %v667, %v755
        %v757 = vpop.f32.mrf.mxu0
        %v758 = vadd.f32 %v669, %v757
        %759 = vmatmul.bf16.gmra.mxu0 %v467
        %v760 = vpop.f32.mrf.mxu0
        %v761 = vadd.f32 %v672, %v760
        %v762 = vpop.f32.mrf.mxu0
        %v763 = vadd.f32 %v674, %v762
        %764 = vmatmul.bf16.gmra.mxu0 %v469
        %v765 = vpop.f32.mrf.mxu0
        %v766 = vadd.f32 %v677, %v765
        %v767 = vpop.f32.mrf.mxu0
        %v768 = vadd.f32 %v679, %v767
        %769 = vmatmul.bf16.gmra.mxu0 %v471
        %v770 = vpop.f32.mrf.mxu0
        %v771 = vadd.f32 %v682, %v770
        %v772 = vpop.f32.mrf.mxu0
        %v773 = vadd.f32 %v684, %v772
        %774 = vmatmul.bf16.gmra.mxu0 %v473
        %v775 = vpop.f32.mrf.mxu0
        %v776 = vadd.f32 %v687, %v775
        %v777 = vpop.f32.mrf.mxu0
        %v778 = vadd.f32 %v689, %v777
        %779 = vdwg.mxu0
        %v780 = vmax.f32 %v701, 0.0
        %v781 = vmax.f32 %v703, 0.0
        %v782 = vmax.f32 %v706, 0.0
        %v783 = vmax.f32 %v708, 0.0
        %v784 = vmax.f32 %v711, 0.0
        %v785 = vmax.f32 %v713, 0.0
        %v786 = vmax.f32 %v716, 0.0
        %v787 = vmax.f32 %v718, 0.0
        %v788 = vmax.f32 %v721, 0.0
        %v789 = vmax.f32 %v723, 0.0
        %v790 = vmax.f32 %v726, 0.0
        %v791 = vmax.f32 %v728, 0.0
        %v792 = vmax.f32 %v731, 0.0
        %v793 = vmax.f32 %v733, 0.0
        %v794 = vmax.f32 %v736, 0.0
        %v795 = vmax.f32 %v738, 0.0
        %v796 = vmax.f32 %v741, 0.0
        %v797 = vmax.f32 %v743, 0.0
        %v798 = vmax.f32 %v746, 0.0
        %v799 = vmax.f32 %v748, 0.0
        %v800 = vmax.f32 %v751, 0.0
        %v801 = vmax.f32 %v753, 0.0
        %v802 = vmax.f32 %v756, 0.0
        %v803 = vmax.f32 %v758, 0.0
        %v804 = vmax.f32 %v761, 0.0
        %v805 = vmax.f32 %v763, 0.0
        %v806 = vmax.f32 %v766, 0.0
        %v807 = vmax.f32 %v768, 0.0
        %v808 = vmax.f32 %v771, 0.0
        %v809 = vmax.f32 %v773, 0.0
        %v810 = vmax.f32 %v776, 0.0
        %v811 = vmax.f32 %v778, 0.0
        %vm812 = vcmask 519168
        %813 = vst.msk [vmem:[#allocation2] sm:$0xf] %vm812, 0
        %814 = vst.msk [vmem:[#allocation2 + $0x4] sm:$0xf] %vm812, 0
        %vm815 = vcmask 516096
        %816 = vst.msk [vmem:[#allocation2 + $0x8] sm:$0x1] %vm815, 0
        %817 = vst.msk [vmem:[#allocation2 + $0xc] sm:$0xf] %vm812, 0
        %818 = vst.msk [vmem:[#allocation2 + $0x10] sm:$0xf] %vm812, 0
        %819 = vst.msk [vmem:[#allocation2 + $0x14] sm:$0x1] %vm815, 0
        %820 = vst.msk [vmem:[#allocation2 + $0x18] sm:$0xf] %vm812, 0
        %821 = vst.msk [vmem:[#allocation2 + $0x1c] sm:$0xf] %vm812, 0
        %822 = vst.msk [vmem:[#allocation2 + $0x20] sm:$0x1] %vm815, 0
        %823 = vst.msk [vmem:[#allocation2 + $0x24] sm:$0xf] %vm812, 0
        %824 = vst.msk [vmem:[#allocation2 + $0x28] sm:$0xf] %vm812, 0
        %825 = vst.msk [vmem:[#allocation2 + $0x2c] sm:$0x1] %vm815, 0
        %826 = vst.msk [vmem:[#allocation2 + $0x30] sm:$0xf] %vm812, 0
        %827 = vst.msk [vmem:[#allocation2 + $0x34] sm:$0xf] %vm812, 0
        %828 = vst.msk [vmem:[#allocation2 + $0x38] sm:$0x1] %vm815, 0
        %829 = vst.msk [vmem:[#allocation2 + $0x3c] sm:$0xf] %vm812, 0
        %830 = vst.msk [vmem:[#allocation2 + $0x40] sm:$0xf] %vm812, 0
        %831 = vst.msk [vmem:[#allocation2 + $0x44] sm:$0x1] %vm815, 0
        %832 = vst.msk [vmem:[#allocation2 + $0x48] sm:$0xf] %vm812, 0
        %833 = vst.msk [vmem:[#allocation2 + $0x4c] sm:$0xf] %vm812, 0
        %834 = vst.msk [vmem:[#allocation2 + $0x50] sm:$0x1] %vm815, 0
        %835 = vst.msk [vmem:[#allocation2 + $0x54] sm:$0xf] %vm812, 0
        %836 = vst.msk [vmem:[#allocation2 + $0x58] sm:$0xf] %vm812, 0
        %837 = vst.msk [vmem:[#allocation2 + $0x5c] sm:$0x1] %vm815, 0
        %838 = vst.msk [vmem:[#allocation2 + $0x60] sm:$0xf] %vm812, 0
        %839 = vst.msk [vmem:[#allocation2 + $0x64] sm:$0xf] %vm812, 0
        %840 = vst.msk [vmem:[#allocation2 + $0x68] sm:$0x1] %vm815, 0
        %841 = vst.msk [vmem:[#allocation2 + $0x6c] sm:$0xf] %vm812, 0
        %842 = vst.msk [vmem:[#allocation2 + $0x70] sm:$0xf] %vm812, 0
        %843 = vst.msk [vmem:[#allocation2 + $0x74] sm:$0x1] %vm815, 0
        %844 = vst.msk [vmem:[#allocation2 + $0x78] sm:$0xf] %vm812, 0
        %845 = vst.msk [vmem:[#allocation2 + $0x7c] sm:$0xf] %vm812, 0
        %846 = vst.msk [vmem:[#allocation2 + $0x80] sm:$0x1] %vm815, 0
        %847 = vst.msk [vmem:[#allocation2 + $0x84] sm:$0xf] %vm812, 0
        %848 = vst.msk [vmem:[#allocation2 + $0x88] sm:$0xf] %vm812, 0
        %849 = vst.msk [vmem:[#allocation2 + $0x8c] sm:$0x1] %vm815, 0
        %850 = vst.msk [vmem:[#allocation2 + $0x90] sm:$0xf] %vm812, 0
        %851 = vst.msk [vmem:[#allocation2 + $0x94] sm:$0xf] %vm812, 0
        %852 = vst.msk [vmem:[#allocation2 + $0x98] sm:$0x1] %vm815, 0
        %853 = vst.msk [vmem:[#allocation2 + $0x9c] sm:$0xf] %vm812, 0
        %854 = vst.msk [vmem:[#allocation2 + $0xa0] sm:$0xf] %vm812, 0
        %855 = vst.msk [vmem:[#allocation2 + $0xa4] sm:$0x1] %vm815, 0
        %856 = vst.msk [vmem:[#allocation2 + $0xa8] sm:$0xf] %vm812, 0
        %857 = vst.msk [vmem:[#allocation2 + $0xac] sm:$0xf] %vm812, 0
        %858 = vst.msk [vmem:[#allocation2 + $0xb0] sm:$0x1] %vm815, 0
        %859 = vst.msk [vmem:[#allocation2 + $0xb4] sm:$0xf] %vm812, 0
        %860 = vst.msk [vmem:[#allocation2 + $0xb8] sm:$0xf] %vm812, 0
        %861 = vst.msk [vmem:[#allocation2 + $0xbc] sm:$0x1] %vm815, 0
        %862 = vst.msk [vmem:[#allocation2 + $0xc0] sm:$0xf] %vm812, 0
        %863 = vst.msk [vmem:[#allocation2 + $0xc4] sm:$0xf] %vm812, 0
        %864 = vst.msk [vmem:[#allocation2 + $0xc8] sm:$0x1] %vm815, 0
        %865 = vst.msk [vmem:[#allocation2 + $0xcc] sm:$0xf] %vm812, 0
        %866 = vst.msk [vmem:[#allocation2 + $0xd0] sm:$0xf] %vm812, 0
        %867 = vst.msk [vmem:[#allocation2 + $0xd4] sm:$0x1] %vm815, 0
        %v868 = vpack.c.bf16 %v780, %v780
        %v869 = vpack.c.bf16 %v781, %v781
        %v870 = vpack.c.bf16 %v782, %v782
        %v871 = vpack.c.bf16 %v783, %v783
        %v872 = vpack.c.bf16 %v784, %v784
        %v873 = vpack.c.bf16 %v785, %v785
        %v874 = vpack.c.bf16 %v786, %v786
        %v875 = vpack.c.bf16 %v787, %v787
        %v876 = vpack.c.bf16 %v788, %v788
        %v877 = vpack.c.bf16 %v789, %v789
        %v878 = vpack.c.bf16 %v790, %v790
        %v879 = vpack.c.bf16 %v791, %v791
        %v880 = vpack.c.bf16 %v792, %v792
        %v881 = vpack.c.bf16 %v793, %v793
        %v882 = vpack.c.bf16 %v794, %v794
        %v883 = vpack.c.bf16 %v795, %v795
        %v884 = vpack.c.bf16 %v796, %v796
        %v885 = vpack.c.bf16 %v797, %v797
        %v886 = vpack.c.bf16 %v798, %v798
        %v887 = vpack.c.bf16 %v799, %v799
        %v888 = vpack.c.bf16 %v800, %v800
        %v889 = vpack.c.bf16 %v801, %v801
        %v890 = vpack.c.bf16 %v802, %v802
        %v891 = vpack.c.bf16 %v803, %v803
        %v892 = vpack.c.bf16 %v804, %v804
        %v893 = vpack.c.bf16 %v805, %v805
        %v894 = vpack.c.bf16 %v806, %v806
        %v895 = vpack.c.bf16 %v807, %v807
        %v896 = vpack.c.bf16 %v808, %v808
        %v897 = vpack.c.bf16 %v809, %v809
        %v898 = vpack.c.bf16 %v810, %v810
        %v899 = vpack.c.bf16 %v811, %v811
        %vm900 = vsmask.f32 256
        %vm901 = vsmask.f32 4368
        %vm902 = vmor %vm900, %vm901
        %v904 = vshrl.u32 %v868, 16
        %v906 = vrot.slane %v904, 7
        %v907 = vshll.u32 %v868, 16
        %v909 = vor.u32 %v906, %v907
        %v910 = vrot.slane %v906, 4
        %v912 = vshrl.u32 %v869, 16
        %v914 = vrot.slane %v912, 7
        %v915 = vshll.u32 %v869, 16
        %v917 = vor.u32 %v914, %v915
        %v918 = vsel %vm902, %v910, %v917
        %v919 = vrot.slane %v914, 4
        %v921 = vshrl.u32 %v870, 16
        %v923 = vrot.slane %v921, 7
        %v924 = vshll.u32 %v870, 16
        %v926 = vor.u32 %v923, %v924
        %v927 = vrot.slane %v923, 4
        %v929 = vshrl.u32 %v871, 16
        %v931 = vrot.slane %v929, 7
        %v932 = vshll.u32 %v871, 16
        %v934 = vor.u32 %v931, %v932
        %v935 = vsel %vm902, %v927, %v934
        %v936 = vrot.slane %v931, 4
        %v938 = vshrl.u32 %v872, 16
        %v940 = vrot.slane %v938, 7
        %v941 = vshll.u32 %v872, 16
        %v943 = vor.u32 %v940, %v941
        %v944 = vrot.slane %v940, 4
        %v946 = vshrl.u32 %v873, 16
        %v948 = vrot.slane %v946, 7
        %v949 = vshll.u32 %v873, 16
        %v951 = vor.u32 %v948, %v949
        %v952 = vsel %vm902, %v944, %v951
        %v953 = vrot.slane %v948, 4
        %v955 = vshrl.u32 %v874, 16
        %v957 = vrot.slane %v955, 7
        %v958 = vshll.u32 %v874, 16
        %v960 = vor.u32 %v957, %v958
        %v961 = vrot.slane %v957, 4
        %v963 = vshrl.u32 %v875, 16
        %v965 = vrot.slane %v963, 7
        %v966 = vshll.u32 %v875, 16
        %v968 = vor.u32 %v965, %v966
        %v969 = vsel %vm902, %v961, %v968
        %v970 = vrot.slane %v965, 4
        %v972 = vshrl.u32 %v876, 16
        %v974 = vrot.slane %v972, 7
        %v975 = vshll.u32 %v876, 16
        %v977 = vor.u32 %v974, %v975
        %v978 = vrot.slane %v974, 4
        %v980 = vshrl.u32 %v877, 16
        %v982 = vrot.slane %v980, 7
        %v983 = vshll.u32 %v877, 16
        %v985 = vor.u32 %v982, %v983
        %v986 = vsel %vm902, %v978, %v985
        %v987 = vrot.slane %v982, 4
        %v989 = vshrl.u32 %v878, 16
        %v991 = vrot.slane %v989, 7
        %v992 = vshll.u32 %v878, 16
        %v994 = vor.u32 %v991, %v992
        %v995 = vrot.slane %v991, 4
        %v997 = vshrl.u32 %v879, 16
        %v999 = vrot.slane %v997, 7
        %v1000 = vshll.u32 %v879, 16
        %v1002 = vor.u32 %v999, %v1000
        %v1003 = vsel %vm902, %v995, %v1002
        %v1004 = vrot.slane %v999, 4
        %v1006 = vshrl.u32 %v880, 16
        %v1008 = vrot.slane %v1006, 7
        %v1009 = vshll.u32 %v880, 16
        %v1011 = vor.u32 %v1008, %v1009
        %v1012 = vrot.slane %v1008, 4
        %v1014 = vshrl.u32 %v881, 16
        %v1016 = vrot.slane %v1014, 7
        %v1017 = vshll.u32 %v881, 16
        %v1019 = vor.u32 %v1016, %v1017
        %v1020 = vsel %vm902, %v1012, %v1019
        %v1021 = vrot.slane %v1016, 4
        %v1023 = vshrl.u32 %v882, 16
        %v1025 = vrot.slane %v1023, 7
        %v1026 = vshll.u32 %v882, 16
        %v1028 = vor.u32 %v1025, %v1026
        %v1029 = vrot.slane %v1025, 4
        %v1031 = vshrl.u32 %v883, 16
        %v1033 = vrot.slane %v1031, 7
        %v1034 = vshll.u32 %v883, 16
        %v1036 = vor.u32 %v1033, %v1034
        %v1037 = vsel %vm902, %v1029, %v1036
        %v1038 = vrot.slane %v1033, 4
        %v1040 = vshrl.u32 %v884, 16
        %v1042 = vrot.slane %v1040, 7
        %v1043 = vshll.u32 %v884, 16
        %v1045 = vor.u32 %v1042, %v1043
        %v1046 = vrot.slane %v1042, 4
        %v1048 = vshrl.u32 %v885, 16
        %v1050 = vrot.slane %v1048, 7
        %v1051 = vshll.u32 %v885, 16
        %v1053 = vor.u32 %v1050, %v1051
        %v1054 = vsel %vm902, %v1046, %v1053
        %v1055 = vrot.slane %v1050, 4
        %v1057 = vshrl.u32 %v886, 16
        %v1059 = vrot.slane %v1057, 7
        %v1060 = vshll.u32 %v886, 16
        %v1062 = vor.u32 %v1059, %v1060
        %v1063 = vrot.slane %v1059, 4
        %v1065 = vshrl.u32 %v887, 16
        %v1067 = vrot.slane %v1065, 7
        %v1068 = vshll.u32 %v887, 16
        %v1070 = vor.u32 %v1067, %v1068
        %v1071 = vsel %vm902, %v1063, %v1070
        %v1072 = vrot.slane %v1067, 4
        %v1074 = vshrl.u32 %v888, 16
        %v1076 = vrot.slane %v1074, 7
        %v1077 = vshll.u32 %v888, 16
        %v1079 = vor.u32 %v1076, %v1077
        %v1080 = vrot.slane %v1076, 4
        %v1082 = vshrl.u32 %v889, 16
        %v1084 = vrot.slane %v1082, 7
        %v1085 = vshll.u32 %v889, 16
        %v1087 = vor.u32 %v1084, %v1085
        %v1088 = vsel %vm902, %v1080, %v1087
        %v1089 = vrot.slane %v1084, 4
        %v1091 = vshrl.u32 %v890, 16
        %v1093 = vrot.slane %v1091, 7
        %v1094 = vshll.u32 %v890, 16
        %v1096 = vor.u32 %v1093, %v1094
        %v1097 = vrot.slane %v1093, 4
        %v1099 = vshrl.u32 %v891, 16
        %v1101 = vrot.slane %v1099, 7
        %v1102 = vshll.u32 %v891, 16
        %v1104 = vor.u32 %v1101, %v1102
        %v1105 = vsel %vm902, %v1097, %v1104
        %v1106 = vrot.slane %v1101, 4
        %v1108 = vshrl.u32 %v892, 16
        %v1110 = vrot.slane %v1108, 7
        %v1111 = vshll.u32 %v892, 16
        %v1113 = vor.u32 %v1110, %v1111
        %v1114 = vrot.slane %v1110, 4
        %v1116 = vshrl.u32 %v893, 16
        %v1118 = vrot.slane %v1116, 7
        %v1119 = vshll.u32 %v893, 16
        %v1121 = vor.u32 %v1118, %v1119
        %v1122 = vsel %vm902, %v1114, %v1121
        %v1123 = vrot.slane %v1118, 4
        %v1125 = vshrl.u32 %v894, 16
        %v1127 = vrot.slane %v1125, 7
        %v1128 = vshll.u32 %v894, 16
        %v1130 = vor.u32 %v1127, %v1128
        %v1131 = vrot.slane %v1127, 4
        %v1133 = vshrl.u32 %v895, 16
        %v1135 = vrot.slane %v1133, 7
        %v1136 = vshll.u32 %v895, 16
        %v1138 = vor.u32 %v1135, %v1136
        %v1139 = vsel %vm902, %v1131, %v1138
        %v1140 = vrot.slane %v1135, 4
        %v1142 = vshrl.u32 %v896, 16
        %v1144 = vrot.slane %v1142, 7
        %v1145 = vshll.u32 %v896, 16
        %v1147 = vor.u32 %v1144, %v1145
        %v1148 = vrot.slane %v1144, 4
        %v1150 = vshrl.u32 %v897, 16
        %v1152 = vrot.slane %v1150, 7
        %v1153 = vshll.u32 %v897, 16
        %v1155 = vor.u32 %v1152, %v1153
        %v1156 = vsel %vm902, %v1148, %v1155
        %v1157 = vrot.slane %v1152, 4
        %v1159 = vshrl.u32 %v898, 16
        %v1161 = vrot.slane %v1159, 7
        %v1162 = vshll.u32 %v898, 16
        %v1164 = vor.u32 %v1161, %v1162
        %v1165 = vrot.slane %v1161, 4
        %v1167 = vshrl.u32 %v899, 16
        %v1169 = vrot.slane %v1167, 7
        %v1170 = vshll.u32 %v899, 16
        %v1172 = vor.u32 %v1169, %v1170
        %v1173 = vsel %vm902, %v1165, %v1172
        %v1174 = vrot.slane %v1169, 4
        %s1223 = scalar_lea.vmem [#allocation2], 12
        %vm1224 = vcmask 519168
        %vm1225 = vsmask.f32 7938
        %vm1226 = vmand %vm1224, %vm1225
        %v1227 = vld [vmem:[%s1223] sm:$0xf]
        %v1228 = vsel %vm1226, %v909, %v1227
        %1229 = vst [vmem:[%s1223] sm:$0xf] %v1228
        %1230 = vst.msk [vmem:[%s1223 + $0x4] sm:$0xf] %vm812, %v918
        %vm1231 = vcmask 516096
        %vm1232 = vmand %vm1231, %vm900
        %v1233 = vld [vmem:[%s1223 + $0x8] sm:$0x1]
        %v1234 = vsel %vm1232, %v919, %v1233
        %1235 = vst [vmem:[%s1223 + $0x8] sm:$0x1] %v1234
        %v1236 = vld [vmem:[%s1223 + $0xc] sm:$0xf]
        %v1237 = vsel %vm1226, %v926, %v1236
        %1238 = vst [vmem:[%s1223 + $0xc] sm:$0xf] %v1237
        %1239 = vst.msk [vmem:[%s1223 + $0x10] sm:$0xf] %vm812, %v935
        %v1240 = vld [vmem:[%s1223 + $0x14] sm:$0x1]
        %v1241 = vsel %vm1232, %v936, %v1240
        %1242 = vst [vmem:[%s1223 + $0x14] sm:$0x1] %v1241
        %v1243 = vld [vmem:[%s1223 + $0x18] sm:$0xf]
        %v1244 = vsel %vm1226, %v943, %v1243
        %1245 = vst [vmem:[%s1223 + $0x18] sm:$0xf] %v1244
        %1246 = vst.msk [vmem:[%s1223 + $0x1c] sm:$0xf] %vm812, %v952
        %v1247 = vld [vmem:[%s1223 + $0x20] sm:$0x1]
        %v1248 = vsel %vm1232, %v953, %v1247
        %1249 = vst [vmem:[%s1223 + $0x20] sm:$0x1] %v1248
        %v1250 = vld [vmem:[%s1223 + $0x24] sm:$0xf]
        %v1251 = vsel %vm1226, %v960, %v1250
        %1252 = vst [vmem:[%s1223 + $0x24] sm:$0xf] %v1251
        %1253 = vst.msk [vmem:[%s1223 + $0x28] sm:$0xf] %vm812, %v969
        %v1254 = vld [vmem:[%s1223 + $0x2c] sm:$0x1]
        %v1255 = vsel %vm1232, %v970, %v1254
        %1256 = vst [vmem:[%s1223 + $0x2c] sm:$0x1] %v1255
        %v1257 = vld [vmem:[%s1223 + $0x30] sm:$0xf]
        %v1258 = vsel %vm1226, %v977, %v1257
        %1259 = vst [vmem:[%s1223 + $0x30] sm:$0xf] %v1258
        %1260 = vst.msk [vmem:[%s1223 + $0x34] sm:$0xf] %vm812, %v986
        %v1261 = vld [vmem:[%s1223 + $0x38] sm:$0x1]
        %v1262 = vsel %vm1232, %v987, %v1261
        %1263 = vst [vmem:[%s1223 + $0x38] sm:$0x1] %v1262
        %v1264 = vld [vmem:[%s1223 + $0x3c] sm:$0xf]
        %v1265 = vsel %vm1226, %v994, %v1264
        %1266 = vst [vmem:[%s1223 + $0x3c] sm:$0xf] %v1265
        %1267 = vst.msk [vmem:[%s1223 + $0x40] sm:$0xf] %vm812, %v1003
        %v1268 = vld [vmem:[%s1223 + $0x44] sm:$0x1]
        %v1269 = vsel %vm1232, %v1004, %v1268
        %1270 = vst [vmem:[%s1223 + $0x44] sm:$0x1] %v1269
        %v1271 = vld [vmem:[%s1223 + $0x48] sm:$0xf]
        %v1272 = vsel %vm1226, %v1011, %v1271
        %1273 = vst [vmem:[%s1223 + $0x48] sm:$0xf] %v1272
        %1274 = vst.msk [vmem:[%s1223 + $0x4c] sm:$0xf] %vm812, %v1020
        %v1275 = vld [vmem:[%s1223 + $0x50] sm:$0x1]
        %v1276 = vsel %vm1232, %v1021, %v1275
        %1277 = vst [vmem:[%s1223 + $0x50] sm:$0x1] %v1276
        %v1278 = vld [vmem:[%s1223 + $0x54] sm:$0xf]
        %v1279 = vsel %vm1226, %v1028, %v1278
        %1280 = vst [vmem:[%s1223 + $0x54] sm:$0xf] %v1279
        %1281 = vst.msk [vmem:[%s1223 + $0x58] sm:$0xf] %vm812, %v1037
        %v1282 = vld [vmem:[%s1223 + $0x5c] sm:$0x1]
        %v1283 = vsel %vm1232, %v1038, %v1282
        %1284 = vst [vmem:[%s1223 + $0x5c] sm:$0x1] %v1283
        %v1285 = vld [vmem:[%s1223 + $0x60] sm:$0xf]
        %v1286 = vsel %vm1226, %v1045, %v1285
        %1287 = vst [vmem:[%s1223 + $0x60] sm:$0xf] %v1286
        %1288 = vst.msk [vmem:[%s1223 + $0x64] sm:$0xf] %vm812, %v1054
        %v1289 = vld [vmem:[%s1223 + $0x68] sm:$0x1]
        %v1290 = vsel %vm1232, %v1055, %v1289
        %1291 = vst [vmem:[%s1223 + $0x68] sm:$0x1] %v1290
        %v1292 = vld [vmem:[%s1223 + $0x6c] sm:$0xf]
        %v1293 = vsel %vm1226, %v1062, %v1292
        %1294 = vst [vmem:[%s1223 + $0x6c] sm:$0xf] %v1293
        %1295 = vst.msk [vmem:[%s1223 + $0x70] sm:$0xf] %vm812, %v1071
        %v1296 = vld [vmem:[%s1223 + $0x74] sm:$0x1]
        %v1297 = vsel %vm1232, %v1072, %v1296
        %1298 = vst [vmem:[%s1223 + $0x74] sm:$0x1] %v1297
        %v1299 = vld [vmem:[%s1223 + $0x78] sm:$0xf]
        %v1300 = vsel %vm1226, %v1079, %v1299
        %1301 = vst [vmem:[%s1223 + $0x78] sm:$0xf] %v1300
        %1302 = vst.msk [vmem:[%s1223 + $0x7c] sm:$0xf] %vm812, %v1088
        %v1303 = vld [vmem:[%s1223 + $0x80] sm:$0x1]
        %v1304 = vsel %vm1232, %v1089, %v1303
        %1305 = vst [vmem:[%s1223 + $0x80] sm:$0x1] %v1304
        %v1306 = vld [vmem:[%s1223 + $0x84] sm:$0xf]
        %v1307 = vsel %vm1226, %v1096, %v1306
        %1308 = vst [vmem:[%s1223 + $0x84] sm:$0xf] %v1307
        %1309 = vst.msk [vmem:[%s1223 + $0x88] sm:$0xf] %vm812, %v1105
        %v1310 = vld [vmem:[%s1223 + $0x8c] sm:$0x1]
        %v1311 = vsel %vm1232, %v1106, %v1310
        %1312 = vst [vmem:[%s1223 + $0x8c] sm:$0x1] %v1311
        %v1313 = vld [vmem:[%s1223 + $0x90] sm:$0xf]
        %v1314 = vsel %vm1226, %v1113, %v1313
        %1315 = vst [vmem:[%s1223 + $0x90] sm:$0xf] %v1314
        %1316 = vst.msk [vmem:[%s1223 + $0x94] sm:$0xf] %vm812, %v1122
        %v1317 = vld [vmem:[%s1223 + $0x98] sm:$0x1]
        %v1318 = vsel %vm1232, %v1123, %v1317
        %1319 = vst [vmem:[%s1223 + $0x98] sm:$0x1] %v1318
        %v1320 = vld [vmem:[%s1223 + $0x9c] sm:$0xf]
        %v1321 = vsel %vm1226, %v1130, %v1320
        %1322 = vst [vmem:[%s1223 + $0x9c] sm:$0xf] %v1321
        %1323 = vst.msk [vmem:[%s1223 + $0xa0] sm:$0xf] %vm812, %v1139
        %v1324 = vld [vmem:[%s1223 + $0xa4] sm:$0x1]
        %v1325 = vsel %vm1232, %v1140, %v1324
        %1326 = vst [vmem:[%s1223 + $0xa4] sm:$0x1] %v1325
        %v1327 = vld [vmem:[%s1223 + $0xa8] sm:$0xf]
        %v1328 = vsel %vm1226, %v1147, %v1327
        %1329 = vst [vmem:[%s1223 + $0xa8] sm:$0xf] %v1328
        %1330 = vst.msk [vmem:[%s1223 + $0xac] sm:$0xf] %vm812, %v1156
        %v1331 = vld [vmem:[%s1223 + $0xb0] sm:$0x1]
        %v1332 = vsel %vm1232, %v1157, %v1331
        %1333 = vst [vmem:[%s1223 + $0xb0] sm:$0x1] %v1332
        %v1334 = vld [vmem:[%s1223 + $0xb4] sm:$0xf]
        %v1335 = vsel %vm1226, %v1164, %v1334
        %1336 = vst [vmem:[%s1223 + $0xb4] sm:$0xf] %v1335
        %1337 = vst.msk [vmem:[%s1223 + $0xb8] sm:$0xf] %vm812, %v1173
        %v1338 = vld [vmem:[%s1223 + $0xbc] sm:$0x1]
        %v1339 = vsel %vm1232, %v1174, %v1338
        %1340 = vst [vmem:[%s1223 + $0xbc] sm:$0x1] %v1339
        %v1341 = vld [vmem:[#allocation2] sm:$0xf]
        %v1342 = vld [vmem:[#allocation2 + $0x4] sm:$0xf]
        %v1343 = vld [vmem:[#allocation2 + $0xc] sm:$0xf]
        %v1344 = vld [vmem:[#allocation2 + $0x10] sm:$0xf]
        %v1345 = vld [vmem:[#allocation2 + $0x18] sm:$0xf]
        %v1346 = vld [vmem:[#allocation2 + $0x1c] sm:$0xf]
        %v1347 = vld [vmem:[#allocation2 + $0x24] sm:$0xf]
        %v1348 = vld [vmem:[#allocation2 + $0x28] sm:$0xf]
        %v1349 = vld [vmem:[#allocation2 + $0x30] sm:$0xf]
        %v1350 = vld [vmem:[#allocation2 + $0x34] sm:$0xf]
        %v1351 = vld [vmem:[#allocation2 + $0x3c] sm:$0xf]
        %v1352 = vld [vmem:[#allocation2 + $0x40] sm:$0xf]
        %v1353 = vld [vmem:[#allocation2 + $0x48] sm:$0xf]
        %v1354 = vld [vmem:[#allocation2 + $0x4c] sm:$0xf]
        %v1355 = vld [vmem:[#allocation2 + $0x54] sm:$0xf]
        %v1356 = vld [vmem:[#allocation2 + $0x58] sm:$0xf]
        %v1357 = vld [vmem:[#allocation2 + $0x60] sm:$0xf]
        %v1358 = vld [vmem:[#allocation2 + $0x64] sm:$0xf]
        %v1359 = vld [vmem:[#allocation2 + $0x6c] sm:$0xf]
        %v1360 = vld [vmem:[#allocation2 + $0x70] sm:$0xf]
        %v1361 = vld [vmem:[#allocation2 + $0x78] sm:$0xf]
        %v1362 = vld [vmem:[#allocation2 + $0x7c] sm:$0xf]
        %v1363 = vld [vmem:[#allocation2 + $0x84] sm:$0xf]
        %v1364 = vld [vmem:[#allocation2 + $0x88] sm:$0xf]
        %v1365 = vld [vmem:[#allocation2 + $0x90] sm:$0xf]
        %v1366 = vld [vmem:[#allocation2 + $0x94] sm:$0xf]
        %v1367 = vld [vmem:[#allocation2 + $0x9c] sm:$0xf]
        %v1368 = vld [vmem:[#allocation2 + $0xa0] sm:$0xf]
        %v1369 = vld [vmem:[#allocation2 + $0xa8] sm:$0xf]
        %v1370 = vld [vmem:[#allocation2 + $0xac] sm:$0xf]
        %v1371 = vld [vmem:[#allocation2 + $0xb4] sm:$0xf]
        %v1372 = vld [vmem:[#allocation2 + $0xb8] sm:$0xf]
        %1373 = vst.msk [vmem:[#allocation3] sm:$0xf] %vm812, %v1341
        %1374 = vst.msk [vmem:[#allocation3 + $0x14] sm:$0xf] %vm812, %v1342
        %1375 = vst.msk [vmem:[#allocation3 + $0x28] sm:$0xf] %vm812, %v1343
        %1376 = vst.msk [vmem:[#allocation3 + $0x3c] sm:$0xf] %vm812, %v1344
        %1377 = vst.msk [vmem:[#allocation3 + $0x50] sm:$0xf] %vm812, %v1345
        %1378 = vst.msk [vmem:[#allocation3 + $0x64] sm:$0xf] %vm812, %v1346
        %1379 = vst.msk [vmem:[#allocation3 + $0x78] sm:$0xf] %vm812, %v1347
        %1380 = vst.msk [vmem:[#allocation3 + $0x8c] sm:$0xf] %vm812, %v1348
        %1381 = vst.msk [vmem:[#allocation3 + $0xa0] sm:$0xf] %vm812, %v1349
        %1382 = vst.msk [vmem:[#allocation3 + $0xb4] sm:$0xf] %vm812, %v1350
        %1383 = vst.msk [vmem:[#allocation3 + $0xc8] sm:$0xf] %vm812, %v1351
        %1384 = vst.msk [vmem:[#allocation3 + $0xdc] sm:$0xf] %vm812, %v1352
        %1385 = vst.msk [vmem:[#allocation3 + $0xf0] sm:$0xf] %vm812, %v1353
        %1386 = vst.msk [vmem:[#allocation3 + $0x104] sm:$0xf] %vm812, %v1354
        %1387 = vst.msk [vmem:[#allocation3 + $0x118] sm:$0xf] %vm812, %v1355
        %1388 = vst.msk [vmem:[#allocation3 + $0x12c] sm:$0xf] %vm812, %v1356
        %1389 = vst.msk [vmem:[#allocation3 + $0x140] sm:$0xf] %vm812, %v1357
        %1390 = vst.msk [vmem:[#allocation3 + $0x154] sm:$0xf] %vm812, %v1358
        %1391 = vst.msk [vmem:[#allocation3 + $0x168] sm:$0xf] %vm812, %v1359
        %1392 = vst.msk [vmem:[#allocation3 + $0x17c] sm:$0xf] %vm812, %v1360
        %1393 = vst.msk [vmem:[#allocation3 + $0x190] sm:$0xf] %vm812, %v1361
        %1394 = vst.msk [vmem:[#allocation3 + $0x1a4] sm:$0xf] %vm812, %v1362
        %1395 = vst.msk [vmem:[#allocation3 + $0x1b8] sm:$0xf] %vm812, %v1363
        %1396 = vst.msk [vmem:[#allocation3 + $0x1cc] sm:$0xf] %vm812, %v1364
        %1397 = vst.msk [vmem:[#allocation3 + $0x1e0] sm:$0xf] %vm812, %v1365
        %1398 = vst.msk [vmem:[#allocation3 + $0x1f4] sm:$0xf] %vm812, %v1366
        %1399 = vst.msk [vmem:[#allocation3 + $0x208] sm:$0xf] %vm812, %v1367
        %1400 = vst.msk [vmem:[#allocation3 + $0x21c] sm:$0xf] %vm812, %v1368
        %1401 = vst.msk [vmem:[#allocation3 + $0x230] sm:$0xf] %vm812, %v1369
        %1402 = vst.msk [vmem:[#allocation3 + $0x244] sm:$0xf] %vm812, %v1370
        %1403 = vst.msk [vmem:[#allocation3 + $0x258] sm:$0xf] %vm812, %v1371
        %1404 = vst.msk [vmem:[#allocation3 + $0x26c] sm:$0xf] %vm812, %v1372
        %v1405 = vld [vmem:[#allocation2] sm:$0xf]
        %v1406 = vld [vmem:[#allocation2 + $0x4] sm:$0xf]
        %v1407 = vld [vmem:[#allocation2 + $0x8] sm:$0x1]
        %v1408 = vld [vmem:[#allocation2 + $0xc] sm:$0xf]
        %v1409 = vld [vmem:[#allocation2 + $0x10] sm:$0xf]
        %v1410 = vld [vmem:[#allocation2 + $0x14] sm:$0x1]
        %v1411 = vld [vmem:[#allocation2 + $0x18] sm:$0xf]
        %v1412 = vld [vmem:[#allocation2 + $0x1c] sm:$0xf]
        %v1413 = vld [vmem:[#allocation2 + $0x20] sm:$0x1]
        %v1414 = vld [vmem:[#allocation2 + $0x24] sm:$0xf]
        %v1415 = vld [vmem:[#allocation2 + $0x28] sm:$0xf]
        %v1416 = vld [vmem:[#allocation2 + $0x2c] sm:$0x1]
        %v1417 = vld [vmem:[#allocation2 + $0x30] sm:$0xf]
        %v1418 = vld [vmem:[#allocation2 + $0x34] sm:$0xf]
        %v1419 = vld [vmem:[#allocation2 + $0x38] sm:$0x1]
        %v1420 = vld [vmem:[#allocation2 + $0x3c] sm:$0xf]
        %v1421 = vld [vmem:[#allocation2 + $0x40] sm:$0xf]
        %v1422 = vld [vmem:[#allocation2 + $0x44] sm:$0x1]
        %v1423 = vld [vmem:[#allocation2 + $0x48] sm:$0xf]
        %v1424 = vld [vmem:[#allocation2 + $0x4c] sm:$0xf]
        %v1425 = vld [vmem:[#allocation2 + $0x50] sm:$0x1]
        %v1426 = vld [vmem:[#allocation2 + $0x54] sm:$0xf]
        %v1427 = vld [vmem:[#allocation2 + $0x58] sm:$0xf]
        %v1428 = vld [vmem:[#allocation2 + $0x5c] sm:$0x1]
        %v1429 = vld [vmem:[#allocation2 + $0x60] sm:$0xf]
        %v1430 = vld [vmem:[#allocation2 + $0x64] sm:$0xf]
        %v1431 = vld [vmem:[#allocation2 + $0x68] sm:$0x1]
        %v1432 = vld [vmem:[#allocation2 + $0x6c] sm:$0xf]
        %v1433 = vld [vmem:[#allocation2 + $0x70] sm:$0xf]
        %v1434 = vld [vmem:[#allocation2 + $0x74] sm:$0x1]
        %v1435 = vld [vmem:[#allocation2 + $0x78] sm:$0xf]
        %v1436 = vld [vmem:[#allocation2 + $0x7c] sm:$0xf]
        %v1437 = vld [vmem:[#allocation2 + $0x80] sm:$0x1]
        %v1438 = vld [vmem:[#allocation2 + $0x84] sm:$0xf]
        %v1439 = vld [vmem:[#allocation2 + $0x88] sm:$0xf]
        %v1440 = vld [vmem:[#allocation2 + $0x8c] sm:$0x1]
        %v1441 = vld [vmem:[#allocation2 + $0x90] sm:$0xf]
        %v1442 = vld [vmem:[#allocation2 + $0x94] sm:$0xf]
        %v1443 = vld [vmem:[#allocation2 + $0x98] sm:$0x1]
        %v1444 = vld [vmem:[#allocation2 + $0x9c] sm:$0xf]
        %v1445 = vld [vmem:[#allocation2 + $0xa0] sm:$0xf]
        %v1446 = vld [vmem:[#allocation2 + $0xa4] sm:$0x1]
        %v1447 = vld [vmem:[#allocation2 + $0xa8] sm:$0xf]
        %v1448 = vld [vmem:[#allocation2 + $0xac] sm:$0xf]
        %v1449 = vld [vmem:[#allocation2 + $0xb0] sm:$0x1]
        %v1450 = vld [vmem:[#allocation2 + $0xb4] sm:$0xf]
        %v1451 = vld [vmem:[#allocation2 + $0xb8] sm:$0xf]
        %v1452 = vld [vmem:[#allocation2 + $0xbc] sm:$0x1]
        %vm1453 = vsmask.f32 3328
        %vm1454 = vsmask.f32 7440
        %vm1455 = vmor %vm1453, %vm1454
        %v1457 = vshrl.u32 %v1405, 16
        %v1459 = vrot.slane %v1457, 4
        %v1460 = vshll.u32 %v1405, 16
        %v1462 = vrot.slane %v1460, 5
        %v1463 = vor.u32 %v1459, %v1462
        %v1464 = vrot.slane %v1463, 4
        %v1466 = vshll.u32 %v1406, 16
        %v1468 = vrot.slane %v1466, 5
        %v1469 = vsel %vm1455, %v1464, %v1468
        %v1470 = vshrl.u32 %v1406, 16
        %v1472 = vrot.slane %v1470, 4
        %v1473 = vor.u32 %v1472, %v1468
        %v1474 = vrot.slane %v1473, 4
        %v1476 = vshll.u32 %v1407, 16
        %v1478 = vrot.slane %v1476, 5
        %v1479 = vsel %vm1455, %v1474, %v1478
        %v1481 = vshrl.u32 %v1408, 16
        %v1483 = vrot.slane %v1481, 4
        %v1484 = vshll.u32 %v1408, 16
        %v1486 = vrot.slane %v1484, 5
        %v1487 = vor.u32 %v1483, %v1486
        %v1488 = vrot.slane %v1487, 4
        %v1490 = vshll.u32 %v1409, 16
        %v1492 = vrot.slane %v1490, 5
        %v1493 = vsel %vm1455, %v1488, %v1492
        %v1494 = vshrl.u32 %v1409, 16
        %v1496 = vrot.slane %v1494, 4
        %v1497 = vor.u32 %v1496, %v1492
        %v1498 = vrot.slane %v1497, 4
        %v1500 = vshll.u32 %v1410, 16
        %v1502 = vrot.slane %v1500, 5
        %v1503 = vsel %vm1455, %v1498, %v1502
        %v1505 = vshrl.u32 %v1411, 16
        %v1507 = vrot.slane %v1505, 4
        %v1508 = vshll.u32 %v1411, 16
        %v1510 = vrot.slane %v1508, 5
        %v1511 = vor.u32 %v1507, %v1510
        %v1512 = vrot.slane %v1511, 4
        %v1514 = vshll.u32 %v1412, 16
        %v1516 = vrot.slane %v1514, 5
        %v1517 = vsel %vm1455, %v1512, %v1516
        %v1518 = vshrl.u32 %v1412, 16
        %v1520 = vrot.slane %v1518, 4
        %v1521 = vor.u32 %v1520, %v1516
        %v1522 = vrot.slane %v1521, 4
        %v1524 = vshll.u32 %v1413, 16
        %v1526 = vrot.slane %v1524, 5
        %v1527 = vsel %vm1455, %v1522, %v1526
        %v1529 = vshrl.u32 %v1414, 16
        %v1531 = vrot.slane %v1529, 4
        %v1532 = vshll.u32 %v1414, 16
        %v1534 = vrot.slane %v1532, 5
        %v1535 = vor.u32 %v1531, %v1534
        %v1536 = vrot.slane %v1535, 4
        %v1538 = vshll.u32 %v1415, 16
        %v1540 = vrot.slane %v1538, 5
        %v1541 = vsel %vm1455, %v1536, %v1540
        %v1542 = vshrl.u32 %v1415, 16
        %v1544 = vrot.slane %v1542, 4
        %v1545 = vor.u32 %v1544, %v1540
        %v1546 = vrot.slane %v1545, 4
        %v1548 = vshll.u32 %v1416, 16
        %v1550 = vrot.slane %v1548, 5
        %v1551 = vsel %vm1455, %v1546, %v1550
        %v1553 = vshrl.u32 %v1417, 16
        %v1555 = vrot.slane %v1553, 4
        %v1556 = vshll.u32 %v1417, 16
        %v1558 = vrot.slane %v1556, 5
        %v1559 = vor.u32 %v1555, %v1558
        %v1560 = vrot.slane %v1559, 4
        %v1562 = vshll.u32 %v1418, 16
        %v1564 = vrot.slane %v1562, 5
        %v1565 = vsel %vm1455, %v1560, %v1564
        %v1566 = vshrl.u32 %v1418, 16
        %v1568 = vrot.slane %v1566, 4
        %v1569 = vor.u32 %v1568, %v1564
        %v1570 = vrot.slane %v1569, 4
        %v1572 = vshll.u32 %v1419, 16
        %v1574 = vrot.slane %v1572, 5
        %v1575 = vsel %vm1455, %v1570, %v1574
        %v1577 = vshrl.u32 %v1420, 16
        %v1579 = vrot.slane %v1577, 4
        %v1580 = vshll.u32 %v1420, 16
        %v1582 = vrot.slane %v1580, 5
        %v1583 = vor.u32 %v1579, %v1582
        %v1584 = vrot.slane %v1583, 4
        %v1586 = vshll.u32 %v1421, 16
        %v1588 = vrot.slane %v1586, 5
        %v1589 = vsel %vm1455, %v1584, %v1588
        %v1590 = vshrl.u32 %v1421, 16
        %v1592 = vrot.slane %v1590, 4
        %v1593 = vor.u32 %v1592, %v1588
        %v1594 = vrot.slane %v1593, 4
        %v1596 = vshll.u32 %v1422, 16
        %v1598 = vrot.slane %v1596, 5
        %v1599 = vsel %vm1455, %v1594, %v1598
        %v1601 = vshrl.u32 %v1423, 16
        %v1603 = vrot.slane %v1601, 4
        %v1604 = vshll.u32 %v1423, 16
        %v1606 = vrot.slane %v1604, 5
        %v1607 = vor.u32 %v1603, %v1606
        %v1608 = vrot.slane %v1607, 4
        %v1610 = vshll.u32 %v1424, 16
        %v1612 = vrot.slane %v1610, 5
        %v1613 = vsel %vm1455, %v1608, %v1612
        %v1614 = vshrl.u32 %v1424, 16
        %v1616 = vrot.slane %v1614, 4
        %v1617 = vor.u32 %v1616, %v1612
        %v1618 = vrot.slane %v1617, 4
        %v1620 = vshll.u32 %v1425, 16
        %v1622 = vrot.slane %v1620, 5
        %v1623 = vsel %vm1455, %v1618, %v1622
        %v1625 = vshrl.u32 %v1426, 16
        %v1627 = vrot.slane %v1625, 4
        %v1628 = vshll.u32 %v1426, 16
        %v1630 = vrot.slane %v1628, 5
        %v1631 = vor.u32 %v1627, %v1630
        %v1632 = vrot.slane %v1631, 4
        %v1634 = vshll.u32 %v1427, 16
        %v1636 = vrot.slane %v1634, 5
        %v1637 = vsel %vm1455, %v1632, %v1636
        %v1638 = vshrl.u32 %v1427, 16
        %v1640 = vrot.slane %v1638, 4
        %v1641 = vor.u32 %v1640, %v1636
        %v1642 = vrot.slane %v1641, 4
        %v1644 = vshll.u32 %v1428, 16
        %v1646 = vrot.slane %v1644, 5
        %v1647 = vsel %vm1455, %v1642, %v1646
        %v1649 = vshrl.u32 %v1429, 16
        %v1651 = vrot.slane %v1649, 4
        %v1652 = vshll.u32 %v1429, 16
        %v1654 = vrot.slane %v1652, 5
        %v1655 = vor.u32 %v1651, %v1654
        %v1656 = vrot.slane %v1655, 4
        %v1658 = vshll.u32 %v1430, 16
        %v1660 = vrot.slane %v1658, 5
        %v1661 = vsel %vm1455, %v1656, %v1660
        %v1662 = vshrl.u32 %v1430, 16
        %v1664 = vrot.slane %v1662, 4
        %v1665 = vor.u32 %v1664, %v1660
        %v1666 = vrot.slane %v1665, 4
        %v1668 = vshll.u32 %v1431, 16
        %v1670 = vrot.slane %v1668, 5
        %v1671 = vsel %vm1455, %v1666, %v1670
        %v1673 = vshrl.u32 %v1432, 16
        %v1675 = vrot.slane %v1673, 4
        %v1676 = vshll.u32 %v1432, 16
        %v1678 = vrot.slane %v1676, 5
        %v1679 = vor.u32 %v1675, %v1678
        %v1680 = vrot.slane %v1679, 4
        %v1682 = vshll.u32 %v1433, 16
        %v1684 = vrot.slane %v1682, 5
        %v1685 = vsel %vm1455, %v1680, %v1684
        %v1686 = vshrl.u32 %v1433, 16
        %v1688 = vrot.slane %v1686, 4
        %v1689 = vor.u32 %v1688, %v1684
        %v1690 = vrot.slane %v1689, 4
        %v1692 = vshll.u32 %v1434, 16
        %v1694 = vrot.slane %v1692, 5
        %v1695 = vsel %vm1455, %v1690, %v1694
        %v1697 = vshrl.u32 %v1435, 16
        %v1699 = vrot.slane %v1697, 4
        %v1700 = vshll.u32 %v1435, 16
        %v1702 = vrot.slane %v1700, 5
        %v1703 = vor.u32 %v1699, %v1702
        %v1704 = vrot.slane %v1703, 4
        %v1706 = vshll.u32 %v1436, 16
        %v1708 = vrot.slane %v1706, 5
        %v1709 = vsel %vm1455, %v1704, %v1708
        %v1710 = vshrl.u32 %v1436, 16
        %v1712 = vrot.slane %v1710, 4
        %v1713 = vor.u32 %v1712, %v1708
        %v1714 = vrot.slane %v1713, 4
        %v1716 = vshll.u32 %v1437, 16
        %v1718 = vrot.slane %v1716, 5
        %v1719 = vsel %vm1455, %v1714, %v1718
        %v1721 = vshrl.u32 %v1438, 16
        %v1723 = vrot.slane %v1721, 4
        %v1724 = vshll.u32 %v1438, 16
        %v1726 = vrot.slane %v1724, 5
        %v1727 = vor.u32 %v1723, %v1726
        %v1728 = vrot.slane %v1727, 4
        %v1730 = vshll.u32 %v1439, 16
        %v1732 = vrot.slane %v1730, 5
        %v1733 = vsel %vm1455, %v1728, %v1732
        %v1734 = vshrl.u32 %v1439, 16
        %v1736 = vrot.slane %v1734, 4
        %v1737 = vor.u32 %v1736, %v1732
        %v1738 = vrot.slane %v1737, 4
        %v1740 = vshll.u32 %v1440, 16
        %v1742 = vrot.slane %v1740, 5
        %v1743 = vsel %vm1455, %v1738, %v1742
        %v1745 = vshrl.u32 %v1441, 16
        %v1747 = vrot.slane %v1745, 4
        %v1748 = vshll.u32 %v1441, 16
        %v1750 = vrot.slane %v1748, 5
        %v1751 = vor.u32 %v1747, %v1750
        %v1752 = vrot.slane %v1751, 4
        %v1754 = vshll.u32 %v1442, 16
        %v1756 = vrot.slane %v1754, 5
        %v1757 = vsel %vm1455, %v1752, %v1756
        %v1758 = vshrl.u32 %v1442, 16
        %v1760 = vrot.slane %v1758, 4
        %v1761 = vor.u32 %v1760, %v1756
        %v1762 = vrot.slane %v1761, 4
        %v1764 = vshll.u32 %v1443, 16
        %v1766 = vrot.slane %v1764, 5
        %v1767 = vsel %vm1455, %v1762, %v1766
        %v1769 = vshrl.u32 %v1444, 16
        %v1771 = vrot.slane %v1769, 4
        %v1772 = vshll.u32 %v1444, 16
        %v1774 = vrot.slane %v1772, 5
        %v1775 = vor.u32 %v1771, %v1774
        %v1776 = vrot.slane %v1775, 4
        %v1778 = vshll.u32 %v1445, 16
        %v1780 = vrot.slane %v1778, 5
        %v1781 = vsel %vm1455, %v1776, %v1780
        %v1782 = vshrl.u32 %v1445, 16
        %v1784 = vrot.slane %v1782, 4
        %v1785 = vor.u32 %v1784, %v1780
        %v1786 = vrot.slane %v1785, 4
        %v1788 = vshll.u32 %v1446, 16
        %v1790 = vrot.slane %v1788, 5
        %v1791 = vsel %vm1455, %v1786, %v1790
        %v1793 = vshrl.u32 %v1447, 16
        %v1795 = vrot.slane %v1793, 4
        %v1796 = vshll.u32 %v1447, 16
        %v1798 = vrot.slane %v1796, 5
        %v1799 = vor.u32 %v1795, %v1798
        %v1800 = vrot.slane %v1799, 4
        %v1802 = vshll.u32 %v1448, 16
        %v1804 = vrot.slane %v1802, 5
        %v1805 = vsel %vm1455, %v1800, %v1804
        %v1806 = vshrl.u32 %v1448, 16
        %v1808 = vrot.slane %v1806, 4
        %v1809 = vor.u32 %v1808, %v1804
        %v1810 = vrot.slane %v1809, 4
        %v1812 = vshll.u32 %v1449, 16
        %v1814 = vrot.slane %v1812, 5
        %v1815 = vsel %vm1455, %v1810, %v1814
        %v1817 = vshrl.u32 %v1450, 16
        %v1819 = vrot.slane %v1817, 4
        %v1820 = vshll.u32 %v1450, 16
        %v1822 = vrot.slane %v1820, 5
        %v1823 = vor.u32 %v1819, %v1822
        %v1824 = vrot.slane %v1823, 4
        %v1826 = vshll.u32 %v1451, 16
        %v1828 = vrot.slane %v1826, 5
        %v1829 = vsel %vm1455, %v1824, %v1828
        %v1830 = vshrl.u32 %v1451, 16
        %v1832 = vrot.slane %v1830, 4
        %v1833 = vor.u32 %v1832, %v1828
        %v1834 = vrot.slane %v1833, 4
        %v1836 = vshll.u32 %v1452, 16
        %v1838 = vrot.slane %v1836, 5
        %v1839 = vsel %vm1455, %v1834, %v1838
        %1840 = vrot.lane.b32.xlu0 %v1469, 64
        %v1841 = vpop.permute.xlu0 %1840
        %1842 = vrot.lane.b32.xlu0 %v1479, 64
        %v1843 = vpop.permute.xlu0 %1842
        %1844 = vrot.lane.b32.xlu0 %v1493, 64
        %v1845 = vpop.permute.xlu0 %1844
        %1846 = vrot.lane.b32.xlu0 %v1503, 64
        %v1847 = vpop.permute.xlu0 %1846
        %1848 = vrot.lane.b32.xlu0 %v1517, 64
        %v1849 = vpop.permute.xlu0 %1848
        %1850 = vrot.lane.b32.xlu0 %v1527, 64
        %v1851 = vpop.permute.xlu0 %1850
        %1852 = vrot.lane.b32.xlu0 %v1541, 64
        %v1853 = vpop.permute.xlu0 %1852
        %1854 = vrot.lane.b32.xlu0 %v1551, 64
        %v1855 = vpop.permute.xlu0 %1854
        %1856 = vrot.lane.b32.xlu0 %v1565, 64
        %v1857 = vpop.permute.xlu0 %1856
        %1858 = vrot.lane.b32.xlu0 %v1575, 64
        %v1859 = vpop.permute.xlu0 %1858
        %1860 = vrot.lane.b32.xlu0 %v1589, 64
        %v1861 = vpop.permute.xlu0 %1860
        %1862 = vrot.lane.b32.xlu0 %v1599, 64
        %v1863 = vpop.permute.xlu0 %1862
        %1864 = vrot.lane.b32.xlu0 %v1613, 64
        %v1865 = vpop.permute.xlu0 %1864
        %1866 = vrot.lane.b32.xlu0 %v1623, 64
        %v1867 = vpop.permute.xlu0 %1866
        %1868 = vrot.lane.b32.xlu0 %v1637, 64
        %v1869 = vpop.permute.xlu0 %1868
        %1870 = vrot.lane.b32.xlu0 %v1647, 64
        %v1871 = vpop.permute.xlu0 %1870
        %1872 = vrot.lane.b32.xlu0 %v1661, 64
        %v1873 = vpop.permute.xlu0 %1872
        %1874 = vrot.lane.b32.xlu0 %v1671, 64
        %v1875 = vpop.permute.xlu0 %1874
        %1876 = vrot.lane.b32.xlu0 %v1685, 64
        %v1877 = vpop.permute.xlu0 %1876
        %1878 = vrot.lane.b32.xlu0 %v1695, 64
        %v1879 = vpop.permute.xlu0 %1878
        %1880 = vrot.lane.b32.xlu0 %v1709, 64
        %v1881 = vpop.permute.xlu0 %1880
        %1882 = vrot.lane.b32.xlu0 %v1719, 64
        %v1883 = vpop.permute.xlu0 %1882
        %1884 = vrot.lane.b32.xlu0 %v1733, 64
        %v1885 = vpop.permute.xlu0 %1884
        %1886 = vrot.lane.b32.xlu0 %v1743, 64
        %v1887 = vpop.permute.xlu0 %1886
        %1888 = vrot.lane.b32.xlu0 %v1757, 64
        %v1889 = vpop.permute.xlu0 %1888
        %1890 = vrot.lane.b32.xlu0 %v1767, 64
        %v1891 = vpop.permute.xlu0 %1890
        %1892 = vrot.lane.b32.xlu0 %v1781, 64
        %v1893 = vpop.permute.xlu0 %1892
        %1894 = vrot.lane.b32.xlu0 %v1791, 64
        %v1895 = vpop.permute.xlu0 %1894
        %1896 = vrot.lane.b32.xlu0 %v1805, 64
        %v1897 = vpop.permute.xlu0 %1896
        %1898 = vrot.lane.b32.xlu0 %v1815, 64
        %v1899 = vpop.permute.xlu0 %1898
        %1900 = vrot.lane.b32.xlu0 %v1829, 64
        %v1901 = vpop.permute.xlu0 %1900
        %1902 = vrot.lane.b32.xlu0 %v1839, 64
        %v1903 = vpop.permute.xlu0 %1902
        %vm1936 = vcmask 1043968
        %1937 = vst.msk [vmem:[#allocation3] sm:$0xf] %vm1936, %v1841
        %1938 = vst.msk [vmem:[#allocation3 + $0x14] sm:$0xf] %vm1936, %v1843
        %1939 = vst.msk [vmem:[#allocation3 + $0x28] sm:$0xf] %vm1936, %v1845
        %1940 = vst.msk [vmem:[#allocation3 + $0x3c] sm:$0xf] %vm1936, %v1847
        %1941 = vst.msk [vmem:[#allocation3 + $0x50] sm:$0xf] %vm1936, %v1849
        %1942 = vst.msk [vmem:[#allocation3 + $0x64] sm:$0xf] %vm1936, %v1851
        %1943 = vst.msk [vmem:[#allocation3 + $0x78] sm:$0xf] %vm1936, %v1853
        %1944 = vst.msk [vmem:[#allocation3 + $0x8c] sm:$0xf] %vm1936, %v1855
        %1945 = vst.msk [vmem:[#allocation3 + $0xa0] sm:$0xf] %vm1936, %v1857
        %1946 = vst.msk [vmem:[#allocation3 + $0xb4] sm:$0xf] %vm1936, %v1859
        %1947 = vst.msk [vmem:[#allocation3 + $0xc8] sm:$0xf] %vm1936, %v1861
        %1948 = vst.msk [vmem:[#allocation3 + $0xdc] sm:$0xf] %vm1936, %v1863
        %1949 = vst.msk [vmem:[#allocation3 + $0xf0] sm:$0xf] %vm1936, %v1865
        %1950 = vst.msk [vmem:[#allocation3 + $0x104] sm:$0xf] %vm1936, %v1867
        %1951 = vst.msk [vmem:[#allocation3 + $0x118] sm:$0xf] %vm1936, %v1869
        %1952 = vst.msk [vmem:[#allocation3 + $0x12c] sm:$0xf] %vm1936, %v1871
        %1953 = vst.msk [vmem:[#allocation3 + $0x140] sm:$0xf] %vm1936, %v1873
        %1954 = vst.msk [vmem:[#allocation3 + $0x154] sm:$0xf] %vm1936, %v1875
        %1955 = vst.msk [vmem:[#allocation3 + $0x168] sm:$0xf] %vm1936, %v1877
        %1956 = vst.msk [vmem:[#allocation3 + $0x17c] sm:$0xf] %vm1936, %v1879
        %1957 = vst.msk [vmem:[#allocation3 + $0x190] sm:$0xf] %vm1936, %v1881
        %1958 = vst.msk [vmem:[#allocation3 + $0x1a4] sm:$0xf] %vm1936, %v1883
        %1959 = vst.msk [vmem:[#allocation3 + $0x1b8] sm:$0xf] %vm1936, %v1885
        %1960 = vst.msk [vmem:[#allocation3 + $0x1cc] sm:$0xf] %vm1936, %v1887
        %1961 = vst.msk [vmem:[#allocation3 + $0x1e0] sm:$0xf] %vm1936, %v1889
        %1962 = vst.msk [vmem:[#allocation3 + $0x1f4] sm:$0xf] %vm1936, %v1891
        %1963 = vst.msk [vmem:[#allocation3 + $0x208] sm:$0xf] %vm1936, %v1893
        %1964 = vst.msk [vmem:[#allocation3 + $0x21c] sm:$0xf] %vm1936, %v1895
        %1965 = vst.msk [vmem:[#allocation3 + $0x230] sm:$0xf] %vm1936, %v1897
        %1966 = vst.msk [vmem:[#allocation3 + $0x244] sm:$0xf] %vm1936, %v1899
        %1967 = vst.msk [vmem:[#allocation3 + $0x258] sm:$0xf] %vm1936, %v1901
        %1968 = vst.msk [vmem:[#allocation3 + $0x26c] sm:$0xf] %vm1936, %v1903
        %v1969 = vld [vmem:[#allocation2] sm:$0xe]
        %v1970 = vld [vmem:[#allocation2 + $0x4] sm:$0xf]
        %v1971 = vld [vmem:[#allocation2 + $0x8] sm:$0x1]
        %v1972 = vld [vmem:[#allocation2 + $0xc] sm:$0xe]
        %v1973 = vld [vmem:[#allocation2 + $0x10] sm:$0xf]
        %v1974 = vld [vmem:[#allocation2 + $0x14] sm:$0x1]
        %v1975 = vld [vmem:[#allocation2 + $0x18] sm:$0xe]
        %v1976 = vld [vmem:[#allocation2 + $0x1c] sm:$0xf]
        %v1977 = vld [vmem:[#allocation2 + $0x20] sm:$0x1]
        %v1978 = vld [vmem:[#allocation2 + $0x24] sm:$0xe]
        %v1979 = vld [vmem:[#allocation2 + $0x28] sm:$0xf]
        %v1980 = vld [vmem:[#allocation2 + $0x2c] sm:$0x1]
        %v1981 = vld [vmem:[#allocation2 + $0x30] sm:$0xe]
        %v1982 = vld [vmem:[#allocation2 + $0x34] sm:$0xf]
        %v1983 = vld [vmem:[#allocation2 + $0x38] sm:$0x1]
        %v1984 = vld [vmem:[#allocation2 + $0x3c] sm:$0xe]
        %v1985 = vld [vmem:[#allocation2 + $0x40] sm:$0xf]
        %v1986 = vld [vmem:[#allocation2 + $0x44] sm:$0x1]
        %v1987 = vld [vmem:[#allocation2 + $0x48] sm:$0xe]
        %v1988 = vld [vmem:[#allocation2 + $0x4c] sm:$0xf]
        %v1989 = vld [vmem:[#allocation2 + $0x50] sm:$0x1]
        %v1990 = vld [vmem:[#allocation2 + $0x54] sm:$0xe]
        %v1991 = vld [vmem:[#allocation2 + $0x58] sm:$0xf]
        %v1992 = vld [vmem:[#allocation2 + $0x5c] sm:$0x1]
        %v1993 = vld [vmem:[#allocation2 + $0x60] sm:$0xe]
        %v1994 = vld [vmem:[#allocation2 + $0x64] sm:$0xf]
        %v1995 = vld [vmem:[#allocation2 + $0x68] sm:$0x1]
        %v1996 = vld [vmem:[#allocation2 + $0x6c] sm:$0xe]
        %v1997 = vld [vmem:[#allocation2 + $0x70] sm:$0xf]
        %v1998 = vld [vmem:[#allocation2 + $0x74] sm:$0x1]
        %v1999 = vld [vmem:[#allocation2 + $0x78] sm:$0xe]
        %v2000 = vld [vmem:[#allocation2 + $0x7c] sm:$0xf]
        %v2001 = vld [vmem:[#allocation2 + $0x80] sm:$0x1]
        %v2002 = vld [vmem:[#allocation2 + $0x84] sm:$0xe]
        %v2003 = vld [vmem:[#allocation2 + $0x88] sm:$0xf]
        %v2004 = vld [vmem:[#allocation2 + $0x8c] sm:$0x1]
        %v2005 = vld [vmem:[#allocation2 + $0x90] sm:$0xe]
        %v2006 = vld [vmem:[#allocation2 + $0x94] sm:$0xf]
        %v2007 = vld [vmem:[#allocation2 + $0x98] sm:$0x1]
        %v2008 = vld [vmem:[#allocation2 + $0x9c] sm:$0xe]
        %v2009 = vld [vmem:[#allocation2 + $0xa0] sm:$0xf]
        %v2010 = vld [vmem:[#allocation2 + $0xa4] sm:$0x1]
        %v2011 = vld [vmem:[#allocation2 + $0xa8] sm:$0xe]
        %v2012 = vld [vmem:[#allocation2 + $0xac] sm:$0xf]
        %v2013 = vld [vmem:[#allocation2 + $0xb0] sm:$0x1]
        %v2014 = vld [vmem:[#allocation2 + $0xb4] sm:$0xe]
        %v2015 = vld [vmem:[#allocation2 + $0xb8] sm:$0xf]
        %v2016 = vld [vmem:[#allocation2 + $0xbc] sm:$0x1]
        %vm2065 = vcmask 1042432
        %vm2066 = vcmask 1046532
        %vm2067 = vmor %vm2065, %vm2066
        %v2068 = vrot.slane %v1969, 5
        %v2069 = vrot.slane %v2068, 4
        %v2070 = vrot.slane %v1970, 5
        %v2071 = vsel %vm2067, %v2069, %v2070
        %v2072 = vrot.slane %v2070, 4
        %v2073 = vrot.slane %v1971, 5
        %v2074 = vsel %vm2067, %v2072, %v2073
        %v2075 = vrot.slane %v1972, 5
        %v2076 = vrot.slane %v2075, 4
        %v2077 = vrot.slane %v1973, 5
        %v2078 = vsel %vm2067, %v2076, %v2077
        %v2079 = vrot.slane %v2077, 4
        %v2080 = vrot.slane %v1974, 5
        %v2081 = vsel %vm2067, %v2079, %v2080
        %v2082 = vrot.slane %v1975, 5
        %v2083 = vrot.slane %v2082, 4
        %v2084 = vrot.slane %v1976, 5
        %v2085 = vsel %vm2067, %v2083, %v2084
        %v2086 = vrot.slane %v2084, 4
        %v2087 = vrot.slane %v1977, 5
        %v2088 = vsel %vm2067, %v2086, %v2087
        %v2089 = vrot.slane %v1978, 5
        %v2090 = vrot.slane %v2089, 4
        %v2091 = vrot.slane %v1979, 5
        %v2092 = vsel %vm2067, %v2090, %v2091
        %v2093 = vrot.slane %v2091, 4
        %v2094 = vrot.slane %v1980, 5
        %v2095 = vsel %vm2067, %v2093, %v2094
        %v2096 = vrot.slane %v1981, 5
        %v2097 = vrot.slane %v2096, 4
        %v2098 = vrot.slane %v1982, 5
        %v2099 = vsel %vm2067, %v2097, %v2098
        %v2100 = vrot.slane %v2098, 4
        %v2101 = vrot.slane %v1983, 5
        %v2102 = vsel %vm2067, %v2100, %v2101
        %v2103 = vrot.slane %v1984, 5
        %v2104 = vrot.slane %v2103, 4
        %v2105 = vrot.slane %v1985, 5
        %v2106 = vsel %vm2067, %v2104, %v2105
        %v2107 = vrot.slane %v2105, 4
        %v2108 = vrot.slane %v1986, 5
        %v2109 = vsel %vm2067, %v2107, %v2108
        %v2110 = vrot.slane %v1987, 5
        %v2111 = vrot.slane %v2110, 4
        %v2112 = vrot.slane %v1988, 5
        %v2113 = vsel %vm2067, %v2111, %v2112
        %v2114 = vrot.slane %v2112, 4
        %v2115 = vrot.slane %v1989, 5
        %v2116 = vsel %vm2067, %v2114, %v2115
        %v2117 = vrot.slane %v1990, 5
        %v2118 = vrot.slane %v2117, 4
        %v2119 = vrot.slane %v1991, 5
        %v2120 = vsel %vm2067, %v2118, %v2119
        %v2121 = vrot.slane %v2119, 4
        %v2122 = vrot.slane %v1992, 5
        %v2123 = vsel %vm2067, %v2121, %v2122
        %v2124 = vrot.slane %v1993, 5
        %v2125 = vrot.slane %v2124, 4
        %v2126 = vrot.slane %v1994, 5
        %v2127 = vsel %vm2067, %v2125, %v2126
        %v2128 = vrot.slane %v2126, 4
        %v2129 = vrot.slane %v1995, 5
        %v2130 = vsel %vm2067, %v2128, %v2129
        %v2131 = vrot.slane %v1996, 5
        %v2132 = vrot.slane %v2131, 4
        %v2133 = vrot.slane %v1997, 5
        %v2134 = vsel %vm2067, %v2132, %v2133
        %v2135 = vrot.slane %v2133, 4
        %v2136 = vrot.slane %v1998, 5
        %v2137 = vsel %vm2067, %v2135, %v2136
        %v2138 = vrot.slane %v1999, 5
        %v2139 = vrot.slane %v2138, 4
        %v2140 = vrot.slane %v2000, 5
        %v2141 = vsel %vm2067, %v2139, %v2140
        %v2142 = vrot.slane %v2140, 4
        %v2143 = vrot.slane %v2001, 5
        %v2144 = vsel %vm2067, %v2142, %v2143
        %v2145 = vrot.slane %v2002, 5
        %v2146 = vrot.slane %v2145, 4
        %v2147 = vrot.slane %v2003, 5
        %v2148 = vsel %vm2067, %v2146, %v2147
        %v2149 = vrot.slane %v2147, 4
        %v2150 = vrot.slane %v2004, 5
        %v2151 = vsel %vm2067, %v2149, %v2150
        %v2152 = vrot.slane %v2005, 5
        %v2153 = vrot.slane %v2152, 4
        %v2154 = vrot.slane %v2006, 5
        %v2155 = vsel %vm2067, %v2153, %v2154
        %v2156 = vrot.slane %v2154, 4
        %v2157 = vrot.slane %v2007, 5
        %v2158 = vsel %vm2067, %v2156, %v2157
        %v2159 = vrot.slane %v2008, 5
        %v2160 = vrot.slane %v2159, 4
        %v2161 = vrot.slane %v2009, 5
        %v2162 = vsel %vm2067, %v2160, %v2161
        %v2163 = vrot.slane %v2161, 4
        %v2164 = vrot.slane %v2010, 5
        %v2165 = vsel %vm2067, %v2163, %v2164
        %v2166 = vrot.slane %v2011, 5
        %v2167 = vrot.slane %v2166, 4
        %v2168 = vrot.slane %v2012, 5
        %v2169 = vsel %vm2067, %v2167, %v2168
        %v2170 = vrot.slane %v2168, 4
        %v2171 = vrot.slane %v2013, 5
        %v2172 = vsel %vm2067, %v2170, %v2171
        %v2173 = vrot.slane %v2014, 5
        %v2174 = vrot.slane %v2173, 4
        %v2175 = vrot.slane %v2015, 5
        %v2176 = vsel %vm2067, %v2174, %v2175
        %v2177 = vrot.slane %v2175, 4
        %v2178 = vrot.slane %v2016, 5
        %v2179 = vsel %vm2067, %v2177, %v2178
        %2212 = vst.msk [vmem:[#allocation3 + $0x4] sm:$0xf] %vm812, %v2071
        %2213 = vst.msk [vmem:[#allocation3 + $0x18] sm:$0xf] %vm812, %v2074
        %2214 = vst.msk [vmem:[#allocation3 + $0x2c] sm:$0xf] %vm812, %v2078
        %2215 = vst.msk [vmem:[#allocation3 + $0x40] sm:$0xf] %vm812, %v2081
        %2216 = vst.msk [vmem:[#allocation3 + $0x54] sm:$0xf] %vm812, %v2085
        %2217 = vst.msk [vmem:[#allocation3 + $0x68] sm:$0xf] %vm812, %v2088
        %2218 = vst.msk [vmem:[#allocation3 + $0x7c] sm:$0xf] %vm812, %v2092
        %2219 = vst.msk [vmem:[#allocation3 + $0x90] sm:$0xf] %vm812, %v2095
        %2220 = vst.msk [vmem:[#allocation3 + $0xa4] sm:$0xf] %vm812, %v2099
        %2221 = vst.msk [vmem:[#allocation3 + $0xb8] sm:$0xf] %vm812, %v2102
        %2222 = vst.msk [vmem:[#allocation3 + $0xcc] sm:$0xf] %vm812, %v2106
        %2223 = vst.msk [vmem:[#allocation3 + $0xe0] sm:$0xf] %vm812, %v2109
        %2224 = vst.msk [vmem:[#allocation3 + $0xf4] sm:$0xf] %vm812, %v2113
        %2225 = vst.msk [vmem:[#allocation3 + $0x108] sm:$0xf] %vm812, %v2116
        %2226 = vst.msk [vmem:[#allocation3 + $0x11c] sm:$0xf] %vm812, %v2120
        %2227 = vst.msk [vmem:[#allocation3 + $0x130] sm:$0xf] %vm812, %v2123
        %2228 = vst.msk [vmem:[#allocation3 + $0x144] sm:$0xf] %vm812, %v2127
        %2229 = vst.msk [vmem:[#allocation3 + $0x158] sm:$0xf] %vm812, %v2130
        %2230 = vst.msk [vmem:[#allocation3 + $0x16c] sm:$0xf] %vm812, %v2134
        %2231 = vst.msk [vmem:[#allocation3 + $0x180] sm:$0xf] %vm812, %v2137
        %2232 = vst.msk [vmem:[#allocation3 + $0x194] sm:$0xf] %vm812, %v2141
        %2233 = vst.msk [vmem:[#allocation3 + $0x1a8] sm:$0xf] %vm812, %v2144
        %2234 = vst.msk [vmem:[#allocation3 + $0x1bc] sm:$0xf] %vm812, %v2148
        %2235 = vst.msk [vmem:[#allocation3 + $0x1d0] sm:$0xf] %vm812, %v2151
        %2236 = vst.msk [vmem:[#allocation3 + $0x1e4] sm:$0xf] %vm812, %v2155
        %2237 = vst.msk [vmem:[#allocation3 + $0x1f8] sm:$0xf] %vm812, %v2158
        %2238 = vst.msk [vmem:[#allocation3 + $0x20c] sm:$0xf] %vm812, %v2162
        %2239 = vst.msk [vmem:[#allocation3 + $0x220] sm:$0xf] %vm812, %v2165
        %2240 = vst.msk [vmem:[#allocation3 + $0x234] sm:$0xf] %vm812, %v2169
        %2241 = vst.msk [vmem:[#allocation3 + $0x248] sm:$0xf] %vm812, %v2172
        %2242 = vst.msk [vmem:[#allocation3 + $0x25c] sm:$0xf] %vm812, %v2176
        %2243 = vst.msk [vmem:[#allocation3 + $0x270] sm:$0xf] %vm812, %v2179
        %v2244 = vld [vmem:[%s1223] sm:$0xf]
        %v2245 = vld [vmem:[%s1223 + $0x4] sm:$0xf]
        %v2246 = vld [vmem:[%s1223 + $0xc] sm:$0xf]
        %v2247 = vld [vmem:[%s1223 + $0x10] sm:$0xf]
        %v2248 = vld [vmem:[%s1223 + $0x18] sm:$0xf]
        %v2249 = vld [vmem:[%s1223 + $0x1c] sm:$0xf]
        %v2250 = vld [vmem:[%s1223 + $0x24] sm:$0xf]
        %v2251 = vld [vmem:[%s1223 + $0x28] sm:$0xf]
        %v2252 = vld [vmem:[%s1223 + $0x30] sm:$0xf]
        %v2253 = vld [vmem:[%s1223 + $0x34] sm:$0xf]
        %v2254 = vld [vmem:[%s1223 + $0x3c] sm:$0xf]
        %v2255 = vld [vmem:[%s1223 + $0x40] sm:$0xf]
        %v2256 = vld [vmem:[%s1223 + $0x48] sm:$0xf]
        %v2257 = vld [vmem:[%s1223 + $0x4c] sm:$0xf]
        %v2258 = vld [vmem:[%s1223 + $0x54] sm:$0xf]
        %v2259 = vld [vmem:[%s1223 + $0x58] sm:$0xf]
        %v2260 = vld [vmem:[%s1223 + $0x60] sm:$0xf]
        %v2261 = vld [vmem:[%s1223 + $0x64] sm:$0xf]
        %v2262 = vld [vmem:[%s1223 + $0x6c] sm:$0xf]
        %v2263 = vld [vmem:[%s1223 + $0x70] sm:$0xf]
        %v2264 = vld [vmem:[%s1223 + $0x78] sm:$0xf]
        %v2265 = vld [vmem:[%s1223 + $0x7c] sm:$0xf]
        %v2266 = vld [vmem:[%s1223 + $0x84] sm:$0xf]
        %v2267 = vld [vmem:[%s1223 + $0x88] sm:$0xf]
        %v2268 = vld [vmem:[%s1223 + $0x90] sm:$0xf]
        %v2269 = vld [vmem:[%s1223 + $0x94] sm:$0xf]
        %v2270 = vld [vmem:[%s1223 + $0x9c] sm:$0xf]
        %v2271 = vld [vmem:[%s1223 + $0xa0] sm:$0xf]
        %v2272 = vld [vmem:[%s1223 + $0xa8] sm:$0xf]
        %v2273 = vld [vmem:[%s1223 + $0xac] sm:$0xf]
        %v2274 = vld [vmem:[%s1223 + $0xb4] sm:$0xf]
        %v2275 = vld [vmem:[%s1223 + $0xb8] sm:$0xf]
        %2308 = vrot.lane.b32.xlu0 %v2244, 64
        %v2309 = vpop.permute.xlu0 %2308
        %2310 = vrot.lane.b32.xlu0 %v2245, 64
        %v2311 = vpop.permute.xlu0 %2310
        %2312 = vrot.lane.b32.xlu0 %v2246, 64
        %v2313 = vpop.permute.xlu0 %2312
        %2314 = vrot.lane.b32.xlu0 %v2247, 64
        %v2315 = vpop.permute.xlu0 %2314
        %2316 = vrot.lane.b32.xlu0 %v2248, 64
        %v2317 = vpop.permute.xlu0 %2316
        %2318 = vrot.lane.b32.xlu0 %v2249, 64
        %v2319 = vpop.permute.xlu0 %2318
        %2320 = vrot.lane.b32.xlu0 %v2250, 64
        %v2321 = vpop.permute.xlu0 %2320
        %2322 = vrot.lane.b32.xlu0 %v2251, 64
        %v2323 = vpop.permute.xlu0 %2322
        %2324 = vrot.lane.b32.xlu0 %v2252, 64
        %v2325 = vpop.permute.xlu0 %2324
        %2326 = vrot.lane.b32.xlu0 %v2253, 64
        %v2327 = vpop.permute.xlu0 %2326
        %2328 = vrot.lane.b32.xlu0 %v2254, 64
        %v2329 = vpop.permute.xlu0 %2328
        %2330 = vrot.lane.b32.xlu0 %v2255, 64
        %v2331 = vpop.permute.xlu0 %2330
        %2332 = vrot.lane.b32.xlu0 %v2256, 64
        %v2333 = vpop.permute.xlu0 %2332
        %2334 = vrot.lane.b32.xlu0 %v2257, 64
        %v2335 = vpop.permute.xlu0 %2334
        %2336 = vrot.lane.b32.xlu0 %v2258, 64
        %v2337 = vpop.permute.xlu0 %2336
        %2338 = vrot.lane.b32.xlu0 %v2259, 64
        %v2339 = vpop.permute.xlu0 %2338
        %2340 = vrot.lane.b32.xlu0 %v2260, 64
        %v2341 = vpop.permute.xlu0 %2340
        %2342 = vrot.lane.b32.xlu0 %v2261, 64
        %v2343 = vpop.permute.xlu0 %2342
        %2344 = vrot.lane.b32.xlu0 %v2262, 64
        %v2345 = vpop.permute.xlu0 %2344
        %2346 = vrot.lane.b32.xlu0 %v2263, 64
        %v2347 = vpop.permute.xlu0 %2346
        %2348 = vrot.lane.b32.xlu0 %v2264, 64
        %v2349 = vpop.permute.xlu0 %2348
        %2350 = vrot.lane.b32.xlu0 %v2265, 64
        %v2351 = vpop.permute.xlu0 %2350
        %2352 = vrot.lane.b32.xlu0 %v2266, 64
        %v2353 = vpop.permute.xlu0 %2352
        %2354 = vrot.lane.b32.xlu0 %v2267, 64
        %v2355 = vpop.permute.xlu0 %2354
        %2356 = vrot.lane.b32.xlu0 %v2268, 64
        %v2357 = vpop.permute.xlu0 %2356
        %2358 = vrot.lane.b32.xlu0 %v2269, 64
        %v2359 = vpop.permute.xlu0 %2358
        %2360 = vrot.lane.b32.xlu0 %v2270, 64
        %v2361 = vpop.permute.xlu0 %2360
        %2362 = vrot.lane.b32.xlu0 %v2271, 64
        %v2363 = vpop.permute.xlu0 %2362
        %2364 = vrot.lane.b32.xlu0 %v2272, 64
        %v2365 = vpop.permute.xlu0 %2364
        %2366 = vrot.lane.b32.xlu0 %v2273, 64
        %v2367 = vpop.permute.xlu0 %2366
        %2368 = vrot.lane.b32.xlu0 %v2274, 64
        %v2369 = vpop.permute.xlu0 %2368
        %2370 = vrot.lane.b32.xlu0 %v2275, 64
        %v2371 = vpop.permute.xlu0 %2370
        %2404 = vst.msk [vmem:[#allocation3 + $0x4] sm:$0xf] %vm1936, %v2309
        %2405 = vst.msk [vmem:[#allocation3 + $0x18] sm:$0xf] %vm1936, %v2311
        %2406 = vst.msk [vmem:[#allocation3 + $0x2c] sm:$0xf] %vm1936, %v2313
        %2407 = vst.msk [vmem:[#allocation3 + $0x40] sm:$0xf] %vm1936, %v2315
        %2408 = vst.msk [vmem:[#allocation3 + $0x54] sm:$0xf] %vm1936, %v2317
        %2409 = vst.msk [vmem:[#allocation3 + $0x68] sm:$0xf] %vm1936, %v2319
        %2410 = vst.msk [vmem:[#allocation3 + $0x7c] sm:$0xf] %vm1936, %v2321
        %2411 = vst.msk [vmem:[#allocation3 + $0x90] sm:$0xf] %vm1936, %v2323
        %2412 = vst.msk [vmem:[#allocation3 + $0xa4] sm:$0xf] %vm1936, %v2325
        %2413 = vst.msk [vmem:[#allocation3 + $0xb8] sm:$0xf] %vm1936, %v2327
        %2414 = vst.msk [vmem:[#allocation3 + $0xcc] sm:$0xf] %vm1936, %v2329
        %2415 = vst.msk [vmem:[#allocation3 + $0xe0] sm:$0xf] %vm1936, %v2331
        %2416 = vst.msk [vmem:[#allocation3 + $0xf4] sm:$0xf] %vm1936, %v2333
        %2417 = vst.msk [vmem:[#allocation3 + $0x108] sm:$0xf] %vm1936, %v2335
        %2418 = vst.msk [vmem:[#allocation3 + $0x11c] sm:$0xf] %vm1936, %v2337
        %2419 = vst.msk [vmem:[#allocation3 + $0x130] sm:$0xf] %vm1936, %v2339
        %2420 = vst.msk [vmem:[#allocation3 + $0x144] sm:$0xf] %vm1936, %v2341
        %2421 = vst.msk [vmem:[#allocation3 + $0x158] sm:$0xf] %vm1936, %v2343
        %2422 = vst.msk [vmem:[#allocation3 + $0x16c] sm:$0xf] %vm1936, %v2345
        %2423 = vst.msk [vmem:[#allocation3 + $0x180] sm:$0xf] %vm1936, %v2347
        %2424 = vst.msk [vmem:[#allocation3 + $0x194] sm:$0xf] %vm1936, %v2349
        %2425 = vst.msk [vmem:[#allocation3 + $0x1a8] sm:$0xf] %vm1936, %v2351
        %2426 = vst.msk [vmem:[#allocation3 + $0x1bc] sm:$0xf] %vm1936, %v2353
        %2427 = vst.msk [vmem:[#allocation3 + $0x1d0] sm:$0xf] %vm1936, %v2355
        %2428 = vst.msk [vmem:[#allocation3 + $0x1e4] sm:$0xf] %vm1936, %v2357
        %2429 = vst.msk [vmem:[#allocation3 + $0x1f8] sm:$0xf] %vm1936, %v2359
        %2430 = vst.msk [vmem:[#allocation3 + $0x20c] sm:$0xf] %vm1936, %v2361
        %2431 = vst.msk [vmem:[#allocation3 + $0x220] sm:$0xf] %vm1936, %v2363
        %2432 = vst.msk [vmem:[#allocation3 + $0x234] sm:$0xf] %vm1936, %v2365
        %2433 = vst.msk [vmem:[#allocation3 + $0x248] sm:$0xf] %vm1936, %v2367
        %2434 = vst.msk [vmem:[#allocation3 + $0x25c] sm:$0xf] %vm1936, %v2369
        %2435 = vst.msk [vmem:[#allocation3 + $0x270] sm:$0xf] %vm1936, %v2371
        %v2436 = vld [vmem:[%s1223] sm:$0xf]
        %v2437 = vld [vmem:[%s1223 + $0x4] sm:$0xf]
        %v2438 = vld [vmem:[%s1223 + $0x8] sm:$0x1]
        %v2439 = vld [vmem:[%s1223 + $0xc] sm:$0xf]
        %v2440 = vld [vmem:[%s1223 + $0x10] sm:$0xf]
        %v2441 = vld [vmem:[%s1223 + $0x14] sm:$0x1]
        %v2442 = vld [vmem:[%s1223 + $0x18] sm:$0xf]
        %v2443 = vld [vmem:[%s1223 + $0x1c] sm:$0xf]
        %v2444 = vld [vmem:[%s1223 + $0x20] sm:$0x1]
        %v2445 = vld [vmem:[%s1223 + $0x24] sm:$0xf]
        %v2446 = vld [vmem:[%s1223 + $0x28] sm:$0xf]
        %v2447 = vld [vmem:[%s1223 + $0x2c] sm:$0x1]
        %v2448 = vld [vmem:[%s1223 + $0x30] sm:$0xf]
        %v2449 = vld [vmem:[%s1223 + $0x34] sm:$0xf]
        %v2450 = vld [vmem:[%s1223 + $0x38] sm:$0x1]
        %v2451 = vld [vmem:[%s1223 + $0x3c] sm:$0xf]
        %v2452 = vld [vmem:[%s1223 + $0x40] sm:$0xf]
        %v2453 = vld [vmem:[%s1223 + $0x44] sm:$0x1]
        %v2454 = vld [vmem:[%s1223 + $0x48] sm:$0xf]
        %v2455 = vld [vmem:[%s1223 + $0x4c] sm:$0xf]
        %v2456 = vld [vmem:[%s1223 + $0x50] sm:$0x1]
        %v2457 = vld [vmem:[%s1223 + $0x54] sm:$0xf]
        %v2458 = vld [vmem:[%s1223 + $0x58] sm:$0xf]
        %v2459 = vld [vmem:[%s1223 + $0x5c] sm:$0x1]
        %v2460 = vld [vmem:[%s1223 + $0x60] sm:$0xf]
        %v2461 = vld [vmem:[%s1223 + $0x64] sm:$0xf]
        %v2462 = vld [vmem:[%s1223 + $0x68] sm:$0x1]
        %v2463 = vld [vmem:[%s1223 + $0x6c] sm:$0xf]
        %v2464 = vld [vmem:[%s1223 + $0x70] sm:$0xf]
        %v2465 = vld [vmem:[%s1223 + $0x74] sm:$0x1]
        %v2466 = vld [vmem:[%s1223 + $0x78] sm:$0xf]
        %v2467 = vld [vmem:[%s1223 + $0x7c] sm:$0xf]
        %v2468 = vld [vmem:[%s1223 + $0x80] sm:$0x1]
        %v2469 = vld [vmem:[%s1223 + $0x84] sm:$0xf]
        %v2470 = vld [vmem:[%s1223 + $0x88] sm:$0xf]
        %v2471 = vld [vmem:[%s1223 + $0x8c] sm:$0x1]
        %v2472 = vld [vmem:[%s1223 + $0x90] sm:$0xf]
        %v2473 = vld [vmem:[%s1223 + $0x94] sm:$0xf]
        %v2474 = vld [vmem:[%s1223 + $0x98] sm:$0x1]
        %v2475 = vld [vmem:[%s1223 + $0x9c] sm:$0xf]
        %v2476 = vld [vmem:[%s1223 + $0xa0] sm:$0xf]
        %v2477 = vld [vmem:[%s1223 + $0xa4] sm:$0x1]
        %v2478 = vld [vmem:[%s1223 + $0xa8] sm:$0xf]
        %v2479 = vld [vmem:[%s1223 + $0xac] sm:$0xf]
        %v2480 = vld [vmem:[%s1223 + $0xb0] sm:$0x1]
        %v2481 = vld [vmem:[%s1223 + $0xb4] sm:$0xf]
        %v2482 = vld [vmem:[%s1223 + $0xb8] sm:$0xf]
        %v2483 = vld [vmem:[%s1223 + $0xbc] sm:$0x1]
        %v2485 = vshrl.u32 %v2436, 16
        %v2487 = vrot.slane %v2485, 4
        %v2488 = vshll.u32 %v2436, 16
        %v2490 = vrot.slane %v2488, 5
        %v2491 = vor.u32 %v2487, %v2490
        %v2492 = vrot.slane %v2491, 4
        %v2494 = vshll.u32 %v2437, 16
        %v2496 = vrot.slane %v2494, 5
        %v2497 = vsel %vm1455, %v2492, %v2496
        %v2498 = vshrl.u32 %v2437, 16
        %v2500 = vrot.slane %v2498, 4
        %v2501 = vor.u32 %v2500, %v2496
        %v2502 = vrot.slane %v2501, 4
        %v2504 = vshll.u32 %v2438, 16
        %v2506 = vrot.slane %v2504, 5
        %v2507 = vsel %vm1455, %v2502, %v2506
        %v2509 = vshrl.u32 %v2439, 16
        %v2511 = vrot.slane %v2509, 4
        %v2512 = vshll.u32 %v2439, 16
        %v2514 = vrot.slane %v2512, 5
        %v2515 = vor.u32 %v2511, %v2514
        %v2516 = vrot.slane %v2515, 4
        %v2518 = vshll.u32 %v2440, 16
        %v2520 = vrot.slane %v2518, 5
        %v2521 = vsel %vm1455, %v2516, %v2520
        %v2522 = vshrl.u32 %v2440, 16
        %v2524 = vrot.slane %v2522, 4
        %v2525 = vor.u32 %v2524, %v2520
        %v2526 = vrot.slane %v2525, 4
        %v2528 = vshll.u32 %v2441, 16
        %v2530 = vrot.slane %v2528, 5
        %v2531 = vsel %vm1455, %v2526, %v2530
        %v2533 = vshrl.u32 %v2442, 16
        %v2535 = vrot.slane %v2533, 4
        %v2536 = vshll.u32 %v2442, 16
        %v2538 = vrot.slane %v2536, 5
        %v2539 = vor.u32 %v2535, %v2538
        %v2540 = vrot.slane %v2539, 4
        %v2542 = vshll.u32 %v2443, 16
        %v2544 = vrot.slane %v2542, 5
        %v2545 = vsel %vm1455, %v2540, %v2544
        %v2546 = vshrl.u32 %v2443, 16
        %v2548 = vrot.slane %v2546, 4
        %v2549 = vor.u32 %v2548, %v2544
        %v2550 = vrot.slane %v2549, 4
        %v2552 = vshll.u32 %v2444, 16
        %v2554 = vrot.slane %v2552, 5
        %v2555 = vsel %vm1455, %v2550, %v2554
        %v2557 = vshrl.u32 %v2445, 16
        %v2559 = vrot.slane %v2557, 4
        %v2560 = vshll.u32 %v2445, 16
        %v2562 = vrot.slane %v2560, 5
        %v2563 = vor.u32 %v2559, %v2562
        %v2564 = vrot.slane %v2563, 4
        %v2566 = vshll.u32 %v2446, 16
        %v2568 = vrot.slane %v2566, 5
        %v2569 = vsel %vm1455, %v2564, %v2568
        %v2570 = vshrl.u32 %v2446, 16
        %v2572 = vrot.slane %v2570, 4
        %v2573 = vor.u32 %v2572, %v2568
        %v2574 = vrot.slane %v2573, 4
        %v2576 = vshll.u32 %v2447, 16
        %v2578 = vrot.slane %v2576, 5
        %v2579 = vsel %vm1455, %v2574, %v2578
        %v2581 = vshrl.u32 %v2448, 16
        %v2583 = vrot.slane %v2581, 4
        %v2584 = vshll.u32 %v2448, 16
        %v2586 = vrot.slane %v2584, 5
        %v2587 = vor.u32 %v2583, %v2586
        %v2588 = vrot.slane %v2587, 4
        %v2590 = vshll.u32 %v2449, 16
        %v2592 = vrot.slane %v2590, 5
        %v2593 = vsel %vm1455, %v2588, %v2592
        %v2594 = vshrl.u32 %v2449, 16
        %v2596 = vrot.slane %v2594, 4
        %v2597 = vor.u32 %v2596, %v2592
        %v2598 = vrot.slane %v2597, 4
        %v2600 = vshll.u32 %v2450, 16
        %v2602 = vrot.slane %v2600, 5
        %v2603 = vsel %vm1455, %v2598, %v2602
        %v2605 = vshrl.u32 %v2451, 16
        %v2607 = vrot.slane %v2605, 4
        %v2608 = vshll.u32 %v2451, 16
        %v2610 = vrot.slane %v2608, 5
        %v2611 = vor.u32 %v2607, %v2610
        %v2612 = vrot.slane %v2611, 4
        %v2614 = vshll.u32 %v2452, 16
        %v2616 = vrot.slane %v2614, 5
        %v2617 = vsel %vm1455, %v2612, %v2616
        %v2618 = vshrl.u32 %v2452, 16
        %v2620 = vrot.slane %v2618, 4
        %v2621 = vor.u32 %v2620, %v2616
        %v2622 = vrot.slane %v2621, 4
        %v2624 = vshll.u32 %v2453, 16
        %v2626 = vrot.slane %v2624, 5
        %v2627 = vsel %vm1455, %v2622, %v2626
        %v2629 = vshrl.u32 %v2454, 16
        %v2631 = vrot.slane %v2629, 4
        %v2632 = vshll.u32 %v2454, 16
        %v2634 = vrot.slane %v2632, 5
        %v2635 = vor.u32 %v2631, %v2634
        %v2636 = vrot.slane %v2635, 4
        %v2638 = vshll.u32 %v2455, 16
        %v2640 = vrot.slane %v2638, 5
        %v2641 = vsel %vm1455, %v2636, %v2640
        %v2642 = vshrl.u32 %v2455, 16
        %v2644 = vrot.slane %v2642, 4
        %v2645 = vor.u32 %v2644, %v2640
        %v2646 = vrot.slane %v2645, 4
        %v2648 = vshll.u32 %v2456, 16
        %v2650 = vrot.slane %v2648, 5
        %v2651 = vsel %vm1455, %v2646, %v2650
        %v2653 = vshrl.u32 %v2457, 16
        %v2655 = vrot.slane %v2653, 4
        %v2656 = vshll.u32 %v2457, 16
        %v2658 = vrot.slane %v2656, 5
        %v2659 = vor.u32 %v2655, %v2658
        %v2660 = vrot.slane %v2659, 4
        %v2662 = vshll.u32 %v2458, 16
        %v2664 = vrot.slane %v2662, 5
        %v2665 = vsel %vm1455, %v2660, %v2664
        %v2666 = vshrl.u32 %v2458, 16
        %v2668 = vrot.slane %v2666, 4
        %v2669 = vor.u32 %v2668, %v2664
        %v2670 = vrot.slane %v2669, 4
        %v2672 = vshll.u32 %v2459, 16
        %v2674 = vrot.slane %v2672, 5
        %v2675 = vsel %vm1455, %v2670, %v2674
        %v2677 = vshrl.u32 %v2460, 16
        %v2679 = vrot.slane %v2677, 4
        %v2680 = vshll.u32 %v2460, 16
        %v2682 = vrot.slane %v2680, 5
        %v2683 = vor.u32 %v2679, %v2682
        %v2684 = vrot.slane %v2683, 4
        %v2686 = vshll.u32 %v2461, 16
        %v2688 = vrot.slane %v2686, 5
        %v2689 = vsel %vm1455, %v2684, %v2688
        %v2690 = vshrl.u32 %v2461, 16
        %v2692 = vrot.slane %v2690, 4
        %v2693 = vor.u32 %v2692, %v2688
        %v2694 = vrot.slane %v2693, 4
        %v2696 = vshll.u32 %v2462, 16
        %v2698 = vrot.slane %v2696, 5
        %v2699 = vsel %vm1455, %v2694, %v2698
        %v2701 = vshrl.u32 %v2463, 16
        %v2703 = vrot.slane %v2701, 4
        %v2704 = vshll.u32 %v2463, 16
        %v2706 = vrot.slane %v2704, 5
        %v2707 = vor.u32 %v2703, %v2706
        %v2708 = vrot.slane %v2707, 4
        %v2710 = vshll.u32 %v2464, 16
        %v2712 = vrot.slane %v2710, 5
        %v2713 = vsel %vm1455, %v2708, %v2712
        %v2714 = vshrl.u32 %v2464, 16
        %v2716 = vrot.slane %v2714, 4
        %v2717 = vor.u32 %v2716, %v2712
        %v2718 = vrot.slane %v2717, 4
        %v2720 = vshll.u32 %v2465, 16
        %v2722 = vrot.slane %v2720, 5
        %v2723 = vsel %vm1455, %v2718, %v2722
        %v2725 = vshrl.u32 %v2466, 16
        %v2727 = vrot.slane %v2725, 4
        %v2728 = vshll.u32 %v2466, 16
        %v2730 = vrot.slane %v2728, 5
        %v2731 = vor.u32 %v2727, %v2730
        %v2732 = vrot.slane %v2731, 4
        %v2734 = vshll.u32 %v2467, 16
        %v2736 = vrot.slane %v2734, 5
        %v2737 = vsel %vm1455, %v2732, %v2736
        %v2738 = vshrl.u32 %v2467, 16
        %v2740 = vrot.slane %v2738, 4
        %v2741 = vor.u32 %v2740, %v2736
        %v2742 = vrot.slane %v2741, 4
        %v2744 = vshll.u32 %v2468, 16
        %v2746 = vrot.slane %v2744, 5
        %v2747 = vsel %vm1455, %v2742, %v2746
        %v2749 = vshrl.u32 %v2469, 16
        %v2751 = vrot.slane %v2749, 4
        %v2752 = vshll.u32 %v2469, 16
        %v2754 = vrot.slane %v2752, 5
        %v2755 = vor.u32 %v2751, %v2754
        %v2756 = vrot.slane %v2755, 4
        %v2758 = vshll.u32 %v2470, 16
        %v2760 = vrot.slane %v2758, 5
        %v2761 = vsel %vm1455, %v2756, %v2760
        %v2762 = vshrl.u32 %v2470, 16
        %v2764 = vrot.slane %v2762, 4
        %v2765 = vor.u32 %v2764, %v2760
        %v2766 = vrot.slane %v2765, 4
        %v2768 = vshll.u32 %v2471, 16
        %v2770 = vrot.slane %v2768, 5
        %v2771 = vsel %vm1455, %v2766, %v2770
        %v2773 = vshrl.u32 %v2472, 16
        %v2775 = vrot.slane %v2773, 4
        %v2776 = vshll.u32 %v2472, 16
        %v2778 = vrot.slane %v2776, 5
        %v2779 = vor.u32 %v2775, %v2778
        %v2780 = vrot.slane %v2779, 4
        %v2782 = vshll.u32 %v2473, 16
        %v2784 = vrot.slane %v2782, 5
        %v2785 = vsel %vm1455, %v2780, %v2784
        %v2786 = vshrl.u32 %v2473, 16
        %v2788 = vrot.slane %v2786, 4
        %v2789 = vor.u32 %v2788, %v2784
        %v2790 = vrot.slane %v2789, 4
        %v2792 = vshll.u32 %v2474, 16
        %v2794 = vrot.slane %v2792, 5
        %v2795 = vsel %vm1455, %v2790, %v2794
        %v2797 = vshrl.u32 %v2475, 16
        %v2799 = vrot.slane %v2797, 4
        %v2800 = vshll.u32 %v2475, 16
        %v2802 = vrot.slane %v2800, 5
        %v2803 = vor.u32 %v2799, %v2802
        %v2804 = vrot.slane %v2803, 4
        %v2806 = vshll.u32 %v2476, 16
        %v2808 = vrot.slane %v2806, 5
        %v2809 = vsel %vm1455, %v2804, %v2808
        %v2810 = vshrl.u32 %v2476, 16
        %v2812 = vrot.slane %v2810, 4
        %v2813 = vor.u32 %v2812, %v2808
        %v2814 = vrot.slane %v2813, 4
        %v2816 = vshll.u32 %v2477, 16
        %v2818 = vrot.slane %v2816, 5
        %v2819 = vsel %vm1455, %v2814, %v2818
        %v2821 = vshrl.u32 %v2478, 16
        %v2823 = vrot.slane %v2821, 4
        %v2824 = vshll.u32 %v2478, 16
        %v2826 = vrot.slane %v2824, 5
        %v2827 = vor.u32 %v2823, %v2826
        %v2828 = vrot.slane %v2827, 4
        %v2830 = vshll.u32 %v2479, 16
        %v2832 = vrot.slane %v2830, 5
        %v2833 = vsel %vm1455, %v2828, %v2832
        %v2834 = vshrl.u32 %v2479, 16
        %v2836 = vrot.slane %v2834, 4
        %v2837 = vor.u32 %v2836, %v2832
        %v2838 = vrot.slane %v2837, 4
        %v2840 = vshll.u32 %v2480, 16
        %v2842 = vrot.slane %v2840, 5
        %v2843 = vsel %vm1455, %v2838, %v2842
        %v2845 = vshrl.u32 %v2481, 16
        %v2847 = vrot.slane %v2845, 4
        %v2848 = vshll.u32 %v2481, 16
        %v2850 = vrot.slane %v2848, 5
        %v2851 = vor.u32 %v2847, %v2850
        %v2852 = vrot.slane %v2851, 4
        %v2854 = vshll.u32 %v2482, 16
        %v2856 = vrot.slane %v2854, 5
        %v2857 = vsel %vm1455, %v2852, %v2856
        %v2858 = vshrl.u32 %v2482, 16
        %v2860 = vrot.slane %v2858, 4
        %v2861 = vor.u32 %v2860, %v2856
        %v2862 = vrot.slane %v2861, 4
        %v2864 = vshll.u32 %v2483, 16
        %v2866 = vrot.slane %v2864, 5
        %v2867 = vsel %vm1455, %v2862, %v2866
        %2900 = vst.msk [vmem:[#allocation3 + $0x8] sm:$0xf] %vm812, %v2497
        %2901 = vst.msk [vmem:[#allocation3 + $0x1c] sm:$0xf] %vm812, %v2507
        %2902 = vst.msk [vmem:[#allocation3 + $0x30] sm:$0xf] %vm812, %v2521
        %2903 = vst.msk [vmem:[#allocation3 + $0x44] sm:$0xf] %vm812, %v2531
        %2904 = vst.msk [vmem:[#allocation3 + $0x58] sm:$0xf] %vm812, %v2545
        %2905 = vst.msk [vmem:[#allocation3 + $0x6c] sm:$0xf] %vm812, %v2555
        %2906 = vst.msk [vmem:[#allocation3 + $0x80] sm:$0xf] %vm812, %v2569
        %2907 = vst.msk [vmem:[#allocation3 + $0x94] sm:$0xf] %vm812, %v2579
        %2908 = vst.msk [vmem:[#allocation3 + $0xa8] sm:$0xf] %vm812, %v2593
        %2909 = vst.msk [vmem:[#allocation3 + $0xbc] sm:$0xf] %vm812, %v2603
        %2910 = vst.msk [vmem:[#allocation3 + $0xd0] sm:$0xf] %vm812, %v2617
        %2911 = vst.msk [vmem:[#allocation3 + $0xe4] sm:$0xf] %vm812, %v2627
        %2912 = vst.msk [vmem:[#allocation3 + $0xf8] sm:$0xf] %vm812, %v2641
        %2913 = vst.msk [vmem:[#allocation3 + $0x10c] sm:$0xf] %vm812, %v2651
        %2914 = vst.msk [vmem:[#allocation3 + $0x120] sm:$0xf] %vm812, %v2665
        %2915 = vst.msk [vmem:[#allocation3 + $0x134] sm:$0xf] %vm812, %v2675
        %2916 = vst.msk [vmem:[#allocation3 + $0x148] sm:$0xf] %vm812, %v2689
        %2917 = vst.msk [vmem:[#allocation3 + $0x15c] sm:$0xf] %vm812, %v2699
        %2918 = vst.msk [vmem:[#allocation3 + $0x170] sm:$0xf] %vm812, %v2713
        %2919 = vst.msk [vmem:[#allocation3 + $0x184] sm:$0xf] %vm812, %v2723
        %2920 = vst.msk [vmem:[#allocation3 + $0x198] sm:$0xf] %vm812, %v2737
        %2921 = vst.msk [vmem:[#allocation3 + $0x1ac] sm:$0xf] %vm812, %v2747
        %2922 = vst.msk [vmem:[#allocation3 + $0x1c0] sm:$0xf] %vm812, %v2761
        %2923 = vst.msk [vmem:[#allocation3 + $0x1d4] sm:$0xf] %vm812, %v2771
        %2924 = vst.msk [vmem:[#allocation3 + $0x1e8] sm:$0xf] %vm812, %v2785
        %2925 = vst.msk [vmem:[#allocation3 + $0x1fc] sm:$0xf] %vm812, %v2795
        %2926 = vst.msk [vmem:[#allocation3 + $0x210] sm:$0xf] %vm812, %v2809
        %2927 = vst.msk [vmem:[#allocation3 + $0x224] sm:$0xf] %vm812, %v2819
        %2928 = vst.msk [vmem:[#allocation3 + $0x238] sm:$0xf] %vm812, %v2833
        %2929 = vst.msk [vmem:[#allocation3 + $0x24c] sm:$0xf] %vm812, %v2843
        %2930 = vst.msk [vmem:[#allocation3 + $0x260] sm:$0xf] %vm812, %v2857
        %2931 = vst.msk [vmem:[#allocation3 + $0x274] sm:$0xf] %vm812, %v2867
        %v2932 = vld [vmem:[%s1223] sm:$0xe]
        %v2933 = vld [vmem:[%s1223 + $0x4] sm:$0xf]
        %v2934 = vld [vmem:[%s1223 + $0x8] sm:$0x1]
        %v2935 = vld [vmem:[%s1223 + $0xc] sm:$0xe]
        %v2936 = vld [vmem:[%s1223 + $0x10] sm:$0xf]
        %v2937 = vld [vmem:[%s1223 + $0x14] sm:$0x1]
        %v2938 = vld [vmem:[%s1223 + $0x18] sm:$0xe]
        %v2939 = vld [vmem:[%s1223 + $0x1c] sm:$0xf]
        %v2940 = vld [vmem:[%s1223 + $0x20] sm:$0x1]
        %v2941 = vld [vmem:[%s1223 + $0x24] sm:$0xe]
        %v2942 = vld [vmem:[%s1223 + $0x28] sm:$0xf]
        %v2943 = vld [vmem:[%s1223 + $0x2c] sm:$0x1]
        %v2944 = vld [vmem:[%s1223 + $0x30] sm:$0xe]
        %v2945 = vld [vmem:[%s1223 + $0x34] sm:$0xf]
        %v2946 = vld [vmem:[%s1223 + $0x38] sm:$0x1]
        %v2947 = vld [vmem:[%s1223 + $0x3c] sm:$0xe]
        %v2948 = vld [vmem:[%s1223 + $0x40] sm:$0xf]
        %v2949 = vld [vmem:[%s1223 + $0x44] sm:$0x1]
        %v2950 = vld [vmem:[%s1223 + $0x48] sm:$0xe]
        %v2951 = vld [vmem:[%s1223 + $0x4c] sm:$0xf]
        %v2952 = vld [vmem:[%s1223 + $0x50] sm:$0x1]
        %v2953 = vld [vmem:[%s1223 + $0x54] sm:$0xe]
        %v2954 = vld [vmem:[%s1223 + $0x58] sm:$0xf]
        %v2955 = vld [vmem:[%s1223 + $0x5c] sm:$0x1]
        %v2956 = vld [vmem:[%s1223 + $0x60] sm:$0xe]
        %v2957 = vld [vmem:[%s1223 + $0x64] sm:$0xf]
        %v2958 = vld [vmem:[%s1223 + $0x68] sm:$0x1]
        %v2959 = vld [vmem:[%s1223 + $0x6c] sm:$0xe]
        %v2960 = vld [vmem:[%s1223 + $0x70] sm:$0xf]
        %v2961 = vld [vmem:[%s1223 + $0x74] sm:$0x1]
        %v2962 = vld [vmem:[%s1223 + $0x78] sm:$0xe]
        %v2963 = vld [vmem:[%s1223 + $0x7c] sm:$0xf]
        %v2964 = vld [vmem:[%s1223 + $0x80] sm:$0x1]
        %v2965 = vld [vmem:[%s1223 + $0x84] sm:$0xe]
        %v2966 = vld [vmem:[%s1223 + $0x88] sm:$0xf]
        %v2967 = vld [vmem:[%s1223 + $0x8c] sm:$0x1]
        %v2968 = vld [vmem:[%s1223 + $0x90] sm:$0xe]
        %v2969 = vld [vmem:[%s1223 + $0x94] sm:$0xf]
        %v2970 = vld [vmem:[%s1223 + $0x98] sm:$0x1]
        %v2971 = vld [vmem:[%s1223 + $0x9c] sm:$0xe]
        %v2972 = vld [vmem:[%s1223 + $0xa0] sm:$0xf]
        %v2973 = vld [vmem:[%s1223 + $0xa4] sm:$0x1]
        %v2974 = vld [vmem:[%s1223 + $0xa8] sm:$0xe]
        %v2975 = vld [vmem:[%s1223 + $0xac] sm:$0xf]
        %v2976 = vld [vmem:[%s1223 + $0xb0] sm:$0x1]
        %v2977 = vld [vmem:[%s1223 + $0xb4] sm:$0xe]
        %v2978 = vld [vmem:[%s1223 + $0xb8] sm:$0xf]
        %v2979 = vld [vmem:[%s1223 + $0xbc] sm:$0x1]
        %v3028 = vrot.slane %v2932, 5
        %v3029 = vrot.slane %v3028, 4
        %v3030 = vrot.slane %v2933, 5
        %v3031 = vsel %vm2067, %v3029, %v3030
        %v3032 = vrot.slane %v3030, 4
        %v3033 = vrot.slane %v2934, 5
        %v3034 = vsel %vm2067, %v3032, %v3033
        %v3035 = vrot.slane %v2935, 5
        %v3036 = vrot.slane %v3035, 4
        %v3037 = vrot.slane %v2936, 5
        %v3038 = vsel %vm2067, %v3036, %v3037
        %v3039 = vrot.slane %v3037, 4
        %v3040 = vrot.slane %v2937, 5
        %v3041 = vsel %vm2067, %v3039, %v3040
        %v3042 = vrot.slane %v2938, 5
        %v3043 = vrot.slane %v3042, 4
        %v3044 = vrot.slane %v2939, 5
        %v3045 = vsel %vm2067, %v3043, %v3044
        %v3046 = vrot.slane %v3044, 4
        %v3047 = vrot.slane %v2940, 5
        %v3048 = vsel %vm2067, %v3046, %v3047
        %v3049 = vrot.slane %v2941, 5
        %v3050 = vrot.slane %v3049, 4
        %v3051 = vrot.slane %v2942, 5
        %v3052 = vsel %vm2067, %v3050, %v3051
        %v3053 = vrot.slane %v3051, 4
        %v3054 = vrot.slane %v2943, 5
        %v3055 = vsel %vm2067, %v3053, %v3054
        %v3056 = vrot.slane %v2944, 5
        %v3057 = vrot.slane %v3056, 4
        %v3058 = vrot.slane %v2945, 5
        %v3059 = vsel %vm2067, %v3057, %v3058
        %v3060 = vrot.slane %v3058, 4
        %v3061 = vrot.slane %v2946, 5
        %v3062 = vsel %vm2067, %v3060, %v3061
        %v3063 = vrot.slane %v2947, 5
        %v3064 = vrot.slane %v3063, 4
        %v3065 = vrot.slane %v2948, 5
        %v3066 = vsel %vm2067, %v3064, %v3065
        %v3067 = vrot.slane %v3065, 4
        %v3068 = vrot.slane %v2949, 5
        %v3069 = vsel %vm2067, %v3067, %v3068
        %v3070 = vrot.slane %v2950, 5
        %v3071 = vrot.slane %v3070, 4
        %v3072 = vrot.slane %v2951, 5
        %v3073 = vsel %vm2067, %v3071, %v3072
        %v3074 = vrot.slane %v3072, 4
        %v3075 = vrot.slane %v2952, 5
        %v3076 = vsel %vm2067, %v3074, %v3075
        %v3077 = vrot.slane %v2953, 5
        %v3078 = vrot.slane %v3077, 4
        %v3079 = vrot.slane %v2954, 5
        %v3080 = vsel %vm2067, %v3078, %v3079
        %v3081 = vrot.slane %v3079, 4
        %v3082 = vrot.slane %v2955, 5
        %v3083 = vsel %vm2067, %v3081, %v3082
        %v3084 = vrot.slane %v2956, 5
        %v3085 = vrot.slane %v3084, 4
        %v3086 = vrot.slane %v2957, 5
        %v3087 = vsel %vm2067, %v3085, %v3086
        %v3088 = vrot.slane %v3086, 4
        %v3089 = vrot.slane %v2958, 5
        %v3090 = vsel %vm2067, %v3088, %v3089
        %v3091 = vrot.slane %v2959, 5
        %v3092 = vrot.slane %v3091, 4
        %v3093 = vrot.slane %v2960, 5
        %v3094 = vsel %vm2067, %v3092, %v3093
        %v3095 = vrot.slane %v3093, 4
        %v3096 = vrot.slane %v2961, 5
        %v3097 = vsel %vm2067, %v3095, %v3096
        %v3098 = vrot.slane %v2962, 5
        %v3099 = vrot.slane %v3098, 4
        %v3100 = vrot.slane %v2963, 5
        %v3101 = vsel %vm2067, %v3099, %v3100
        %v3102 = vrot.slane %v3100, 4
        %v3103 = vrot.slane %v2964, 5
        %v3104 = vsel %vm2067, %v3102, %v3103
        %v3105 = vrot.slane %v2965, 5
        %v3106 = vrot.slane %v3105, 4
        %v3107 = vrot.slane %v2966, 5
        %v3108 = vsel %vm2067, %v3106, %v3107
        %v3109 = vrot.slane %v3107, 4
        %v3110 = vrot.slane %v2967, 5
        %v3111 = vsel %vm2067, %v3109, %v3110
        %v3112 = vrot.slane %v2968, 5
        %v3113 = vrot.slane %v3112, 4
        %v3114 = vrot.slane %v2969, 5
        %v3115 = vsel %vm2067, %v3113, %v3114
        %v3116 = vrot.slane %v3114, 4
        %v3117 = vrot.slane %v2970, 5
        %v3118 = vsel %vm2067, %v3116, %v3117
        %v3119 = vrot.slane %v2971, 5
        %v3120 = vrot.slane %v3119, 4
        %v3121 = vrot.slane %v2972, 5
        %v3122 = vsel %vm2067, %v3120, %v3121
        %v3123 = vrot.slane %v3121, 4
        %v3124 = vrot.slane %v2973, 5
        %v3125 = vsel %vm2067, %v3123, %v3124
        %v3126 = vrot.slane %v2974, 5
        %v3127 = vrot.slane %v3126, 4
        %v3128 = vrot.slane %v2975, 5
        %v3129 = vsel %vm2067, %v3127, %v3128
        %v3130 = vrot.slane %v3128, 4
        %v3131 = vrot.slane %v2976, 5
        %v3132 = vsel %vm2067, %v3130, %v3131
        %v3133 = vrot.slane %v2977, 5
        %v3134 = vrot.slane %v3133, 4
        %v3135 = vrot.slane %v2978, 5
        %v3136 = vsel %vm2067, %v3134, %v3135
        %v3137 = vrot.slane %v3135, 4
        %v3138 = vrot.slane %v2979, 5
        %v3139 = vsel %vm2067, %v3137, %v3138
        %3140 = vrot.lane.b32.xlu0 %v3031, 64
        %v3141 = vpop.permute.xlu0 %3140
        %3142 = vrot.lane.b32.xlu0 %v3034, 64
        %v3143 = vpop.permute.xlu0 %3142
        %3144 = vrot.lane.b32.xlu0 %v3038, 64
        %v3145 = vpop.permute.xlu0 %3144
        %3146 = vrot.lane.b32.xlu0 %v3041, 64
        %v3147 = vpop.permute.xlu0 %3146
        %3148 = vrot.lane.b32.xlu0 %v3045, 64
        %v3149 = vpop.permute.xlu0 %3148
        %3150 = vrot.lane.b32.xlu0 %v3048, 64
        %v3151 = vpop.permute.xlu0 %3150
        %3152 = vrot.lane.b32.xlu0 %v3052, 64
        %v3153 = vpop.permute.xlu0 %3152
        %3154 = vrot.lane.b32.xlu0 %v3055, 64
        %v3155 = vpop.permute.xlu0 %3154
        %3156 = vrot.lane.b32.xlu0 %v3059, 64
        %v3157 = vpop.permute.xlu0 %3156
        %3158 = vrot.lane.b32.xlu0 %v3062, 64
        %v3159 = vpop.permute.xlu0 %3158
        %3160 = vrot.lane.b32.xlu0 %v3066, 64
        %v3161 = vpop.permute.xlu0 %3160
        %3162 = vrot.lane.b32.xlu0 %v3069, 64
        %v3163 = vpop.permute.xlu0 %3162
        %3164 = vrot.lane.b32.xlu0 %v3073, 64
        %v3165 = vpop.permute.xlu0 %3164
        %3166 = vrot.lane.b32.xlu0 %v3076, 64
        %v3167 = vpop.permute.xlu0 %3166
        %3168 = vrot.lane.b32.xlu0 %v3080, 64
        %v3169 = vpop.permute.xlu0 %3168
        %3170 = vrot.lane.b32.xlu0 %v3083, 64
        %v3171 = vpop.permute.xlu0 %3170
        %3172 = vrot.lane.b32.xlu0 %v3087, 64
        %v3173 = vpop.permute.xlu0 %3172
        %3174 = vrot.lane.b32.xlu0 %v3090, 64
        %v3175 = vpop.permute.xlu0 %3174
        %3176 = vrot.lane.b32.xlu0 %v3094, 64
        %v3177 = vpop.permute.xlu0 %3176
        %3178 = vrot.lane.b32.xlu0 %v3097, 64
        %v3179 = vpop.permute.xlu0 %3178
        %3180 = vrot.lane.b32.xlu0 %v3101, 64
        %v3181 = vpop.permute.xlu0 %3180
        %3182 = vrot.lane.b32.xlu0 %v3104, 64
        %v3183 = vpop.permute.xlu0 %3182
        %3184 = vrot.lane.b32.xlu0 %v3108, 64
        %v3185 = vpop.permute.xlu0 %3184
        %3186 = vrot.lane.b32.xlu0 %v3111, 64
        %v3187 = vpop.permute.xlu0 %3186
        %3188 = vrot.lane.b32.xlu0 %v3115, 64
        %v3189 = vpop.permute.xlu0 %3188
        %3190 = vrot.lane.b32.xlu0 %v3118, 64
        %v3191 = vpop.permute.xlu0 %3190
        %3192 = vrot.lane.b32.xlu0 %v3122, 64
        %v3193 = vpop.permute.xlu0 %3192
        %3194 = vrot.lane.b32.xlu0 %v3125, 64
        %v3195 = vpop.permute.xlu0 %3194
        %3196 = vrot.lane.b32.xlu0 %v3129, 64
        %v3197 = vpop.permute.xlu0 %3196
        %3198 = vrot.lane.b32.xlu0 %v3132, 64
        %v3199 = vpop.permute.xlu0 %3198
        %3200 = vrot.lane.b32.xlu0 %v3136, 64
        %v3201 = vpop.permute.xlu0 %3200
        %3202 = vrot.lane.b32.xlu0 %v3139, 64
        %v3203 = vpop.permute.xlu0 %3202
        %3236 = vst.msk [vmem:[#allocation3 + $0x8] sm:$0xf] %vm1936, %v3141
        %3237 = vst.msk [vmem:[#allocation3 + $0x1c] sm:$0xf] %vm1936, %v3143
        %3238 = vst.msk [vmem:[#allocation3 + $0x30] sm:$0xf] %vm1936, %v3145
        %3239 = vst.msk [vmem:[#allocation3 + $0x44] sm:$0xf] %vm1936, %v3147
        %3240 = vst.msk [vmem:[#allocation3 + $0x58] sm:$0xf] %vm1936, %v3149
        %3241 = vst.msk [vmem:[#allocation3 + $0x6c] sm:$0xf] %vm1936, %v3151
        %3242 = vst.msk [vmem:[#allocation3 + $0x80] sm:$0xf] %vm1936, %v3153
        %3243 = vst.msk [vmem:[#allocation3 + $0x94] sm:$0xf] %vm1936, %v3155
        %3244 = vst.msk [vmem:[#allocation3 + $0xa8] sm:$0xf] %vm1936, %v3157
        %3245 = vst.msk [vmem:[#allocation3 + $0xbc] sm:$0xf] %vm1936, %v3159
        %3246 = vst.msk [vmem:[#allocation3 + $0xd0] sm:$0xf] %vm1936, %v3161
        %3247 = vst.msk [vmem:[#allocation3 + $0xe4] sm:$0xf] %vm1936, %v3163
        %3248 = vst.msk [vmem:[#allocation3 + $0xf8] sm:$0xf] %vm1936, %v3165
        %3249 = vst.msk [vmem:[#allocation3 + $0x10c] sm:$0xf] %vm1936, %v3167
        %3250 = vst.msk [vmem:[#allocation3 + $0x120] sm:$0xf] %vm1936, %v3169
        %3251 = vst.msk [vmem:[#allocation3 + $0x134] sm:$0xf] %vm1936, %v3171
        %3252 = vst.msk [vmem:[#allocation3 + $0x148] sm:$0xf] %vm1936, %v3173
        %3253 = vst.msk [vmem:[#allocation3 + $0x15c] sm:$0xf] %vm1936, %v3175
        %3254 = vst.msk [vmem:[#allocation3 + $0x170] sm:$0xf] %vm1936, %v3177
        %3255 = vst.msk [vmem:[#allocation3 + $0x184] sm:$0xf] %vm1936, %v3179
        %3256 = vst.msk [vmem:[#allocation3 + $0x198] sm:$0xf] %vm1936, %v3181
        %3257 = vst.msk [vmem:[#allocation3 + $0x1ac] sm:$0xf] %vm1936, %v3183
        %3258 = vst.msk [vmem:[#allocation3 + $0x1c0] sm:$0xf] %vm1936, %v3185
        %3259 = vst.msk [vmem:[#allocation3 + $0x1d4] sm:$0xf] %vm1936, %v3187
        %3260 = vst.msk [vmem:[#allocation3 + $0x1e8] sm:$0xf] %vm1936, %v3189
        %3261 = vst.msk [vmem:[#allocation3 + $0x1fc] sm:$0xf] %vm1936, %v3191
        %3262 = vst.msk [vmem:[#allocation3 + $0x210] sm:$0xf] %vm1936, %v3193
        %3263 = vst.msk [vmem:[#allocation3 + $0x224] sm:$0xf] %vm1936, %v3195
        %3264 = vst.msk [vmem:[#allocation3 + $0x238] sm:$0xf] %vm1936, %v3197
        %3265 = vst.msk [vmem:[#allocation3 + $0x24c] sm:$0xf] %vm1936, %v3199
        %3266 = vst.msk [vmem:[#allocation3 + $0x260] sm:$0xf] %vm1936, %v3201
        %3267 = vst.msk [vmem:[#allocation3 + $0x274] sm:$0xf] %vm1936, %v3203
        %s3268 = scalar_lea.vmem [#allocation2], 24
        %v3269 = vld [vmem:[%s3268] sm:$0xf]
        %v3270 = vld [vmem:[%s3268 + $0x4] sm:$0xf]
        %v3271 = vld [vmem:[%s3268 + $0xc] sm:$0xf]
        %v3272 = vld [vmem:[%s3268 + $0x10] sm:$0xf]
        %v3273 = vld [vmem:[%s3268 + $0x18] sm:$0xf]
        %v3274 = vld [vmem:[%s3268 + $0x1c] sm:$0xf]
        %v3275 = vld [vmem:[%s3268 + $0x24] sm:$0xf]
        %v3276 = vld [vmem:[%s3268 + $0x28] sm:$0xf]
        %v3277 = vld [vmem:[%s3268 + $0x30] sm:$0xf]
        %v3278 = vld [vmem:[%s3268 + $0x34] sm:$0xf]
        %v3279 = vld [vmem:[%s3268 + $0x3c] sm:$0xf]
        %v3280 = vld [vmem:[%s3268 + $0x40] sm:$0xf]
        %v3281 = vld [vmem:[%s3268 + $0x48] sm:$0xf]
        %v3282 = vld [vmem:[%s3268 + $0x4c] sm:$0xf]
        %v3283 = vld [vmem:[%s3268 + $0x54] sm:$0xf]
        %v3284 = vld [vmem:[%s3268 + $0x58] sm:$0xf]
        %v3285 = vld [vmem:[%s3268 + $0x60] sm:$0xf]
        %v3286 = vld [vmem:[%s3268 + $0x64] sm:$0xf]
        %v3287 = vld [vmem:[%s3268 + $0x6c] sm:$0xf]
        %v3288 = vld [vmem:[%s3268 + $0x70] sm:$0xf]
        %v3289 = vld [vmem:[%s3268 + $0x78] sm:$0xf]
        %v3290 = vld [vmem:[%s3268 + $0x7c] sm:$0xf]
        %v3291 = vld [vmem:[%s3268 + $0x84] sm:$0xf]
        %v3292 = vld [vmem:[%s3268 + $0x88] sm:$0xf]
        %v3293 = vld [vmem:[%s3268 + $0x90] sm:$0xf]
        %v3294 = vld [vmem:[%s3268 + $0x94] sm:$0xf]
        %v3295 = vld [vmem:[%s3268 + $0x9c] sm:$0xf]
        %v3296 = vld [vmem:[%s3268 + $0xa0] sm:$0xf]
        %v3297 = vld [vmem:[%s3268 + $0xa8] sm:$0xf]
        %v3298 = vld [vmem:[%s3268 + $0xac] sm:$0xf]
        %v3299 = vld [vmem:[%s3268 + $0xb4] sm:$0xf]
        %v3300 = vld [vmem:[%s3268 + $0xb8] sm:$0xf]
        %3301 = vst.msk [vmem:[#allocation3 + $0xc] sm:$0xf] %vm812, %v3269
        %3302 = vst.msk [vmem:[#allocation3 + $0x20] sm:$0xf] %vm812, %v3270
        %3303 = vst.msk [vmem:[#allocation3 + $0x34] sm:$0xf] %vm812, %v3271
        %3304 = vst.msk [vmem:[#allocation3 + $0x48] sm:$0xf] %vm812, %v3272
        %3305 = vst.msk [vmem:[#allocation3 + $0x5c] sm:$0xf] %vm812, %v3273
        %3306 = vst.msk [vmem:[#allocation3 + $0x70] sm:$0xf] %vm812, %v3274
        %3307 = vst.msk [vmem:[#allocation3 + $0x84] sm:$0xf] %vm812, %v3275
        %3308 = vst.msk [vmem:[#allocation3 + $0x98] sm:$0xf] %vm812, %v3276
        %3309 = vst.msk [vmem:[#allocation3 + $0xac] sm:$0xf] %vm812, %v3277
        %3310 = vst.msk [vmem:[#allocation3 + $0xc0] sm:$0xf] %vm812, %v3278
        %3311 = vst.msk [vmem:[#allocation3 + $0xd4] sm:$0xf] %vm812, %v3279
        %3312 = vst.msk [vmem:[#allocation3 + $0xe8] sm:$0xf] %vm812, %v3280
        %3313 = vst.msk [vmem:[#allocation3 + $0xfc] sm:$0xf] %vm812, %v3281
        %3314 = vst.msk [vmem:[#allocation3 + $0x110] sm:$0xf] %vm812, %v3282
        %3315 = vst.msk [vmem:[#allocation3 + $0x124] sm:$0xf] %vm812, %v3283
        %3316 = vst.msk [vmem:[#allocation3 + $0x138] sm:$0xf] %vm812, %v3284
        %3317 = vst.msk [vmem:[#allocation3 + $0x14c] sm:$0xf] %vm812, %v3285
        %3318 = vst.msk [vmem:[#allocation3 + $0x160] sm:$0xf] %vm812, %v3286
        %3319 = vst.msk [vmem:[#allocation3 + $0x174] sm:$0xf] %vm812, %v3287
        %3320 = vst.msk [vmem:[#allocation3 + $0x188] sm:$0xf] %vm812, %v3288
        %3321 = vst.msk [vmem:[#allocation3 + $0x19c] sm:$0xf] %vm812, %v3289
        %3322 = vst.msk [vmem:[#allocation3 + $0x1b0] sm:$0xf] %vm812, %v3290
        %3323 = vst.msk [vmem:[#allocation3 + $0x1c4] sm:$0xf] %vm812, %v3291
        %3324 = vst.msk [vmem:[#allocation3 + $0x1d8] sm:$0xf] %vm812, %v3292
        %3325 = vst.msk [vmem:[#allocation3 + $0x1ec] sm:$0xf] %vm812, %v3293
        %3326 = vst.msk [vmem:[#allocation3 + $0x200] sm:$0xf] %vm812, %v3294
        %3327 = vst.msk [vmem:[#allocation3 + $0x214] sm:$0xf] %vm812, %v3295
        %3328 = vst.msk [vmem:[#allocation3 + $0x228] sm:$0xf] %vm812, %v3296
        %3329 = vst.msk [vmem:[#allocation3 + $0x23c] sm:$0xf] %vm812, %v3297
        %3330 = vst.msk [vmem:[#allocation3 + $0x250] sm:$0xf] %vm812, %v3298
        %3331 = vst.msk [vmem:[#allocation3 + $0x264] sm:$0xf] %vm812, %v3299
        %3332 = vst.msk [vmem:[#allocation3 + $0x278] sm:$0xf] %vm812, %v3300
        %v3333 = vld [vmem:[%s3268] sm:$0xf]
        %v3334 = vld [vmem:[%s3268 + $0x4] sm:$0xf]
        %v3335 = vld [vmem:[%s3268 + $0x8] sm:$0x1]
        %v3336 = vld [vmem:[%s3268 + $0xc] sm:$0xf]
        %v3337 = vld [vmem:[%s3268 + $0x10] sm:$0xf]
        %v3338 = vld [vmem:[%s3268 + $0x14] sm:$0x1]
        %v3339 = vld [vmem:[%s3268 + $0x18] sm:$0xf]
        %v3340 = vld [vmem:[%s3268 + $0x1c] sm:$0xf]
        %v3341 = vld [vmem:[%s3268 + $0x20] sm:$0x1]
        %v3342 = vld [vmem:[%s3268 + $0x24] sm:$0xf]
        %v3343 = vld [vmem:[%s3268 + $0x28] sm:$0xf]
        %v3344 = vld [vmem:[%s3268 + $0x2c] sm:$0x1]
        %v3345 = vld [vmem:[%s3268 + $0x30] sm:$0xf]
        %v3346 = vld [vmem:[%s3268 + $0x34] sm:$0xf]
        %v3347 = vld [vmem:[%s3268 + $0x38] sm:$0x1]
        %v3348 = vld [vmem:[%s3268 + $0x3c] sm:$0xf]
        %v3349 = vld [vmem:[%s3268 + $0x40] sm:$0xf]
        %v3350 = vld [vmem:[%s3268 + $0x44] sm:$0x1]
        %v3351 = vld [vmem:[%s3268 + $0x48] sm:$0xf]
        %v3352 = vld [vmem:[%s3268 + $0x4c] sm:$0xf]
        %v3353 = vld [vmem:[%s3268 + $0x50] sm:$0x1]
        %v3354 = vld [vmem:[%s3268 + $0x54] sm:$0xf]
        %v3355 = vld [vmem:[%s3268 + $0x58] sm:$0xf]
        %v3356 = vld [vmem:[%s3268 + $0x5c] sm:$0x1]
        %v3357 = vld [vmem:[%s3268 + $0x60] sm:$0xf]
        %v3358 = vld [vmem:[%s3268 + $0x64] sm:$0xf]
        %v3359 = vld [vmem:[%s3268 + $0x68] sm:$0x1]
        %v3360 = vld [vmem:[%s3268 + $0x6c] sm:$0xf]
        %v3361 = vld [vmem:[%s3268 + $0x70] sm:$0xf]
        %v3362 = vld [vmem:[%s3268 + $0x74] sm:$0x1]
        %v3363 = vld [vmem:[%s3268 + $0x78] sm:$0xf]
        %v3364 = vld [vmem:[%s3268 + $0x7c] sm:$0xf]
        %v3365 = vld [vmem:[%s3268 + $0x80] sm:$0x1]
        %v3366 = vld [vmem:[%s3268 + $0x84] sm:$0xf]
        %v3367 = vld [vmem:[%s3268 + $0x88] sm:$0xf]
        %v3368 = vld [vmem:[%s3268 + $0x8c] sm:$0x1]
        %v3369 = vld [vmem:[%s3268 + $0x90] sm:$0xf]
        %v3370 = vld [vmem:[%s3268 + $0x94] sm:$0xf]
        %v3371 = vld [vmem:[%s3268 + $0x98] sm:$0x1]
        %v3372 = vld [vmem:[%s3268 + $0x9c] sm:$0xf]
        %v3373 = vld [vmem:[%s3268 + $0xa0] sm:$0xf]
        %v3374 = vld [vmem:[%s3268 + $0xa4] sm:$0x1]
        %v3375 = vld [vmem:[%s3268 + $0xa8] sm:$0xf]
        %v3376 = vld [vmem:[%s3268 + $0xac] sm:$0xf]
        %v3377 = vld [vmem:[%s3268 + $0xb0] sm:$0x1]
        %v3378 = vld [vmem:[%s3268 + $0xb4] sm:$0xf]
        %v3379 = vld [vmem:[%s3268 + $0xb8] sm:$0xf]
        %v3380 = vld [vmem:[%s3268 + $0xbc] sm:$0x1]
        %v3382 = vshrl.u32 %v3333, 16
        %v3384 = vrot.slane %v3382, 4
        %v3385 = vshll.u32 %v3333, 16
        %v3387 = vrot.slane %v3385, 5
        %v3388 = vor.u32 %v3384, %v3387
        %v3389 = vrot.slane %v3388, 4
        %v3391 = vshll.u32 %v3334, 16
        %v3393 = vrot.slane %v3391, 5
        %v3394 = vsel %vm1455, %v3389, %v3393
        %v3395 = vshrl.u32 %v3334, 16
        %v3397 = vrot.slane %v3395, 4
        %v3398 = vor.u32 %v3397, %v3393
        %v3399 = vrot.slane %v3398, 4
        %v3401 = vshll.u32 %v3335, 16
        %v3403 = vrot.slane %v3401, 5
        %v3404 = vsel %vm1455, %v3399, %v3403
        %v3406 = vshrl.u32 %v3336, 16
        %v3408 = vrot.slane %v3406, 4
        %v3409 = vshll.u32 %v3336, 16
        %v3411 = vrot.slane %v3409, 5
        %v3412 = vor.u32 %v3408, %v3411
        %v3413 = vrot.slane %v3412, 4
        %v3415 = vshll.u32 %v3337, 16
        %v3417 = vrot.slane %v3415, 5
        %v3418 = vsel %vm1455, %v3413, %v3417
        %v3419 = vshrl.u32 %v3337, 16
        %v3421 = vrot.slane %v3419, 4
        %v3422 = vor.u32 %v3421, %v3417
        %v3423 = vrot.slane %v3422, 4
        %v3425 = vshll.u32 %v3338, 16
        %v3427 = vrot.slane %v3425, 5
        %v3428 = vsel %vm1455, %v3423, %v3427
        %v3430 = vshrl.u32 %v3339, 16
        %v3432 = vrot.slane %v3430, 4
        %v3433 = vshll.u32 %v3339, 16
        %v3435 = vrot.slane %v3433, 5
        %v3436 = vor.u32 %v3432, %v3435
        %v3437 = vrot.slane %v3436, 4
        %v3439 = vshll.u32 %v3340, 16
        %v3441 = vrot.slane %v3439, 5
        %v3442 = vsel %vm1455, %v3437, %v3441
        %v3443 = vshrl.u32 %v3340, 16
        %v3445 = vrot.slane %v3443, 4
        %v3446 = vor.u32 %v3445, %v3441
        %v3447 = vrot.slane %v3446, 4
        %v3449 = vshll.u32 %v3341, 16
        %v3451 = vrot.slane %v3449, 5
        %v3452 = vsel %vm1455, %v3447, %v3451
        %v3454 = vshrl.u32 %v3342, 16
        %v3456 = vrot.slane %v3454, 4
        %v3457 = vshll.u32 %v3342, 16
        %v3459 = vrot.slane %v3457, 5
        %v3460 = vor.u32 %v3456, %v3459
        %v3461 = vrot.slane %v3460, 4
        %v3463 = vshll.u32 %v3343, 16
        %v3465 = vrot.slane %v3463, 5
        %v3466 = vsel %vm1455, %v3461, %v3465
        %v3467 = vshrl.u32 %v3343, 16
        %v3469 = vrot.slane %v3467, 4
        %v3470 = vor.u32 %v3469, %v3465
        %v3471 = vrot.slane %v3470, 4
        %v3473 = vshll.u32 %v3344, 16
        %v3475 = vrot.slane %v3473, 5
        %v3476 = vsel %vm1455, %v3471, %v3475
        %v3478 = vshrl.u32 %v3345, 16
        %v3480 = vrot.slane %v3478, 4
        %v3481 = vshll.u32 %v3345, 16
        %v3483 = vrot.slane %v3481, 5
        %v3484 = vor.u32 %v3480, %v3483
        %v3485 = vrot.slane %v3484, 4
        %v3487 = vshll.u32 %v3346, 16
        %v3489 = vrot.slane %v3487, 5
        %v3490 = vsel %vm1455, %v3485, %v3489
        %v3491 = vshrl.u32 %v3346, 16
        %v3493 = vrot.slane %v3491, 4
        %v3494 = vor.u32 %v3493, %v3489
        %v3495 = vrot.slane %v3494, 4
        %v3497 = vshll.u32 %v3347, 16
        %v3499 = vrot.slane %v3497, 5
        %v3500 = vsel %vm1455, %v3495, %v3499
        %v3502 = vshrl.u32 %v3348, 16
        %v3504 = vrot.slane %v3502, 4
        %v3505 = vshll.u32 %v3348, 16
        %v3507 = vrot.slane %v3505, 5
        %v3508 = vor.u32 %v3504, %v3507
        %v3509 = vrot.slane %v3508, 4
        %v3511 = vshll.u32 %v3349, 16
        %v3513 = vrot.slane %v3511, 5
        %v3514 = vsel %vm1455, %v3509, %v3513
        %v3515 = vshrl.u32 %v3349, 16
        %v3517 = vrot.slane %v3515, 4
        %v3518 = vor.u32 %v3517, %v3513
        %v3519 = vrot.slane %v3518, 4
        %v3521 = vshll.u32 %v3350, 16
        %v3523 = vrot.slane %v3521, 5
        %v3524 = vsel %vm1455, %v3519, %v3523
        %v3526 = vshrl.u32 %v3351, 16
        %v3528 = vrot.slane %v3526, 4
        %v3529 = vshll.u32 %v3351, 16
        %v3531 = vrot.slane %v3529, 5
        %v3532 = vor.u32 %v3528, %v3531
        %v3533 = vrot.slane %v3532, 4
        %v3535 = vshll.u32 %v3352, 16
        %v3537 = vrot.slane %v3535, 5
        %v3538 = vsel %vm1455, %v3533, %v3537
        %v3539 = vshrl.u32 %v3352, 16
        %v3541 = vrot.slane %v3539, 4
        %v3542 = vor.u32 %v3541, %v3537
        %v3543 = vrot.slane %v3542, 4
        %v3545 = vshll.u32 %v3353, 16
        %v3547 = vrot.slane %v3545, 5
        %v3548 = vsel %vm1455, %v3543, %v3547
        %v3550 = vshrl.u32 %v3354, 16
        %v3552 = vrot.slane %v3550, 4
        %v3553 = vshll.u32 %v3354, 16
        %v3555 = vrot.slane %v3553, 5
        %v3556 = vor.u32 %v3552, %v3555
        %v3557 = vrot.slane %v3556, 4
        %v3559 = vshll.u32 %v3355, 16
        %v3561 = vrot.slane %v3559, 5
        %v3562 = vsel %vm1455, %v3557, %v3561
        %v3563 = vshrl.u32 %v3355, 16
        %v3565 = vrot.slane %v3563, 4
        %v3566 = vor.u32 %v3565, %v3561
        %v3567 = vrot.slane %v3566, 4
        %v3569 = vshll.u32 %v3356, 16
        %v3571 = vrot.slane %v3569, 5
        %v3572 = vsel %vm1455, %v3567, %v3571
        %v3574 = vshrl.u32 %v3357, 16
        %v3576 = vrot.slane %v3574, 4
        %v3577 = vshll.u32 %v3357, 16
        %v3579 = vrot.slane %v3577, 5
        %v3580 = vor.u32 %v3576, %v3579
        %v3581 = vrot.slane %v3580, 4
        %v3583 = vshll.u32 %v3358, 16
        %v3585 = vrot.slane %v3583, 5
        %v3586 = vsel %vm1455, %v3581, %v3585
        %v3587 = vshrl.u32 %v3358, 16
        %v3589 = vrot.slane %v3587, 4
        %v3590 = vor.u32 %v3589, %v3585
        %v3591 = vrot.slane %v3590, 4
        %v3593 = vshll.u32 %v3359, 16
        %v3595 = vrot.slane %v3593, 5
        %v3596 = vsel %vm1455, %v3591, %v3595
        %v3598 = vshrl.u32 %v3360, 16
        %v3600 = vrot.slane %v3598, 4
        %v3601 = vshll.u32 %v3360, 16
        %v3603 = vrot.slane %v3601, 5
        %v3604 = vor.u32 %v3600, %v3603
        %v3605 = vrot.slane %v3604, 4
        %v3607 = vshll.u32 %v3361, 16
        %v3609 = vrot.slane %v3607, 5
        %v3610 = vsel %vm1455, %v3605, %v3609
        %v3611 = vshrl.u32 %v3361, 16
        %v3613 = vrot.slane %v3611, 4
        %v3614 = vor.u32 %v3613, %v3609
        %v3615 = vrot.slane %v3614, 4
        %v3617 = vshll.u32 %v3362, 16
        %v3619 = vrot.slane %v3617, 5
        %v3620 = vsel %vm1455, %v3615, %v3619
        %v3622 = vshrl.u32 %v3363, 16
        %v3624 = vrot.slane %v3622, 4
        %v3625 = vshll.u32 %v3363, 16
        %v3627 = vrot.slane %v3625, 5
        %v3628 = vor.u32 %v3624, %v3627
        %v3629 = vrot.slane %v3628, 4
        %v3631 = vshll.u32 %v3364, 16
        %v3633 = vrot.slane %v3631, 5
        %v3634 = vsel %vm1455, %v3629, %v3633
        %v3635 = vshrl.u32 %v3364, 16
        %v3637 = vrot.slane %v3635, 4
        %v3638 = vor.u32 %v3637, %v3633
        %v3639 = vrot.slane %v3638, 4
        %v3641 = vshll.u32 %v3365, 16
        %v3643 = vrot.slane %v3641, 5
        %v3644 = vsel %vm1455, %v3639, %v3643
        %v3646 = vshrl.u32 %v3366, 16
        %v3648 = vrot.slane %v3646, 4
        %v3649 = vshll.u32 %v3366, 16
        %v3651 = vrot.slane %v3649, 5
        %v3652 = vor.u32 %v3648, %v3651
        %v3653 = vrot.slane %v3652, 4
        %v3655 = vshll.u32 %v3367, 16
        %v3657 = vrot.slane %v3655, 5
        %v3658 = vsel %vm1455, %v3653, %v3657
        %v3659 = vshrl.u32 %v3367, 16
        %v3661 = vrot.slane %v3659, 4
        %v3662 = vor.u32 %v3661, %v3657
        %v3663 = vrot.slane %v3662, 4
        %v3665 = vshll.u32 %v3368, 16
        %v3667 = vrot.slane %v3665, 5
        %v3668 = vsel %vm1455, %v3663, %v3667
        %v3670 = vshrl.u32 %v3369, 16
        %v3672 = vrot.slane %v3670, 4
        %v3673 = vshll.u32 %v3369, 16
        %v3675 = vrot.slane %v3673, 5
        %v3676 = vor.u32 %v3672, %v3675
        %v3677 = vrot.slane %v3676, 4
        %v3679 = vshll.u32 %v3370, 16
        %v3681 = vrot.slane %v3679, 5
        %v3682 = vsel %vm1455, %v3677, %v3681
        %v3683 = vshrl.u32 %v3370, 16
        %v3685 = vrot.slane %v3683, 4
        %v3686 = vor.u32 %v3685, %v3681
        %v3687 = vrot.slane %v3686, 4
        %v3689 = vshll.u32 %v3371, 16
        %v3691 = vrot.slane %v3689, 5
        %v3692 = vsel %vm1455, %v3687, %v3691
        %v3694 = vshrl.u32 %v3372, 16
        %v3696 = vrot.slane %v3694, 4
        %v3697 = vshll.u32 %v3372, 16
        %v3699 = vrot.slane %v3697, 5
        %v3700 = vor.u32 %v3696, %v3699
        %v3701 = vrot.slane %v3700, 4
        %v3703 = vshll.u32 %v3373, 16
        %v3705 = vrot.slane %v3703, 5
        %v3706 = vsel %vm1455, %v3701, %v3705
        %v3707 = vshrl.u32 %v3373, 16
        %v3709 = vrot.slane %v3707, 4
        %v3710 = vor.u32 %v3709, %v3705
        %v3711 = vrot.slane %v3710, 4
        %v3713 = vshll.u32 %v3374, 16
        %v3715 = vrot.slane %v3713, 5
        %v3716 = vsel %vm1455, %v3711, %v3715
        %v3718 = vshrl.u32 %v3375, 16
        %v3720 = vrot.slane %v3718, 4
        %v3721 = vshll.u32 %v3375, 16
        %v3723 = vrot.slane %v3721, 5
        %v3724 = vor.u32 %v3720, %v3723
        %v3725 = vrot.slane %v3724, 4
        %v3727 = vshll.u32 %v3376, 16
        %v3729 = vrot.slane %v3727, 5
        %v3730 = vsel %vm1455, %v3725, %v3729
        %v3731 = vshrl.u32 %v3376, 16
        %v3733 = vrot.slane %v3731, 4
        %v3734 = vor.u32 %v3733, %v3729
        %v3735 = vrot.slane %v3734, 4
        %v3737 = vshll.u32 %v3377, 16
        %v3739 = vrot.slane %v3737, 5
        %v3740 = vsel %vm1455, %v3735, %v3739
        %v3742 = vshrl.u32 %v3378, 16
        %v3744 = vrot.slane %v3742, 4
        %v3745 = vshll.u32 %v3378, 16
        %v3747 = vrot.slane %v3745, 5
        %v3748 = vor.u32 %v3744, %v3747
        %v3749 = vrot.slane %v3748, 4
        %v3751 = vshll.u32 %v3379, 16
        %v3753 = vrot.slane %v3751, 5
        %v3754 = vsel %vm1455, %v3749, %v3753
        %v3755 = vshrl.u32 %v3379, 16
        %v3757 = vrot.slane %v3755, 4
        %v3758 = vor.u32 %v3757, %v3753
        %v3759 = vrot.slane %v3758, 4
        %v3761 = vshll.u32 %v3380, 16
        %v3763 = vrot.slane %v3761, 5
        %v3764 = vsel %vm1455, %v3759, %v3763
        %3765 = vrot.lane.b32.xlu0 %v3394, 64
        %v3766 = vpop.permute.xlu0 %3765
        %3767 = vrot.lane.b32.xlu0 %v3404, 64
        %v3768 = vpop.permute.xlu0 %3767
        %3769 = vrot.lane.b32.xlu0 %v3418, 64
        %v3770 = vpop.permute.xlu0 %3769
        %3771 = vrot.lane.b32.xlu0 %v3428, 64
        %v3772 = vpop.permute.xlu0 %3771
        %3773 = vrot.lane.b32.xlu0 %v3442, 64
        %v3774 = vpop.permute.xlu0 %3773
        %3775 = vrot.lane.b32.xlu0 %v3452, 64
        %v3776 = vpop.permute.xlu0 %3775
        %3777 = vrot.lane.b32.xlu0 %v3466, 64
        %v3778 = vpop.permute.xlu0 %3777
        %3779 = vrot.lane.b32.xlu0 %v3476, 64
        %v3780 = vpop.permute.xlu0 %3779
        %3781 = vrot.lane.b32.xlu0 %v3490, 64
        %v3782 = vpop.permute.xlu0 %3781
        %3783 = vrot.lane.b32.xlu0 %v3500, 64
        %v3784 = vpop.permute.xlu0 %3783
        %3785 = vrot.lane.b32.xlu0 %v3514, 64
        %v3786 = vpop.permute.xlu0 %3785
        %3787 = vrot.lane.b32.xlu0 %v3524, 64
        %v3788 = vpop.permute.xlu0 %3787
        %3789 = vrot.lane.b32.xlu0 %v3538, 64
        %v3790 = vpop.permute.xlu0 %3789
        %3791 = vrot.lane.b32.xlu0 %v3548, 64
        %v3792 = vpop.permute.xlu0 %3791
        %3793 = vrot.lane.b32.xlu0 %v3562, 64
        %v3794 = vpop.permute.xlu0 %3793
        %3795 = vrot.lane.b32.xlu0 %v3572, 64
        %v3796 = vpop.permute.xlu0 %3795
        %3797 = vrot.lane.b32.xlu0 %v3586, 64
        %v3798 = vpop.permute.xlu0 %3797
        %3799 = vrot.lane.b32.xlu0 %v3596, 64
        %v3800 = vpop.permute.xlu0 %3799
        %3801 = vrot.lane.b32.xlu0 %v3610, 64
        %v3802 = vpop.permute.xlu0 %3801
        %3803 = vrot.lane.b32.xlu0 %v3620, 64
        %v3804 = vpop.permute.xlu0 %3803
        %3805 = vrot.lane.b32.xlu0 %v3634, 64
        %v3806 = vpop.permute.xlu0 %3805
        %3807 = vrot.lane.b32.xlu0 %v3644, 64
        %v3808 = vpop.permute.xlu0 %3807
        %3809 = vrot.lane.b32.xlu0 %v3658, 64
        %v3810 = vpop.permute.xlu0 %3809
        %3811 = vrot.lane.b32.xlu0 %v3668, 64
        %v3812 = vpop.permute.xlu0 %3811
        %3813 = vrot.lane.b32.xlu0 %v3682, 64
        %v3814 = vpop.permute.xlu0 %3813
        %3815 = vrot.lane.b32.xlu0 %v3692, 64
        %v3816 = vpop.permute.xlu0 %3815
        %3817 = vrot.lane.b32.xlu0 %v3706, 64
        %v3818 = vpop.permute.xlu0 %3817
        %3819 = vrot.lane.b32.xlu0 %v3716, 64
        %v3820 = vpop.permute.xlu0 %3819
        %3821 = vrot.lane.b32.xlu0 %v3730, 64
        %v3822 = vpop.permute.xlu0 %3821
        %3823 = vrot.lane.b32.xlu0 %v3740, 64
        %v3824 = vpop.permute.xlu0 %3823
        %3825 = vrot.lane.b32.xlu0 %v3754, 64
        %v3826 = vpop.permute.xlu0 %3825
        %3827 = vrot.lane.b32.xlu0 %v3764, 64
        %v3828 = vpop.permute.xlu0 %3827
        %3861 = vst.msk [vmem:[#allocation3 + $0xc] sm:$0xf] %vm1936, %v3766
        %3862 = vst.msk [vmem:[#allocation3 + $0x20] sm:$0xf] %vm1936, %v3768
        %3863 = vst.msk [vmem:[#allocation3 + $0x34] sm:$0xf] %vm1936, %v3770
        %3864 = vst.msk [vmem:[#allocation3 + $0x48] sm:$0xf] %vm1936, %v3772
        %3865 = vst.msk [vmem:[#allocation3 + $0x5c] sm:$0xf] %vm1936, %v3774
        %3866 = vst.msk [vmem:[#allocation3 + $0x70] sm:$0xf] %vm1936, %v3776
        %3867 = vst.msk [vmem:[#allocation3 + $0x84] sm:$0xf] %vm1936, %v3778
        %3868 = vst.msk [vmem:[#allocation3 + $0x98] sm:$0xf] %vm1936, %v3780
        %3869 = vst.msk [vmem:[#allocation3 + $0xac] sm:$0xf] %vm1936, %v3782
        %3870 = vst.msk [vmem:[#allocation3 + $0xc0] sm:$0xf] %vm1936, %v3784
        %3871 = vst.msk [vmem:[#allocation3 + $0xd4] sm:$0xf] %vm1936, %v3786
        %3872 = vst.msk [vmem:[#allocation3 + $0xe8] sm:$0xf] %vm1936, %v3788
        %3873 = vst.msk [vmem:[#allocation3 + $0xfc] sm:$0xf] %vm1936, %v3790
        %3874 = vst.msk [vmem:[#allocation3 + $0x110] sm:$0xf] %vm1936, %v3792
        %3875 = vst.msk [vmem:[#allocation3 + $0x124] sm:$0xf] %vm1936, %v3794
        %3876 = vst.msk [vmem:[#allocation3 + $0x138] sm:$0xf] %vm1936, %v3796
        %3877 = vst.msk [vmem:[#allocation3 + $0x14c] sm:$0xf] %vm1936, %v3798
        %3878 = vst.msk [vmem:[#allocation3 + $0x160] sm:$0xf] %vm1936, %v3800
        %3879 = vst.msk [vmem:[#allocation3 + $0x174] sm:$0xf] %vm1936, %v3802
        %3880 = vst.msk [vmem:[#allocation3 + $0x188] sm:$0xf] %vm1936, %v3804
        %3881 = vst.msk [vmem:[#allocation3 + $0x19c] sm:$0xf] %vm1936, %v3806
        %3882 = vst.msk [vmem:[#allocation3 + $0x1b0] sm:$0xf] %vm1936, %v3808
        %3883 = vst.msk [vmem:[#allocation3 + $0x1c4] sm:$0xf] %vm1936, %v3810
        %3884 = vst.msk [vmem:[#allocation3 + $0x1d8] sm:$0xf] %vm1936, %v3812
        %3885 = vst.msk [vmem:[#allocation3 + $0x1ec] sm:$0xf] %vm1936, %v3814
        %3886 = vst.msk [vmem:[#allocation3 + $0x200] sm:$0xf] %vm1936, %v3816
        %3887 = vst.msk [vmem:[#allocation3 + $0x214] sm:$0xf] %vm1936, %v3818
        %3888 = vst.msk [vmem:[#allocation3 + $0x228] sm:$0xf] %vm1936, %v3820
        %3889 = vst.msk [vmem:[#allocation3 + $0x23c] sm:$0xf] %vm1936, %v3822
        %3890 = vst.msk [vmem:[#allocation3 + $0x250] sm:$0xf] %vm1936, %v3824
        %3891 = vst.msk [vmem:[#allocation3 + $0x264] sm:$0xf] %vm1936, %v3826
        %3892 = vst.msk [vmem:[#allocation3 + $0x278] sm:$0xf] %vm1936, %v3828
        %v3893 = vld [vmem:[%s3268] sm:$0xe]
        %v3894 = vld [vmem:[%s3268 + $0x4] sm:$0xf]
        %v3895 = vld [vmem:[%s3268 + $0x8] sm:$0x1]
        %v3896 = vld [vmem:[%s3268 + $0xc] sm:$0xe]
        %v3897 = vld [vmem:[%s3268 + $0x10] sm:$0xf]
        %v3898 = vld [vmem:[%s3268 + $0x14] sm:$0x1]
        %v3899 = vld [vmem:[%s3268 + $0x18] sm:$0xe]
        %v3900 = vld [vmem:[%s3268 + $0x1c] sm:$0xf]
        %v3901 = vld [vmem:[%s3268 + $0x20] sm:$0x1]
        %v3902 = vld [vmem:[%s3268 + $0x24] sm:$0xe]
        %v3903 = vld [vmem:[%s3268 + $0x28] sm:$0xf]
        %v3904 = vld [vmem:[%s3268 + $0x2c] sm:$0x1]
        %v3905 = vld [vmem:[%s3268 + $0x30] sm:$0xe]
        %v3906 = vld [vmem:[%s3268 + $0x34] sm:$0xf]
        %v3907 = vld [vmem:[%s3268 + $0x38] sm:$0x1]
        %v3908 = vld [vmem:[%s3268 + $0x3c] sm:$0xe]
        %v3909 = vld [vmem:[%s3268 + $0x40] sm:$0xf]
        %v3910 = vld [vmem:[%s3268 + $0x44] sm:$0x1]
        %v3911 = vld [vmem:[%s3268 + $0x48] sm:$0xe]
        %v3912 = vld [vmem:[%s3268 + $0x4c] sm:$0xf]
        %v3913 = vld [vmem:[%s3268 + $0x50] sm:$0x1]
        %v3914 = vld [vmem:[%s3268 + $0x54] sm:$0xe]
        %v3915 = vld [vmem:[%s3268 + $0x58] sm:$0xf]
        %v3916 = vld [vmem:[%s3268 + $0x5c] sm:$0x1]
        %v3917 = vld [vmem:[%s3268 + $0x60] sm:$0xe]
        %v3918 = vld [vmem:[%s3268 + $0x64] sm:$0xf]
        %v3919 = vld [vmem:[%s3268 + $0x68] sm:$0x1]
        %v3920 = vld [vmem:[%s3268 + $0x6c] sm:$0xe]
        %v3921 = vld [vmem:[%s3268 + $0x70] sm:$0xf]
        %v3922 = vld [vmem:[%s3268 + $0x74] sm:$0x1]
        %v3923 = vld [vmem:[%s3268 + $0x78] sm:$0xe]
        %v3924 = vld [vmem:[%s3268 + $0x7c] sm:$0xf]
        %v3925 = vld [vmem:[%s3268 + $0x80] sm:$0x1]
        %v3926 = vld [vmem:[%s3268 + $0x84] sm:$0xe]
        %v3927 = vld [vmem:[%s3268 + $0x88] sm:$0xf]
        %v3928 = vld [vmem:[%s3268 + $0x8c] sm:$0x1]
        %v3929 = vld [vmem:[%s3268 + $0x90] sm:$0xe]
        %v3930 = vld [vmem:[%s3268 + $0x94] sm:$0xf]
        %v3931 = vld [vmem:[%s3268 + $0x98] sm:$0x1]
        %v3932 = vld [vmem:[%s3268 + $0x9c] sm:$0xe]
        %v3933 = vld [vmem:[%s3268 + $0xa0] sm:$0xf]
        %v3934 = vld [vmem:[%s3268 + $0xa4] sm:$0x1]
        %v3935 = vld [vmem:[%s3268 + $0xa8] sm:$0xe]
        %v3936 = vld [vmem:[%s3268 + $0xac] sm:$0xf]
        %v3937 = vld [vmem:[%s3268 + $0xb0] sm:$0x1]
        %v3938 = vld [vmem:[%s3268 + $0xb4] sm:$0xe]
        %v3939 = vld [vmem:[%s3268 + $0xb8] sm:$0xf]
        %v3940 = vld [vmem:[%s3268 + $0xbc] sm:$0x1]
        %v3989 = vrot.slane %v3893, 5
        %v3990 = vrot.slane %v3989, 4
        %v3991 = vrot.slane %v3894, 5
        %v3992 = vsel %vm2067, %v3990, %v3991
        %v3993 = vrot.slane %v3991, 4
        %v3994 = vrot.slane %v3895, 5
        %v3995 = vsel %vm2067, %v3993, %v3994
        %v3996 = vrot.slane %v3896, 5
        %v3997 = vrot.slane %v3996, 4
        %v3998 = vrot.slane %v3897, 5
        %v3999 = vsel %vm2067, %v3997, %v3998
        %v4000 = vrot.slane %v3998, 4
        %v4001 = vrot.slane %v3898, 5
        %v4002 = vsel %vm2067, %v4000, %v4001
        %v4003 = vrot.slane %v3899, 5
        %v4004 = vrot.slane %v4003, 4
        %v4005 = vrot.slane %v3900, 5
        %v4006 = vsel %vm2067, %v4004, %v4005
        %v4007 = vrot.slane %v4005, 4
        %v4008 = vrot.slane %v3901, 5
        %v4009 = vsel %vm2067, %v4007, %v4008
        %v4010 = vrot.slane %v3902, 5
        %v4011 = vrot.slane %v4010, 4
        %v4012 = vrot.slane %v3903, 5
        %v4013 = vsel %vm2067, %v4011, %v4012
        %v4014 = vrot.slane %v4012, 4
        %v4015 = vrot.slane %v3904, 5
        %v4016 = vsel %vm2067, %v4014, %v4015
        %v4017 = vrot.slane %v3905, 5
        %v4018 = vrot.slane %v4017, 4
        %v4019 = vrot.slane %v3906, 5
        %v4020 = vsel %vm2067, %v4018, %v4019
        %v4021 = vrot.slane %v4019, 4
        %v4022 = vrot.slane %v3907, 5
        %v4023 = vsel %vm2067, %v4021, %v4022
        %v4024 = vrot.slane %v3908, 5
        %v4025 = vrot.slane %v4024, 4
        %v4026 = vrot.slane %v3909, 5
        %v4027 = vsel %vm2067, %v4025, %v4026
        %v4028 = vrot.slane %v4026, 4
        %v4029 = vrot.slane %v3910, 5
        %v4030 = vsel %vm2067, %v4028, %v4029
        %v4031 = vrot.slane %v3911, 5
        %v4032 = vrot.slane %v4031, 4
        %v4033 = vrot.slane %v3912, 5
        %v4034 = vsel %vm2067, %v4032, %v4033
        %v4035 = vrot.slane %v4033, 4
        %v4036 = vrot.slane %v3913, 5
        %v4037 = vsel %vm2067, %v4035, %v4036
        %v4038 = vrot.slane %v3914, 5
        %v4039 = vrot.slane %v4038, 4
        %v4040 = vrot.slane %v3915, 5
        %v4041 = vsel %vm2067, %v4039, %v4040
        %v4042 = vrot.slane %v4040, 4
        %v4043 = vrot.slane %v3916, 5
        %v4044 = vsel %vm2067, %v4042, %v4043
        %v4045 = vrot.slane %v3917, 5
        %v4046 = vrot.slane %v4045, 4
        %v4047 = vrot.slane %v3918, 5
        %v4048 = vsel %vm2067, %v4046, %v4047
        %v4049 = vrot.slane %v4047, 4
        %v4050 = vrot.slane %v3919, 5
        %v4051 = vsel %vm2067, %v4049, %v4050
        %v4052 = vrot.slane %v3920, 5
        %v4053 = vrot.slane %v4052, 4
        %v4054 = vrot.slane %v3921, 5
        %v4055 = vsel %vm2067, %v4053, %v4054
        %v4056 = vrot.slane %v4054, 4
        %v4057 = vrot.slane %v3922, 5
        %v4058 = vsel %vm2067, %v4056, %v4057
        %v4059 = vrot.slane %v3923, 5
        %v4060 = vrot.slane %v4059, 4
        %v4061 = vrot.slane %v3924, 5
        %v4062 = vsel %vm2067, %v4060, %v4061
        %v4063 = vrot.slane %v4061, 4
        %v4064 = vrot.slane %v3925, 5
        %v4065 = vsel %vm2067, %v4063, %v4064
        %v4066 = vrot.slane %v3926, 5
        %v4067 = vrot.slane %v4066, 4
        %v4068 = vrot.slane %v3927, 5
        %v4069 = vsel %vm2067, %v4067, %v4068
        %v4070 = vrot.slane %v4068, 4
        %v4071 = vrot.slane %v3928, 5
        %v4072 = vsel %vm2067, %v4070, %v4071
        %v4073 = vrot.slane %v3929, 5
        %v4074 = vrot.slane %v4073, 4
        %v4075 = vrot.slane %v3930, 5
        %v4076 = vsel %vm2067, %v4074, %v4075
        %v4077 = vrot.slane %v4075, 4
        %v4078 = vrot.slane %v3931, 5
        %v4079 = vsel %vm2067, %v4077, %v4078
        %v4080 = vrot.slane %v3932, 5
        %v4081 = vrot.slane %v4080, 4
        %v4082 = vrot.slane %v3933, 5
        %v4083 = vsel %vm2067, %v4081, %v4082
        %v4084 = vrot.slane %v4082, 4
        %v4085 = vrot.slane %v3934, 5
        %v4086 = vsel %vm2067, %v4084, %v4085
        %v4087 = vrot.slane %v3935, 5
        %v4088 = vrot.slane %v4087, 4
        %v4089 = vrot.slane %v3936, 5
        %v4090 = vsel %vm2067, %v4088, %v4089
        %v4091 = vrot.slane %v4089, 4
        %v4092 = vrot.slane %v3937, 5
        %v4093 = vsel %vm2067, %v4091, %v4092
        %v4094 = vrot.slane %v3938, 5
        %v4095 = vrot.slane %v4094, 4
        %v4096 = vrot.slane %v3939, 5
        %v4097 = vsel %vm2067, %v4095, %v4096
        %v4098 = vrot.slane %v4096, 4
        %v4099 = vrot.slane %v3940, 5
        %v4100 = vsel %vm2067, %v4098, %v4099
        %4133 = vst.msk [vmem:[#allocation3 + $0x10] sm:$0xf] %vm812, %v3992
        %4134 = vst.msk [vmem:[#allocation3 + $0x24] sm:$0xf] %vm812, %v3995
        %4135 = vst.msk [vmem:[#allocation3 + $0x38] sm:$0xf] %vm812, %v3999
        %4136 = vst.msk [vmem:[#allocation3 + $0x4c] sm:$0xf] %vm812, %v4002
        %4137 = vst.msk [vmem:[#allocation3 + $0x60] sm:$0xf] %vm812, %v4006
        %4138 = vst.msk [vmem:[#allocation3 + $0x74] sm:$0xf] %vm812, %v4009
        %4139 = vst.msk [vmem:[#allocation3 + $0x88] sm:$0xf] %vm812, %v4013
        %4140 = vst.msk [vmem:[#allocation3 + $0x9c] sm:$0xf] %vm812, %v4016
        %4141 = vst.msk [vmem:[#allocation3 + $0xb0] sm:$0xf] %vm812, %v4020
        %4142 = vst.msk [vmem:[#allocation3 + $0xc4] sm:$0xf] %vm812, %v4023
        %4143 = vst.msk [vmem:[#allocation3 + $0xd8] sm:$0xf] %vm812, %v4027
        %4144 = vst.msk [vmem:[#allocation3 + $0xec] sm:$0xf] %vm812, %v4030
        %4145 = vst.msk [vmem:[#allocation3 + $0x100] sm:$0xf] %vm812, %v4034
        %4146 = vst.msk [vmem:[#allocation3 + $0x114] sm:$0xf] %vm812, %v4037
        %4147 = vst.msk [vmem:[#allocation3 + $0x128] sm:$0xf] %vm812, %v4041
        %4148 = vst.msk [vmem:[#allocation3 + $0x13c] sm:$0xf] %vm812, %v4044
        %4149 = vst.msk [vmem:[#allocation3 + $0x150] sm:$0xf] %vm812, %v4048
        %4150 = vst.msk [vmem:[#allocation3 + $0x164] sm:$0xf] %vm812, %v4051
        %4151 = vst.msk [vmem:[#allocation3 + $0x178] sm:$0xf] %vm812, %v4055
        %4152 = vst.msk [vmem:[#allocation3 + $0x18c] sm:$0xf] %vm812, %v4058
        %4153 = vst.msk [vmem:[#allocation3 + $0x1a0] sm:$0xf] %vm812, %v4062
        %4154 = vst.msk [vmem:[#allocation3 + $0x1b4] sm:$0xf] %vm812, %v4065
        %4155 = vst.msk [vmem:[#allocation3 + $0x1c8] sm:$0xf] %vm812, %v4069
        %4156 = vst.msk [vmem:[#allocation3 + $0x1dc] sm:$0xf] %vm812, %v4072
        %4157 = vst.msk [vmem:[#allocation3 + $0x1f0] sm:$0xf] %vm812, %v4076
        %4158 = vst.msk [vmem:[#allocation3 + $0x204] sm:$0xf] %vm812, %v4079
        %4159 = vst.msk [vmem:[#allocation3 + $0x218] sm:$0xf] %vm812, %v4083
        %4160 = vst.msk [vmem:[#allocation3 + $0x22c] sm:$0xf] %vm812, %v4086
        %4161 = vst.msk [vmem:[#allocation3 + $0x240] sm:$0xf] %vm812, %v4090
        %4162 = vst.msk [vmem:[#allocation3 + $0x254] sm:$0xf] %vm812, %v4093
        %4163 = vst.msk [vmem:[#allocation3 + $0x268] sm:$0xf] %vm812, %v4097
        %4164 = vst.msk [vmem:[#allocation3 + $0x27c] sm:$0xf] %vm812, %v4100
        %v4165 = vld [vmem:[#allocation3] sm:$0xff]
        %v4166 = vld [vmem:[#allocation3 + $0x8] sm:$0xff]
        %v4167 = vld [vmem:[#allocation3 + $0x10] sm:$0xf]
        %v4168 = vld [vmem:[#allocation3 + $0x14] sm:$0xff]
        %v4169 = vld [vmem:[#allocation3 + $0x1c] sm:$0xff]
        %v4170 = vld [vmem:[#allocation3 + $0x24] sm:$0xf]
        %v4171 = vld [vmem:[#allocation3 + $0x28] sm:$0xff]
        %v4172 = vld [vmem:[#allocation3 + $0x30] sm:$0xff]
        %v4173 = vld [vmem:[#allocation3 + $0x38] sm:$0xf]
        %v4174 = vld [vmem:[#allocation3 + $0x3c] sm:$0xff]
        %v4175 = vld [vmem:[#allocation3 + $0x44] sm:$0xff]
        %v4176 = vld [vmem:[#allocation3 + $0x4c] sm:$0xf]
        %v4177 = vld [vmem:[#allocation3 + $0x50] sm:$0xff]
        %v4178 = vld [vmem:[#allocation3 + $0x58] sm:$0xff]
        %v4179 = vld [vmem:[#allocation3 + $0x60] sm:$0xf]
        %v4180 = vld [vmem:[#allocation3 + $0x64] sm:$0xff]
        %v4181 = vld [vmem:[#allocation3 + $0x6c] sm:$0xff]
        %v4182 = vld [vmem:[#allocation3 + $0x74] sm:$0xf]
        %v4183 = vld [vmem:[#allocation3 + $0x78] sm:$0xff]
        %v4184 = vld [vmem:[#allocation3 + $0x80] sm:$0xff]
        %v4185 = vld [vmem:[#allocation3 + $0x88] sm:$0xf]
        %v4186 = vld [vmem:[#allocation3 + $0x8c] sm:$0xff]
        %v4187 = vld [vmem:[#allocation3 + $0x94] sm:$0xff]
        %v4188 = vld [vmem:[#allocation3 + $0x9c] sm:$0xf]
        %v4189 = vld [vmem:[#allocation3 + $0xa0] sm:$0xff]
        %v4190 = vld [vmem:[#allocation3 + $0xa8] sm:$0xff]
        %v4191 = vld [vmem:[#allocation3 + $0xb0] sm:$0xf]
        %v4192 = vld [vmem:[#allocation3 + $0xb4] sm:$0xff]
        %v4193 = vld [vmem:[#allocation3 + $0xbc] sm:$0xff]
        %v4194 = vld [vmem:[#allocation3 + $0xc4] sm:$0xf]
        %v4195 = vld [vmem:[#allocation3 + $0xc8] sm:$0xff]
        %v4196 = vld [vmem:[#allocation3 + $0xd0] sm:$0xff]
        %v4197 = vld [vmem:[#allocation3 + $0xd8] sm:$0xf]
        %v4198 = vld [vmem:[#allocation3 + $0xdc] sm:$0xff]
        %v4199 = vld [vmem:[#allocation3 + $0xe4] sm:$0xff]
        %v4200 = vld [vmem:[#allocation3 + $0xec] sm:$0xf]
        %v4201 = vld [vmem:[#allocation3 + $0xf0] sm:$0xff]
        %v4202 = vld [vmem:[#allocation3 + $0xf8] sm:$0xff]
        %v4203 = vld [vmem:[#allocation3 + $0x100] sm:$0xf]
        %v4204 = vld [vmem:[#allocation3 + $0x104] sm:$0xff]
        %v4205 = vld [vmem:[#allocation3 + $0x10c] sm:$0xff]
        %v4206 = vld [vmem:[#allocation3 + $0x114] sm:$0xf]
        %v4207 = vld [vmem:[#allocation3 + $0x118] sm:$0xff]
        %v4208 = vld [vmem:[#allocation3 + $0x120] sm:$0xff]
        %v4209 = vld [vmem:[#allocation3 + $0x128] sm:$0xf]
        %v4210 = vld [vmem:[#allocation3 + $0x12c] sm:$0xff]
        %v4211 = vld [vmem:[#allocation3 + $0x134] sm:$0xff]
        %v4212 = vld [vmem:[#allocation3 + $0x13c] sm:$0xf]
        %v4213 = vld [vmem:[#allocation3 + $0x140] sm:$0xff]
        %v4214 = vld [vmem:[#allocation3 + $0x148] sm:$0xff]
        %v4215 = vld [vmem:[#allocation3 + $0x150] sm:$0xf]
        %v4216 = vld [vmem:[#allocation3 + $0x154] sm:$0xff]
        %v4217 = vld [vmem:[#allocation3 + $0x15c] sm:$0xff]
        %v4218 = vld [vmem:[#allocation3 + $0x164] sm:$0xf]
        %v4219 = vld [vmem:[#allocation3 + $0x168] sm:$0xff]
        %v4220 = vld [vmem:[#allocation3 + $0x170] sm:$0xff]
        %v4221 = vld [vmem:[#allocation3 + $0x178] sm:$0xf]
        %v4222 = vld [vmem:[#allocation3 + $0x17c] sm:$0xff]
        %v4223 = vld [vmem:[#allocation3 + $0x184] sm:$0xff]
        %v4224 = vld [vmem:[#allocation3 + $0x18c] sm:$0xf]
        %v4225 = vld [vmem:[#allocation3 + $0x190] sm:$0xff]
        %v4226 = vld [vmem:[#allocation3 + $0x198] sm:$0xff]
        %v4227 = vld [vmem:[#allocation3 + $0x1a0] sm:$0xf]
        %v4228 = vld [vmem:[#allocation3 + $0x1a4] sm:$0xff]
        %v4229 = vld [vmem:[#allocation3 + $0x1ac] sm:$0xff]
        %v4230 = vld [vmem:[#allocation3 + $0x1b4] sm:$0xf]
        %v4231 = vld [vmem:[#allocation3 + $0x1b8] sm:$0xff]
        %v4232 = vld [vmem:[#allocation3 + $0x1c0] sm:$0xff]
        %v4233 = vld [vmem:[#allocation3 + $0x1c8] sm:$0xf]
        %v4234 = vld [vmem:[#allocation3 + $0x1cc] sm:$0xff]
        %v4235 = vld [vmem:[#allocation3 + $0x1d4] sm:$0xff]
        %v4236 = vld [vmem:[#allocation3 + $0x1dc] sm:$0xf]
        %v4237 = vld [vmem:[#allocation3 + $0x1e0] sm:$0xff]
        %v4238 = vld [vmem:[#allocation3 + $0x1e8] sm:$0xff]
        %v4239 = vld [vmem:[#allocation3 + $0x1f0] sm:$0xf]
        %v4240 = vld [vmem:[#allocation3 + $0x1f4] sm:$0xff]
        %v4241 = vld [vmem:[#allocation3 + $0x1fc] sm:$0xff]
        %v4242 = vld [vmem:[#allocation3 + $0x204] sm:$0xf]
        %v4243 = vld [vmem:[#allocation3 + $0x208] sm:$0xff]
        %v4244 = vld [vmem:[#allocation3 + $0x210] sm:$0xff]
        %v4245 = vld [vmem:[#allocation3 + $0x218] sm:$0xf]
        %v4246 = vld [vmem:[#allocation3 + $0x21c] sm:$0xff]
        %v4247 = vld [vmem:[#allocation3 + $0x224] sm:$0xff]
        %v4248 = vld [vmem:[#allocation3 + $0x22c] sm:$0xf]
        %v4249 = vld [vmem:[#allocation3 + $0x230] sm:$0xff]
        %v4250 = vld [vmem:[#allocation3 + $0x238] sm:$0xff]
        %v4251 = vld [vmem:[#allocation3 + $0x240] sm:$0xf]
        %v4252 = vld [vmem:[#allocation3 + $0x244] sm:$0xff]
        %v4253 = vld [vmem:[#allocation3 + $0x24c] sm:$0xff]
        %v4254 = vld [vmem:[#allocation3 + $0x254] sm:$0xf]
        %v4255 = vld [vmem:[#allocation3 + $0x258] sm:$0xff]
        %v4256 = vld [vmem:[#allocation3 + $0x260] sm:$0xff]
        %v4257 = vld [vmem:[#allocation3 + $0x268] sm:$0xf]
        %v4258 = vld [vmem:[#allocation3 + $0x26c] sm:$0xff]
        %v4259 = vld [vmem:[#allocation3 + $0x274] sm:$0xff]
        %v4260 = vld [vmem:[#allocation3 + $0x27c] sm:$0xf]
        %v4261 = vld [vmem:[%s3] sm:$0xf]
        %v4262 = vld [vmem:[%s3 + $0x4] sm:$0xf]
        %v4263 = vld [vmem:[%s3 + $0x8] sm:$0xf]
        %v4264 = vld [vmem:[%s3 + $0xc] sm:$0xf]
        %v4265 = vld [vmem:[%s3 + $0x10] sm:$0xf]
        %v4266 = vld [vmem:[%s3 + $0x14] sm:$0xf]
        %v4267 = vld [vmem:[%s3 + $0x18] sm:$0xf]
        %v4268 = vld [vmem:[%s3 + $0x1c] sm:$0xf]
        %v4269 = vld [vmem:[%s3 + $0x20] sm:$0xf]
        %v4270 = vld [vmem:[%s3 + $0x24] sm:$0xf]
        %v4271 = vld [vmem:[%s3 + $0x28] sm:$0xf]
        %v4272 = vld [vmem:[%s3 + $0x2c] sm:$0xf]
        %v4273 = vld [vmem:[%s3 + $0x30] sm:$0xf]
        %v4274 = vld [vmem:[%s3 + $0x34] sm:$0xf]
        %v4275 = vld [vmem:[%s3 + $0x38] sm:$0xf]
        %v4276 = vld [vmem:[%s3 + $0x3c] sm:$0xf]
        %v4277 = vld [vmem:[%s3 + $0x40] sm:$0xf]
        %v4278 = vld [vmem:[%s3 + $0x44] sm:$0xf]
        %v4279 = vld [vmem:[%s3 + $0x48] sm:$0xf]
        %v4280 = vld [vmem:[%s3 + $0x4c] sm:$0xf]
        %v4281 = vld [vmem:[%s3 + $0x50] sm:$0xf]
        %v4282 = vld [vmem:[%s3 + $0x54] sm:$0xf]
        %v4283 = vld [vmem:[%s3 + $0x58] sm:$0xf]
        %v4284 = vld [vmem:[%s3 + $0x5c] sm:$0xf]
        %v4285 = vld [vmem:[%s3 + $0x60] sm:$0xf]
        %v4286 = vld [vmem:[%s3 + $0x64] sm:$0xf]
        %v4287 = vld [vmem:[%s3 + $0x68] sm:$0xf]
        %v4288 = vld [vmem:[%s3 + $0x6c] sm:$0xf]
        %v4289 = vld [vmem:[%s3 + $0x70] sm:$0xf]
        %v4290 = vld [vmem:[%s3 + $0x74] sm:$0xf]
        %v4291 = vld [vmem:[%s3 + $0x78] sm:$0xf]
        %v4292 = vld [vmem:[%s3 + $0x7c] sm:$0xf]
        %v4293 = vld [vmem:[%s3 + $0x80] sm:$0xf]
        %v4294 = vld [vmem:[%s3 + $0x84] sm:$0xf]
        %v4295 = vld [vmem:[%s3 + $0x88] sm:$0xf]
        %v4296 = vld [vmem:[%s3 + $0x8c] sm:$0xf]
        %v4297 = vld [vmem:[%s3 + $0x90] sm:$0xf]
        %v4298 = vld [vmem:[%s3 + $0x94] sm:$0xf]
        %v4299 = vld [vmem:[%s3 + $0x98] sm:$0xf]
        %v4300 = vld [vmem:[%s3 + $0x9c] sm:$0xf]
        %v4301 = vld [vmem:[%s3 + $0xa0] sm:$0xf]
        %v4302 = vld [vmem:[%s3 + $0xa4] sm:$0xf]
        %v4303 = vld [vmem:[%s3 + $0xa8] sm:$0xf]
        %v4304 = vld [vmem:[%s3 + $0xac] sm:$0xf]
        %v4305 = vld [vmem:[%s3 + $0xb0] sm:$0xf]
        %v4306 = vld [vmem:[%s3 + $0xb4] sm:$0xf]
        %v4307 = vld [vmem:[%s3 + $0xb8] sm:$0xf]
        %v4308 = vld [vmem:[%s3 + $0xbc] sm:$0xf]
        %v4309 = vld [vmem:[%s3 + $0xc0] sm:$0xf]
        %v4310 = vld [vmem:[%s3 + $0xc4] sm:$0xf]
        %v4311 = vld [vmem:[%s3 + $0xc8] sm:$0xf]
        %v4312 = vld [vmem:[%s3 + $0xcc] sm:$0xf]
        %v4313 = vld [vmem:[%s3 + $0xd0] sm:$0xf]
        %v4314 = vld [vmem:[%s3 + $0xd4] sm:$0xf]
        %v4315 = vld [vmem:[%s3 + $0xd8] sm:$0xf]
        %v4316 = vld [vmem:[%s3 + $0xdc] sm:$0xf]
        %v4317 = vld [vmem:[%s3 + $0xe0] sm:$0xf]
        %v4318 = vld [vmem:[%s3 + $0xe4] sm:$0xf]
        %v4319 = vld [vmem:[%s3 + $0xe8] sm:$0xf]
        %v4320 = vld [vmem:[%s3 + $0xec] sm:$0xf]
        %v4321 = vld [vmem:[%s3 + $0xf0] sm:$0xf]
        %v4322 = vld [vmem:[%s3 + $0xf4] sm:$0xf]
        %v4323 = vld [vmem:[%s3 + $0xf8] sm:$0xf]
        %v4324 = vld [vmem:[%s3 + $0xfc] sm:$0xf]
        %v4325 = vld [vmem:[%s3 + $0x100] sm:$0xf]
        %v4326 = vld [vmem:[%s3 + $0x104] sm:$0xf]
        %v4327 = vld [vmem:[%s3 + $0x108] sm:$0xf]
        %v4328 = vld [vmem:[%s3 + $0x10c] sm:$0xf]
        %v4329 = vld [vmem:[%s3 + $0x110] sm:$0xf]
        %v4330 = vld [vmem:[%s3 + $0x114] sm:$0xf]
        %v4331 = vld [vmem:[%s3 + $0x118] sm:$0xf]
        %v4332 = vld [vmem:[%s3 + $0x11c] sm:$0xf]
        %v4333 = vld [vmem:[%s4] sm:$0x1]
        %v4335 = vperm.slane %v4333, 0
        %v4433 = vunpack.c.l.b16 %v4165
        %v4434 = vunpack.c.h.b16 %v4165
        %v4435 = vunpack.c.l.b16 %v4166
        %v4436 = vunpack.c.h.b16 %v4166
        %v4437 = vunpack.c.l.b16 %v4167
        %v4438 = vunpack.c.l.b16 %v4168
        %v4439 = vunpack.c.h.b16 %v4168
        %v4440 = vunpack.c.l.b16 %v4169
        %v4441 = vunpack.c.h.b16 %v4169
        %v4442 = vunpack.c.l.b16 %v4170
        %v4443 = vunpack.c.l.b16 %v4171
        %v4444 = vunpack.c.h.b16 %v4171
        %v4445 = vunpack.c.l.b16 %v4172
        %v4446 = vunpack.c.h.b16 %v4172
        %v4447 = vunpack.c.l.b16 %v4173
        %v4448 = vunpack.c.l.b16 %v4174
        %v4449 = vunpack.c.h.b16 %v4174
        %v4450 = vunpack.c.l.b16 %v4175
        %v4451 = vunpack.c.h.b16 %v4175
        %v4452 = vunpack.c.l.b16 %v4176
        %v4453 = vunpack.c.l.b16 %v4177
        %v4454 = vunpack.c.h.b16 %v4177
        %v4455 = vunpack.c.l.b16 %v4178
        %v4456 = vunpack.c.h.b16 %v4178
        %v4457 = vunpack.c.l.b16 %v4179
        %v4458 = vunpack.c.l.b16 %v4180
        %v4459 = vunpack.c.h.b16 %v4180
        %v4460 = vunpack.c.l.b16 %v4181
        %v4461 = vunpack.c.h.b16 %v4181
        %v4462 = vunpack.c.l.b16 %v4182
        %v4463 = vunpack.c.l.b16 %v4183
        %v4464 = vunpack.c.h.b16 %v4183
        %v4465 = vunpack.c.l.b16 %v4184
        %v4466 = vunpack.c.h.b16 %v4184
        %v4467 = vunpack.c.l.b16 %v4185
        %v4468 = vunpack.c.l.b16 %v4186
        %v4469 = vunpack.c.h.b16 %v4186
        %v4470 = vunpack.c.l.b16 %v4187
        %v4471 = vunpack.c.h.b16 %v4187
        %v4472 = vunpack.c.l.b16 %v4188
        %v4473 = vunpack.c.l.b16 %v4189
        %v4474 = vunpack.c.h.b16 %v4189
        %v4475 = vunpack.c.l.b16 %v4190
        %v4476 = vunpack.c.h.b16 %v4190
        %v4477 = vunpack.c.l.b16 %v4191
        %v4478 = vunpack.c.l.b16 %v4192
        %v4479 = vunpack.c.h.b16 %v4192
        %v4480 = vunpack.c.l.b16 %v4193
        %v4481 = vunpack.c.h.b16 %v4193
        %v4482 = vunpack.c.l.b16 %v4194
        %v4483 = vunpack.c.l.b16 %v4195
        %v4484 = vunpack.c.h.b16 %v4195
        %v4485 = vunpack.c.l.b16 %v4196
        %v4486 = vunpack.c.h.b16 %v4196
        %v4487 = vunpack.c.l.b16 %v4197
        %v4488 = vunpack.c.l.b16 %v4198
        %v4489 = vunpack.c.h.b16 %v4198
        %v4490 = vunpack.c.l.b16 %v4199
        %v4491 = vunpack.c.h.b16 %v4199
        %v4492 = vunpack.c.l.b16 %v4200
        %v4493 = vunpack.c.l.b16 %v4201
        %v4494 = vunpack.c.h.b16 %v4201
        %v4495 = vunpack.c.l.b16 %v4202
        %v4496 = vunpack.c.h.b16 %v4202
        %v4497 = vunpack.c.l.b16 %v4203
        %v4498 = vunpack.c.l.b16 %v4204
        %v4499 = vunpack.c.h.b16 %v4204
        %v4500 = vunpack.c.l.b16 %v4205
        %v4501 = vunpack.c.h.b16 %v4205
        %v4502 = vunpack.c.l.b16 %v4206
        %v4503 = vunpack.c.l.b16 %v4207
        %v4504 = vunpack.c.h.b16 %v4207
        %v4505 = vunpack.c.l.b16 %v4208
        %v4506 = vunpack.c.h.b16 %v4208
        %v4507 = vunpack.c.l.b16 %v4209
        %v4508 = vunpack.c.l.b16 %v4210
        %v4509 = vunpack.c.h.b16 %v4210
        %v4510 = vunpack.c.l.b16 %v4211
        %v4511 = vunpack.c.h.b16 %v4211
        %v4512 = vunpack.c.l.b16 %v4212
        %v4513 = vunpack.c.l.b16 %v4213
        %v4514 = vunpack.c.h.b16 %v4213
        %v4515 = vunpack.c.l.b16 %v4214
        %v4516 = vunpack.c.h.b16 %v4214
        %v4517 = vunpack.c.l.b16 %v4215
        %v4518 = vunpack.c.l.b16 %v4216
        %v4519 = vunpack.c.h.b16 %v4216
        %v4520 = vunpack.c.l.b16 %v4217
        %v4521 = vunpack.c.h.b16 %v4217
        %v4522 = vunpack.c.l.b16 %v4218
        %v4523 = vunpack.c.l.b16 %v4219
        %v4524 = vunpack.c.h.b16 %v4219
        %v4525 = vunpack.c.l.b16 %v4220
        %v4526 = vunpack.c.h.b16 %v4220
        %v4527 = vunpack.c.l.b16 %v4221
        %v4528 = vunpack.c.l.b16 %v4222
        %v4529 = vunpack.c.h.b16 %v4222
        %v4530 = vunpack.c.l.b16 %v4223
        %v4531 = vunpack.c.h.b16 %v4223
        %v4532 = vunpack.c.l.b16 %v4224
        %v4533 = vunpack.c.l.b16 %v4225
        %v4534 = vunpack.c.h.b16 %v4225
        %v4535 = vunpack.c.l.b16 %v4226
        %v4536 = vunpack.c.h.b16 %v4226
        %v4537 = vunpack.c.l.b16 %v4227
        %v4538 = vunpack.c.l.b16 %v4228
        %v4539 = vunpack.c.h.b16 %v4228
        %v4540 = vunpack.c.l.b16 %v4229
        %v4541 = vunpack.c.h.b16 %v4229
        %v4542 = vunpack.c.l.b16 %v4230
        %v4543 = vunpack.c.l.b16 %v4231
        %v4544 = vunpack.c.h.b16 %v4231
        %v4545 = vunpack.c.l.b16 %v4232
        %v4546 = vunpack.c.h.b16 %v4232
        %v4547 = vunpack.c.l.b16 %v4233
        %v4548 = vunpack.c.l.b16 %v4234
        %v4549 = vunpack.c.h.b16 %v4234
        %v4550 = vunpack.c.l.b16 %v4235
        %v4551 = vunpack.c.h.b16 %v4235
        %v4552 = vunpack.c.l.b16 %v4236
        %v4553 = vunpack.c.l.b16 %v4237
        %v4554 = vunpack.c.h.b16 %v4237
        %v4555 = vunpack.c.l.b16 %v4238
        %v4556 = vunpack.c.h.b16 %v4238
        %v4557 = vunpack.c.l.b16 %v4239
        %v4558 = vunpack.c.l.b16 %v4240
        %v4559 = vunpack.c.h.b16 %v4240
        %v4560 = vunpack.c.l.b16 %v4241
        %v4561 = vunpack.c.h.b16 %v4241
        %v4562 = vunpack.c.l.b16 %v4242
        %v4563 = vunpack.c.l.b16 %v4243
        %v4564 = vunpack.c.h.b16 %v4243
        %v4565 = vunpack.c.l.b16 %v4244
        %v4566 = vunpack.c.h.b16 %v4244
        %v4567 = vunpack.c.l.b16 %v4245
        %v4568 = vunpack.c.l.b16 %v4246
        %v4569 = vunpack.c.h.b16 %v4246
        %v4570 = vunpack.c.l.b16 %v4247
        %v4571 = vunpack.c.h.b16 %v4247
        %v4572 = vunpack.c.l.b16 %v4248
        %v4573 = vunpack.c.l.b16 %v4249
        %v4574 = vunpack.c.h.b16 %v4249
        %v4575 = vunpack.c.l.b16 %v4250
        %v4576 = vunpack.c.h.b16 %v4250
        %v4577 = vunpack.c.l.b16 %v4251
        %v4578 = vunpack.c.l.b16 %v4252
        %v4579 = vunpack.c.h.b16 %v4252
        %v4580 = vunpack.c.l.b16 %v4253
        %v4581 = vunpack.c.h.b16 %v4253
        %v4582 = vunpack.c.l.b16 %v4254
        %v4583 = vunpack.c.l.b16 %v4255
        %v4584 = vunpack.c.h.b16 %v4255
        %v4585 = vunpack.c.l.b16 %v4256
        %v4586 = vunpack.c.h.b16 %v4256
        %v4587 = vunpack.c.l.b16 %v4257
        %v4588 = vunpack.c.l.b16 %v4258
        %v4589 = vunpack.c.h.b16 %v4258
        %v4590 = vunpack.c.l.b16 %v4259
        %v4591 = vunpack.c.h.b16 %v4259
        %v4592 = vunpack.c.l.b16 %v4260
        %v4593 = vpack.c.b16 %v4438, %v4433
        %v4594 = vpack.c.b16 %v4439, %v4434
        %v4595 = vpack.c.b16 %v4440, %v4435
        %v4596 = vpack.c.b16 %v4441, %v4436
        %v4597 = vpack.c.b16 %v4442, %v4437
        %v4598 = vpack.c.b16 %v4448, %v4443
        %v4599 = vpack.c.b16 %v4449, %v4444
        %v4600 = vpack.c.b16 %v4450, %v4445
        %v4601 = vpack.c.b16 %v4451, %v4446
        %v4602 = vpack.c.b16 %v4452, %v4447
        %v4603 = vpack.c.b16 %v4458, %v4453
        %v4604 = vpack.c.b16 %v4459, %v4454
        %v4605 = vpack.c.b16 %v4460, %v4455
        %v4606 = vpack.c.b16 %v4461, %v4456
        %v4607 = vpack.c.b16 %v4462, %v4457
        %v4608 = vpack.c.b16 %v4468, %v4463
        %v4609 = vpack.c.b16 %v4469, %v4464
        %v4610 = vpack.c.b16 %v4470, %v4465
        %v4611 = vpack.c.b16 %v4471, %v4466
        %v4612 = vpack.c.b16 %v4472, %v4467
        %v4613 = vpack.c.b16 %v4478, %v4473
        %v4614 = vpack.c.b16 %v4479, %v4474
        %v4615 = vpack.c.b16 %v4480, %v4475
        %v4616 = vpack.c.b16 %v4481, %v4476
        %v4617 = vpack.c.b16 %v4482, %v4477
        %v4618 = vpack.c.b16 %v4488, %v4483
        %v4619 = vpack.c.b16 %v4489, %v4484
        %v4620 = vpack.c.b16 %v4490, %v4485
        %v4621 = vpack.c.b16 %v4491, %v4486
        %v4622 = vpack.c.b16 %v4492, %v4487
        %v4623 = vpack.c.b16 %v4498, %v4493
        %v4624 = vpack.c.b16 %v4499, %v4494
        %v4625 = vpack.c.b16 %v4500, %v4495
        %v4626 = vpack.c.b16 %v4501, %v4496
        %v4627 = vpack.c.b16 %v4502, %v4497
        %v4628 = vpack.c.b16 %v4508, %v4503
        %v4629 = vpack.c.b16 %v4509, %v4504
        %v4630 = vpack.c.b16 %v4510, %v4505
        %v4631 = vpack.c.b16 %v4511, %v4506
        %v4632 = vpack.c.b16 %v4512, %v4507
        %v4633 = vpack.c.b16 %v4518, %v4513
        %v4634 = vpack.c.b16 %v4519, %v4514
        %v4635 = vpack.c.b16 %v4520, %v4515
        %v4636 = vpack.c.b16 %v4521, %v4516
        %v4637 = vpack.c.b16 %v4522, %v4517
        %v4638 = vpack.c.b16 %v4528, %v4523
        %v4639 = vpack.c.b16 %v4529, %v4524
        %v4640 = vpack.c.b16 %v4530, %v4525
        %v4641 = vpack.c.b16 %v4531, %v4526
        %v4642 = vpack.c.b16 %v4532, %v4527
        %v4643 = vpack.c.b16 %v4538, %v4533
        %v4644 = vpack.c.b16 %v4539, %v4534
        %v4645 = vpack.c.b16 %v4540, %v4535
        %v4646 = vpack.c.b16 %v4541, %v4536
        %v4647 = vpack.c.b16 %v4542, %v4537
        %v4648 = vpack.c.b16 %v4548, %v4543
        %v4649 = vpack.c.b16 %v4549, %v4544
        %v4650 = vpack.c.b16 %v4550, %v4545
        %v4651 = vpack.c.b16 %v4551, %v4546
        %v4652 = vpack.c.b16 %v4552, %v4547
        %v4653 = vpack.c.b16 %v4558, %v4553
        %v4654 = vpack.c.b16 %v4559, %v4554
        %v4655 = vpack.c.b16 %v4560, %v4555
        %v4656 = vpack.c.b16 %v4561, %v4556
        %v4657 = vpack.c.b16 %v4562, %v4557
        %v4658 = vpack.c.b16 %v4568, %v4563
        %v4659 = vpack.c.b16 %v4569, %v4564
        %v4660 = vpack.c.b16 %v4570, %v4565
        %v4661 = vpack.c.b16 %v4571, %v4566
        %v4662 = vpack.c.b16 %v4572, %v4567
        %v4663 = vpack.c.b16 %v4578, %v4573
        %v4664 = vpack.c.b16 %v4579, %v4574
        %v4665 = vpack.c.b16 %v4580, %v4575
        %v4666 = vpack.c.b16 %v4581, %v4576
        %v4667 = vpack.c.b16 %v4582, %v4577
        %v4668 = vpack.c.b16 %v4588, %v4583
        %v4669 = vpack.c.b16 %v4589, %v4584
        %v4670 = vpack.c.b16 %v4590, %v4585
        %v4671 = vpack.c.b16 %v4591, %v4586
        %v4672 = vpack.c.b16 %v4592, %v4587
        %v4809 = vunpack.c.l.b16 %v4261
        %v4810 = vunpack.c.l.b16 %v4262
        %v4811 = vunpack.c.l.b16 %v4263
        %v4812 = vunpack.c.l.b16 %v4264
        %v4813 = vunpack.c.l.b16 %v4265
        %v4814 = vunpack.c.l.b16 %v4266
        %v4815 = vunpack.c.l.b16 %v4267
        %v4816 = vunpack.c.l.b16 %v4268
        %v4817 = vunpack.c.l.b16 %v4269
        %v4818 = vunpack.c.l.b16 %v4270
        %v4819 = vunpack.c.l.b16 %v4271
        %v4820 = vunpack.c.l.b16 %v4272
        %v4821 = vunpack.c.l.b16 %v4273
        %v4822 = vunpack.c.l.b16 %v4274
        %v4823 = vunpack.c.l.b16 %v4275
        %v4824 = vunpack.c.l.b16 %v4276
        %v4825 = vunpack.c.l.b16 %v4277
        %v4826 = vunpack.c.l.b16 %v4278
        %v4827 = vunpack.c.l.b16 %v4279
        %v4828 = vunpack.c.l.b16 %v4280
        %v4829 = vunpack.c.l.b16 %v4281
        %v4830 = vunpack.c.l.b16 %v4282
        %v4831 = vunpack.c.l.b16 %v4283
        %v4832 = vunpack.c.l.b16 %v4284
        %v4833 = vunpack.c.l.b16 %v4285
        %v4834 = vunpack.c.l.b16 %v4286
        %v4835 = vunpack.c.l.b16 %v4287
        %v4836 = vunpack.c.l.b16 %v4288
        %v4837 = vunpack.c.l.b16 %v4289
        %v4838 = vunpack.c.l.b16 %v4290
        %v4839 = vunpack.c.l.b16 %v4291
        %v4840 = vunpack.c.l.b16 %v4292
        %v4841 = vunpack.c.l.b16 %v4293
        %v4842 = vunpack.c.l.b16 %v4294
        %v4843 = vunpack.c.l.b16 %v4295
        %v4844 = vunpack.c.l.b16 %v4296
        %v4845 = vunpack.c.l.b16 %v4297
        %v4846 = vunpack.c.l.b16 %v4298
        %v4847 = vunpack.c.l.b16 %v4299
        %v4848 = vunpack.c.l.b16 %v4300
        %v4849 = vunpack.c.l.b16 %v4301
        %v4850 = vunpack.c.l.b16 %v4302
        %v4851 = vunpack.c.l.b16 %v4303
        %v4852 = vunpack.c.l.b16 %v4304
        %v4853 = vunpack.c.l.b16 %v4305
        %v4854 = vunpack.c.l.b16 %v4306
        %v4855 = vunpack.c.l.b16 %v4307
        %v4856 = vunpack.c.l.b16 %v4308
        %v4857 = vunpack.c.l.b16 %v4309
        %v4858 = vunpack.c.l.b16 %v4310
        %v4859 = vunpack.c.l.b16 %v4311
        %v4860 = vunpack.c.l.b16 %v4312
        %v4861 = vunpack.c.l.b16 %v4313
        %v4862 = vunpack.c.l.b16 %v4314
        %v4863 = vunpack.c.l.b16 %v4315
        %v4864 = vunpack.c.l.b16 %v4316
        %v4865 = vunpack.c.l.b16 %v4317
        %v4866 = vunpack.c.l.b16 %v4318
        %v4867 = vunpack.c.l.b16 %v4319
        %v4868 = vunpack.c.l.b16 %v4320
        %v4869 = vunpack.c.l.b16 %v4321
        %v4870 = vunpack.c.l.b16 %v4322
        %v4871 = vunpack.c.l.b16 %v4323
        %v4872 = vunpack.c.l.b16 %v4324
        %v4873 = vunpack.c.l.b16 %v4325
        %v4874 = vunpack.c.l.b16 %v4326
        %v4875 = vunpack.c.l.b16 %v4327
        %v4876 = vunpack.c.l.b16 %v4328
        %v4877 = vunpack.c.l.b16 %v4329
        %v4878 = vunpack.c.l.b16 %v4330
        %v4879 = vunpack.c.l.b16 %v4331
        %v4880 = vunpack.c.l.b16 %v4332
        %v4881 = vpack.c.b16 %v4810, %v4809
        %v4882 = vpack.c.b16 %v4812, %v4811
        %v4883 = vpack.c.b16 %v4814, %v4813
        %v4884 = vpack.c.b16 %v4816, %v4815
        %v4885 = vpack.c.b16 %v4818, %v4817
        %v4886 = vpack.c.b16 %v4820, %v4819
        %v4887 = vpack.c.b16 %v4822, %v4821
        %v4888 = vpack.c.b16 %v4824, %v4823
        %v4889 = vpack.c.b16 %v4826, %v4825
        %v4890 = vpack.c.b16 %v4828, %v4827
        %v4891 = vpack.c.b16 %v4830, %v4829
        %v4892 = vpack.c.b16 %v4832, %v4831
        %v4893 = vpack.c.b16 %v4834, %v4833
        %v4894 = vpack.c.b16 %v4836, %v4835
        %v4895 = vpack.c.b16 %v4838, %v4837
        %v4896 = vpack.c.b16 %v4840, %v4839
        %v4897 = vpack.c.b16 %v4842, %v4841
        %v4898 = vpack.c.b16 %v4844, %v4843
        %v4899 = vpack.c.b16 %v4846, %v4845
        %v4900 = vpack.c.b16 %v4848, %v4847
        %v4901 = vpack.c.b16 %v4850, %v4849
        %v4902 = vpack.c.b16 %v4852, %v4851
        %v4903 = vpack.c.b16 %v4854, %v4853
        %v4904 = vpack.c.b16 %v4856, %v4855
        %v4905 = vpack.c.b16 %v4858, %v4857
        %v4906 = vpack.c.b16 %v4860, %v4859
        %v4907 = vpack.c.b16 %v4862, %v4861
        %v4908 = vpack.c.b16 %v4864, %v4863
        %v4909 = vpack.c.b16 %v4866, %v4865
        %v4910 = vpack.c.b16 %v4868, %v4867
        %v4911 = vpack.c.b16 %v4870, %v4869
        %v4912 = vpack.c.b16 %v4872, %v4871
        %v4913 = vpack.c.b16 %v4874, %v4873
        %v4914 = vpack.c.b16 %v4876, %v4875
        %v4915 = vpack.c.b16 %v4878, %v4877
        %v4916 = vpack.c.b16 %v4880, %v4879
        %vm4953 = vcmask 523264
        %v4955 = vsel %vm4953, %v4597, 0
        %v4958 = vsel %vm4953, %v4602, 0
        %v4961 = vsel %vm4953, %v4607, 0
        %v4964 = vsel %vm4953, %v4612, 0
        %v4967 = vsel %vm4953, %v4617, 0
        %v4970 = vsel %vm4953, %v4622, 0
        %v4973 = vsel %vm4953, %v4627, 0
        %v4976 = vsel %vm4953, %v4632, 0
        %v4979 = vsel %vm4953, %v4637, 0
        %v4982 = vsel %vm4953, %v4642, 0
        %v4985 = vsel %vm4953, %v4647, 0
        %v4988 = vsel %vm4953, %v4652, 0
        %v4991 = vsel %vm4953, %v4657, 0
        %v4994 = vsel %vm4953, %v4662, 0
        %v4997 = vsel %vm4953, %v4667, 0
        %v5000 = vsel %vm4953, %v4672, 0
        %5002 = vmatpush.bf16.msra.mxu0 %v4888
        %5003 = vmatpush.bf16.msra.mxu0 %v4887
        %5004 = vmatpush.bf16.msra.mxu0 %v4886
        %5005 = vmatpush.bf16.msra.mxu0 %v4885
        %5006 = vmatpush.bf16.msra.mxu0 %v4884
        %5007 = vmatpush.bf16.msra.mxu0 %v4883
        %5008 = vmatpush.bf16.msra.mxu0 %v4882
        %5009 = vmatpush.bf16.msra.mxu0 %v4881
        %5010 = vmatmul.bf16.gmra.mxu0 %v4593
        %v5011 = vpop.f32.mrf.mxu0
        %v5012 = vadd.f32 %v4335, %v5011
        %v5013 = vpop.f32.mrf.mxu0
        %v5014 = vadd.f32 %v4335, %v5013
        %5015 = vmatmul.bf16.gmra.mxu0 %v4598
        %v5016 = vpop.f32.mrf.mxu0
        %v5017 = vadd.f32 %v4335, %v5016
        %v5018 = vpop.f32.mrf.mxu0
        %v5019 = vadd.f32 %v4335, %v5018
        %5020 = vmatmul.bf16.gmra.mxu0 %v4603
        %v5021 = vpop.f32.mrf.mxu0
        %v5022 = vadd.f32 %v4335, %v5021
        %v5023 = vpop.f32.mrf.mxu0
        %v5024 = vadd.f32 %v4335, %v5023
        %5025 = vmatmul.bf16.gmra.mxu0 %v4608
        %v5026 = vpop.f32.mrf.mxu0
        %v5027 = vadd.f32 %v4335, %v5026
        %v5028 = vpop.f32.mrf.mxu0
        %v5029 = vadd.f32 %v4335, %v5028
        %5030 = vmatmul.bf16.gmra.mxu0 %v4613
        %v5031 = vpop.f32.mrf.mxu0
        %v5032 = vadd.f32 %v4335, %v5031
        %v5033 = vpop.f32.mrf.mxu0
        %v5034 = vadd.f32 %v4335, %v5033
        %5035 = vmatmul.bf16.gmra.mxu0 %v4618
        %v5036 = vpop.f32.mrf.mxu0
        %v5037 = vadd.f32 %v4335, %v5036
        %v5038 = vpop.f32.mrf.mxu0
        %v5039 = vadd.f32 %v4335, %v5038
        %5040 = vmatmul.bf16.gmra.mxu0 %v4623
        %v5041 = vpop.f32.mrf.mxu0
        %v5042 = vadd.f32 %v4335, %v5041
        %v5043 = vpop.f32.mrf.mxu0
        %v5044 = vadd.f32 %v4335, %v5043
        %5045 = vmatmul.bf16.gmra.mxu0 %v4628
        %v5046 = vpop.f32.mrf.mxu0
        %v5047 = vadd.f32 %v4335, %v5046
        %v5048 = vpop.f32.mrf.mxu0
        %v5049 = vadd.f32 %v4335, %v5048
        %5050 = vmatmul.bf16.gmra.mxu0 %v4633
        %v5051 = vpop.f32.mrf.mxu0
        %v5052 = vadd.f32 %v4335, %v5051
        %v5053 = vpop.f32.mrf.mxu0
        %v5054 = vadd.f32 %v4335, %v5053
        %5055 = vmatmul.bf16.gmra.mxu0 %v4638
        %v5056 = vpop.f32.mrf.mxu0
        %v5057 = vadd.f32 %v4335, %v5056
        %v5058 = vpop.f32.mrf.mxu0
        %v5059 = vadd.f32 %v4335, %v5058
        %5060 = vmatmul.bf16.gmra.mxu0 %v4643
        %v5061 = vpop.f32.mrf.mxu0
        %v5062 = vadd.f32 %v4335, %v5061
        %v5063 = vpop.f32.mrf.mxu0
        %v5064 = vadd.f32 %v4335, %v5063
        %5065 = vmatmul.bf16.gmra.mxu0 %v4648
        %v5066 = vpop.f32.mrf.mxu0
        %v5067 = vadd.f32 %v4335, %v5066
        %v5068 = vpop.f32.mrf.mxu0
        %v5069 = vadd.f32 %v4335, %v5068
        %5070 = vmatmul.bf16.gmra.mxu0 %v4653
        %v5071 = vpop.f32.mrf.mxu0
        %v5072 = vadd.f32 %v4335, %v5071
        %v5073 = vpop.f32.mrf.mxu0
        %v5074 = vadd.f32 %v4335, %v5073
        %5075 = vmatmul.bf16.gmra.mxu0 %v4658
        %v5076 = vpop.f32.mrf.mxu0
        %v5077 = vadd.f32 %v4335, %v5076
        %v5078 = vpop.f32.mrf.mxu0
        %v5079 = vadd.f32 %v4335, %v5078
        %5080 = vmatmul.bf16.gmra.mxu0 %v4663
        %v5081 = vpop.f32.mrf.mxu0
        %v5082 = vadd.f32 %v4335, %v5081
        %v5083 = vpop.f32.mrf.mxu0
        %v5084 = vadd.f32 %v4335, %v5083
        %5085 = vmatmul.bf16.gmra.mxu0 %v4668
        %v5086 = vpop.f32.mrf.mxu0
        %v5087 = vadd.f32 %v4335, %v5086
        %v5088 = vpop.f32.mrf.mxu0
        %v5089 = vadd.f32 %v4335, %v5088
        %5090 = vdwg.mxu0
        %5091 = vmatpush.bf16.msra.mxu0 %v4896
        %5092 = vmatpush.bf16.msra.mxu0 %v4895
        %5093 = vmatpush.bf16.msra.mxu0 %v4894
        %5094 = vmatpush.bf16.msra.mxu0 %v4893
        %5095 = vmatpush.bf16.msra.mxu0 %v4892
        %5096 = vmatpush.bf16.msra.mxu0 %v4891
        %5097 = vmatpush.bf16.msra.mxu0 %v4890
        %5098 = vmatpush.bf16.msra.mxu0 %v4889
        %5099 = vmatmul.bf16.gmra.mxu0 %v4594
        %v5100 = vpop.f32.mrf.mxu0
        %v5101 = vadd.f32 %v5012, %v5100
        %v5102 = vpop.f32.mrf.mxu0
        %v5103 = vadd.f32 %v5014, %v5102
        %5104 = vmatmul.bf16.gmra.mxu0 %v4599
        %v5105 = vpop.f32.mrf.mxu0
        %v5106 = vadd.f32 %v5017, %v5105
        %v5107 = vpop.f32.mrf.mxu0
        %v5108 = vadd.f32 %v5019, %v5107
        %5109 = vmatmul.bf16.gmra.mxu0 %v4604
        %v5110 = vpop.f32.mrf.mxu0
        %v5111 = vadd.f32 %v5022, %v5110
        %v5112 = vpop.f32.mrf.mxu0
        %v5113 = vadd.f32 %v5024, %v5112
        %5114 = vmatmul.bf16.gmra.mxu0 %v4609
        %v5115 = vpop.f32.mrf.mxu0
        %v5116 = vadd.f32 %v5027, %v5115
        %v5117 = vpop.f32.mrf.mxu0
        %v5118 = vadd.f32 %v5029, %v5117
        %5119 = vmatmul.bf16.gmra.mxu0 %v4614
        %v5120 = vpop.f32.mrf.mxu0
        %v5121 = vadd.f32 %v5032, %v5120
        %v5122 = vpop.f32.mrf.mxu0
        %v5123 = vadd.f32 %v5034, %v5122
        %5124 = vmatmul.bf16.gmra.mxu0 %v4619
        %v5125 = vpop.f32.mrf.mxu0
        %v5126 = vadd.f32 %v5037, %v5125
        %v5127 = vpop.f32.mrf.mxu0
        %v5128 = vadd.f32 %v5039, %v5127
        %5129 = vmatmul.bf16.gmra.mxu0 %v4624
        %v5130 = vpop.f32.mrf.mxu0
        %v5131 = vadd.f32 %v5042, %v5130
        %v5132 = vpop.f32.mrf.mxu0
        %v5133 = vadd.f32 %v5044, %v5132
        %5134 = vmatmul.bf16.gmra.mxu0 %v4629
        %v5135 = vpop.f32.mrf.mxu0
        %v5136 = vadd.f32 %v5047, %v5135
        %v5137 = vpop.f32.mrf.mxu0
        %v5138 = vadd.f32 %v5049, %v5137
        %5139 = vmatmul.bf16.gmra.mxu0 %v4634
        %v5140 = vpop.f32.mrf.mxu0
        %v5141 = vadd.f32 %v5052, %v5140
        %v5142 = vpop.f32.mrf.mxu0
        %v5143 = vadd.f32 %v5054, %v5142
        %5144 = vmatmul.bf16.gmra.mxu0 %v4639
        %v5145 = vpop.f32.mrf.mxu0
        %v5146 = vadd.f32 %v5057, %v5145
        %v5147 = vpop.f32.mrf.mxu0
        %v5148 = vadd.f32 %v5059, %v5147
        %5149 = vmatmul.bf16.gmra.mxu0 %v4644
        %v5150 = vpop.f32.mrf.mxu0
        %v5151 = vadd.f32 %v5062, %v5150
        %v5152 = vpop.f32.mrf.mxu0
        %v5153 = vadd.f32 %v5064, %v5152
        %5154 = vmatmul.bf16.gmra.mxu0 %v4649
        %v5155 = vpop.f32.mrf.mxu0
        %v5156 = vadd.f32 %v5067, %v5155
        %v5157 = vpop.f32.mrf.mxu0
        %v5158 = vadd.f32 %v5069, %v5157
        %5159 = vmatmul.bf16.gmra.mxu0 %v4654
        %v5160 = vpop.f32.mrf.mxu0
        %v5161 = vadd.f32 %v5072, %v5160
        %v5162 = vpop.f32.mrf.mxu0
        %v5163 = vadd.f32 %v5074, %v5162
        %5164 = vmatmul.bf16.gmra.mxu0 %v4659
        %v5165 = vpop.f32.mrf.mxu0
        %v5166 = vadd.f32 %v5077, %v5165
        %v5167 = vpop.f32.mrf.mxu0
        %v5168 = vadd.f32 %v5079, %v5167
        %5169 = vmatmul.bf16.gmra.mxu0 %v4664
        %v5170 = vpop.f32.mrf.mxu0
        %v5171 = vadd.f32 %v5082, %v5170
        %v5172 = vpop.f32.mrf.mxu0
        %v5173 = vadd.f32 %v5084, %v5172
        %5174 = vmatmul.bf16.gmra.mxu0 %v4669
        %v5175 = vpop.f32.mrf.mxu0
        %v5176 = vadd.f32 %v5087, %v5175
        %v5177 = vpop.f32.mrf.mxu0
        %v5178 = vadd.f32 %v5089, %v5177
        %5179 = vdwg.mxu0
        %5180 = vmatpush.bf16.msra.mxu0 %v4904
        %5181 = vmatpush.bf16.msra.mxu0 %v4903
        %5182 = vmatpush.bf16.msra.mxu0 %v4902
        %5183 = vmatpush.bf16.msra.mxu0 %v4901
        %5184 = vmatpush.bf16.msra.mxu0 %v4900
        %5185 = vmatpush.bf16.msra.mxu0 %v4899
        %5186 = vmatpush.bf16.msra.mxu0 %v4898
        %5187 = vmatpush.bf16.msra.mxu0 %v4897
        %5188 = vmatmul.bf16.gmra.mxu0 %v4595
        %v5189 = vpop.f32.mrf.mxu0
        %v5190 = vadd.f32 %v5101, %v5189
        %v5191 = vpop.f32.mrf.mxu0
        %v5192 = vadd.f32 %v5103, %v5191
        %5193 = vmatmul.bf16.gmra.mxu0 %v4600
        %v5194 = vpop.f32.mrf.mxu0
        %v5195 = vadd.f32 %v5106, %v5194
        %v5196 = vpop.f32.mrf.mxu0
        %v5197 = vadd.f32 %v5108, %v5196
        %5198 = vmatmul.bf16.gmra.mxu0 %v4605
        %v5199 = vpop.f32.mrf.mxu0
        %v5200 = vadd.f32 %v5111, %v5199
        %v5201 = vpop.f32.mrf.mxu0
        %v5202 = vadd.f32 %v5113, %v5201
        %5203 = vmatmul.bf16.gmra.mxu0 %v4610
        %v5204 = vpop.f32.mrf.mxu0
        %v5205 = vadd.f32 %v5116, %v5204
        %v5206 = vpop.f32.mrf.mxu0
        %v5207 = vadd.f32 %v5118, %v5206
        %5208 = vmatmul.bf16.gmra.mxu0 %v4615
        %v5209 = vpop.f32.mrf.mxu0
        %v5210 = vadd.f32 %v5121, %v5209
        %v5211 = vpop.f32.mrf.mxu0
        %v5212 = vadd.f32 %v5123, %v5211
        %5213 = vmatmul.bf16.gmra.mxu0 %v4620
        %v5214 = vpop.f32.mrf.mxu0
        %v5215 = vadd.f32 %v5126, %v5214
        %v5216 = vpop.f32.mrf.mxu0
        %v5217 = vadd.f32 %v5128, %v5216
        %5218 = vmatmul.bf16.gmra.mxu0 %v4625
        %v5219 = vpop.f32.mrf.mxu0
        %v5220 = vadd.f32 %v5131, %v5219
        %v5221 = vpop.f32.mrf.mxu0
        %v5222 = vadd.f32 %v5133, %v5221
        %5223 = vmatmul.bf16.gmra.mxu0 %v4630
        %v5224 = vpop.f32.mrf.mxu0
        %v5225 = vadd.f32 %v5136, %v5224
        %v5226 = vpop.f32.mrf.mxu0
        %v5227 = vadd.f32 %v5138, %v5226
        %5228 = vmatmul.bf16.gmra.mxu0 %v4635
        %v5229 = vpop.f32.mrf.mxu0
        %v5230 = vadd.f32 %v5141, %v5229
        %v5231 = vpop.f32.mrf.mxu0
        %v5232 = vadd.f32 %v5143, %v5231
        %5233 = vmatmul.bf16.gmra.mxu0 %v4640
        %v5234 = vpop.f32.mrf.mxu0
        %v5235 = vadd.f32 %v5146, %v5234
        %v5236 = vpop.f32.mrf.mxu0
        %v5237 = vadd.f32 %v5148, %v5236
        %5238 = vmatmul.bf16.gmra.mxu0 %v4645
        %v5239 = vpop.f32.mrf.mxu0
        %v5240 = vadd.f32 %v5151, %v5239
        %v5241 = vpop.f32.mrf.mxu0
        %v5242 = vadd.f32 %v5153, %v5241
        %5243 = vmatmul.bf16.gmra.mxu0 %v4650
        %v5244 = vpop.f32.mrf.mxu0
        %v5245 = vadd.f32 %v5156, %v5244
        %v5246 = vpop.f32.mrf.mxu0
        %v5247 = vadd.f32 %v5158, %v5246
        %5248 = vmatmul.bf16.gmra.mxu0 %v4655
        %v5249 = vpop.f32.mrf.mxu0
        %v5250 = vadd.f32 %v5161, %v5249
        %v5251 = vpop.f32.mrf.mxu0
        %v5252 = vadd.f32 %v5163, %v5251
        %5253 = vmatmul.bf16.gmra.mxu0 %v4660
        %v5254 = vpop.f32.mrf.mxu0
        %v5255 = vadd.f32 %v5166, %v5254
        %v5256 = vpop.f32.mrf.mxu0
        %v5257 = vadd.f32 %v5168, %v5256
        %5258 = vmatmul.bf16.gmra.mxu0 %v4665
        %v5259 = vpop.f32.mrf.mxu0
        %v5260 = vadd.f32 %v5171, %v5259
        %v5261 = vpop.f32.mrf.mxu0
        %v5262 = vadd.f32 %v5173, %v5261
        %5263 = vmatmul.bf16.gmra.mxu0 %v4670
        %v5264 = vpop.f32.mrf.mxu0
        %v5265 = vadd.f32 %v5176, %v5264
        %v5266 = vpop.f32.mrf.mxu0
        %v5267 = vadd.f32 %v5178, %v5266
        %5268 = vdwg.mxu0
        %5269 = vmatpush.bf16.msra.mxu0 %v4912
        %5270 = vmatpush.bf16.msra.mxu0 %v4911
        %5271 = vmatpush.bf16.msra.mxu0 %v4910
        %5272 = vmatpush.bf16.msra.mxu0 %v4909
        %5273 = vmatpush.bf16.msra.mxu0 %v4908
        %5274 = vmatpush.bf16.msra.mxu0 %v4907
        %5275 = vmatpush.bf16.msra.mxu0 %v4906
        %5276 = vmatpush.bf16.msra.mxu0 %v4905
        %5277 = vmatmul.bf16.gmra.mxu0 %v4596
        %v5278 = vpop.f32.mrf.mxu0
        %v5279 = vadd.f32 %v5190, %v5278
        %v5280 = vpop.f32.mrf.mxu0
        %v5281 = vadd.f32 %v5192, %v5280
        %5282 = vmatmul.bf16.gmra.mxu0 %v4601
        %v5283 = vpop.f32.mrf.mxu0
        %v5284 = vadd.f32 %v5195, %v5283
        %v5285 = vpop.f32.mrf.mxu0
        %v5286 = vadd.f32 %v5197, %v5285
        %5287 = vmatmul.bf16.gmra.mxu0 %v4606
        %v5288 = vpop.f32.mrf.mxu0
        %v5289 = vadd.f32 %v5200, %v5288
        %v5290 = vpop.f32.mrf.mxu0
        %v5291 = vadd.f32 %v5202, %v5290
        %5292 = vmatmul.bf16.gmra.mxu0 %v4611
        %v5293 = vpop.f32.mrf.mxu0
        %v5294 = vadd.f32 %v5205, %v5293
        %v5295 = vpop.f32.mrf.mxu0
        %v5296 = vadd.f32 %v5207, %v5295
        %5297 = vmatmul.bf16.gmra.mxu0 %v4616
        %v5298 = vpop.f32.mrf.mxu0
        %v5299 = vadd.f32 %v5210, %v5298
        %v5300 = vpop.f32.mrf.mxu0
        %v5301 = vadd.f32 %v5212, %v5300
        %5302 = vmatmul.bf16.gmra.mxu0 %v4621
        %v5303 = vpop.f32.mrf.mxu0
        %v5304 = vadd.f32 %v5215, %v5303
        %v5305 = vpop.f32.mrf.mxu0
        %v5306 = vadd.f32 %v5217, %v5305
        %5307 = vmatmul.bf16.gmra.mxu0 %v4626
        %v5308 = vpop.f32.mrf.mxu0
        %v5309 = vadd.f32 %v5220, %v5308
        %v5310 = vpop.f32.mrf.mxu0
        %v5311 = vadd.f32 %v5222, %v5310
        %5312 = vmatmul.bf16.gmra.mxu0 %v4631
        %v5313 = vpop.f32.mrf.mxu0
        %v5314 = vadd.f32 %v5225, %v5313
        %v5315 = vpop.f32.mrf.mxu0
        %v5316 = vadd.f32 %v5227, %v5315
        %5317 = vmatmul.bf16.gmra.mxu0 %v4636
        %v5318 = vpop.f32.mrf.mxu0
        %v5319 = vadd.f32 %v5230, %v5318
        %v5320 = vpop.f32.mrf.mxu0
        %v5321 = vadd.f32 %v5232, %v5320
        %5322 = vmatmul.bf16.gmra.mxu0 %v4641
        %v5323 = vpop.f32.mrf.mxu0
        %v5324 = vadd.f32 %v5235, %v5323
        %v5325 = vpop.f32.mrf.mxu0
        %v5326 = vadd.f32 %v5237, %v5325
        %5327 = vmatmul.bf16.gmra.mxu0 %v4646
        %v5328 = vpop.f32.mrf.mxu0
        %v5329 = vadd.f32 %v5240, %v5328
        %v5330 = vpop.f32.mrf.mxu0
        %v5331 = vadd.f32 %v5242, %v5330
        %5332 = vmatmul.bf16.gmra.mxu0 %v4651
        %v5333 = vpop.f32.mrf.mxu0
        %v5334 = vadd.f32 %v5245, %v5333
        %v5335 = vpop.f32.mrf.mxu0
        %v5336 = vadd.f32 %v5247, %v5335
        %5337 = vmatmul.bf16.gmra.mxu0 %v4656
        %v5338 = vpop.f32.mrf.mxu0
        %v5339 = vadd.f32 %v5250, %v5338
        %v5340 = vpop.f32.mrf.mxu0
        %v5341 = vadd.f32 %v5252, %v5340
        %5342 = vmatmul.bf16.gmra.mxu0 %v4661
        %v5343 = vpop.f32.mrf.mxu0
        %v5344 = vadd.f32 %v5255, %v5343
        %v5345 = vpop.f32.mrf.mxu0
        %v5346 = vadd.f32 %v5257, %v5345
        %5347 = vmatmul.bf16.gmra.mxu0 %v4666
        %v5348 = vpop.f32.mrf.mxu0
        %v5349 = vadd.f32 %v5260, %v5348
        %v5350 = vpop.f32.mrf.mxu0
        %v5351 = vadd.f32 %v5262, %v5350
        %5352 = vmatmul.bf16.gmra.mxu0 %v4671
        %v5353 = vpop.f32.mrf.mxu0
        %v5354 = vadd.f32 %v5265, %v5353
        %v5355 = vpop.f32.mrf.mxu0
        %v5356 = vadd.f32 %v5267, %v5355
        %5357 = vdwg.mxu0
        %5358 = vmatpush.bf16.msra.mxu0 0
        %5359 = vmatpush.bf16.msra.mxu0 0
        %5360 = vmatpush.bf16.msra.mxu0 0
        %5361 = vmatpush.bf16.msra.mxu0 0
        %5362 = vmatpush.bf16.msra.mxu0 %v4916
        %5363 = vmatpush.bf16.msra.mxu0 %v4915
        %5364 = vmatpush.bf16.msra.mxu0 %v4914
        %5365 = vmatpush.bf16.msra.mxu0 %v4913
        %5366 = vmatmul.bf16.gmra.mxu0 %v4955
        %v5367 = vpop.f32.mrf.mxu0
        %v5368 = vadd.f32 %v5279, %v5367
        %v5369 = vpop.f32.mrf.mxu0
        %v5370 = vadd.f32 %v5281, %v5369
        %5371 = vmatmul.bf16.gmra.mxu0 %v4958
        %v5372 = vpop.f32.mrf.mxu0
        %v5373 = vadd.f32 %v5284, %v5372
        %v5374 = vpop.f32.mrf.mxu0
        %v5375 = vadd.f32 %v5286, %v5374
        %5376 = vmatmul.bf16.gmra.mxu0 %v4961
        %v5377 = vpop.f32.mrf.mxu0
        %v5378 = vadd.f32 %v5289, %v5377
        %v5379 = vpop.f32.mrf.mxu0
        %v5380 = vadd.f32 %v5291, %v5379
        %5381 = vmatmul.bf16.gmra.mxu0 %v4964
        %v5382 = vpop.f32.mrf.mxu0
        %v5383 = vadd.f32 %v5294, %v5382
        %v5384 = vpop.f32.mrf.mxu0
        %v5385 = vadd.f32 %v5296, %v5384
        %5386 = vmatmul.bf16.gmra.mxu0 %v4967
        %v5387 = vpop.f32.mrf.mxu0
        %v5388 = vadd.f32 %v5299, %v5387
        %v5389 = vpop.f32.mrf.mxu0
        %v5390 = vadd.f32 %v5301, %v5389
        %5391 = vmatmul.bf16.gmra.mxu0 %v4970
        %v5392 = vpop.f32.mrf.mxu0
        %v5393 = vadd.f32 %v5304, %v5392
        %v5394 = vpop.f32.mrf.mxu0
        %v5395 = vadd.f32 %v5306, %v5394
        %5396 = vmatmul.bf16.gmra.mxu0 %v4973
        %v5397 = vpop.f32.mrf.mxu0
        %v5398 = vadd.f32 %v5309, %v5397
        %v5399 = vpop.f32.mrf.mxu0
        %v5400 = vadd.f32 %v5311, %v5399
        %5401 = vmatmul.bf16.gmra.mxu0 %v4976
        %v5402 = vpop.f32.mrf.mxu0
        %v5403 = vadd.f32 %v5314, %v5402
        %v5404 = vpop.f32.mrf.mxu0
        %v5405 = vadd.f32 %v5316, %v5404
        %5406 = vmatmul.bf16.gmra.mxu0 %v4979
        %v5407 = vpop.f32.mrf.mxu0
        %v5408 = vadd.f32 %v5319, %v5407
        %v5409 = vpop.f32.mrf.mxu0
        %v5410 = vadd.f32 %v5321, %v5409
        %5411 = vmatmul.bf16.gmra.mxu0 %v4982
        %v5412 = vpop.f32.mrf.mxu0
        %v5413 = vadd.f32 %v5324, %v5412
        %v5414 = vpop.f32.mrf.mxu0
        %v5415 = vadd.f32 %v5326, %v5414
        %5416 = vmatmul.bf16.gmra.mxu0 %v4985
        %v5417 = vpop.f32.mrf.mxu0
        %v5418 = vadd.f32 %v5329, %v5417
        %v5419 = vpop.f32.mrf.mxu0
        %v5420 = vadd.f32 %v5331, %v5419
        %5421 = vmatmul.bf16.gmra.mxu0 %v4988
        %v5422 = vpop.f32.mrf.mxu0
        %v5423 = vadd.f32 %v5334, %v5422
        %v5424 = vpop.f32.mrf.mxu0
        %v5425 = vadd.f32 %v5336, %v5424
        %5426 = vmatmul.bf16.gmra.mxu0 %v4991
        %v5427 = vpop.f32.mrf.mxu0
        %v5428 = vadd.f32 %v5339, %v5427
        %v5429 = vpop.f32.mrf.mxu0
        %v5430 = vadd.f32 %v5341, %v5429
        %5431 = vmatmul.bf16.gmra.mxu0 %v4994
        %v5432 = vpop.f32.mrf.mxu0
        %v5433 = vadd.f32 %v5344, %v5432
        %v5434 = vpop.f32.mrf.mxu0
        %v5435 = vadd.f32 %v5346, %v5434
        %5436 = vmatmul.bf16.gmra.mxu0 %v4997
        %v5437 = vpop.f32.mrf.mxu0
        %v5438 = vadd.f32 %v5349, %v5437
        %v5439 = vpop.f32.mrf.mxu0
        %v5440 = vadd.f32 %v5351, %v5439
        %5441 = vmatmul.bf16.gmra.mxu0 %v5000
        %v5442 = vpop.f32.mrf.mxu0
        %v5443 = vadd.f32 %v5354, %v5442
        %v5444 = vpop.f32.mrf.mxu0
        %v5445 = vadd.f32 %v5356, %v5444
        %5446 = vdwg.mxu0
        %v5447 = vmax.f32 %v5368, 0.0
        %v5448 = vmax.f32 %v5370, 0.0
        %v5449 = vmax.f32 %v5373, 0.0
        %v5450 = vmax.f32 %v5375, 0.0
        %v5451 = vmax.f32 %v5378, 0.0
        %v5452 = vmax.f32 %v5380, 0.0
        %v5453 = vmax.f32 %v5383, 0.0
        %v5454 = vmax.f32 %v5385, 0.0
        %v5455 = vmax.f32 %v5388, 0.0
        %v5456 = vmax.f32 %v5390, 0.0
        %v5457 = vmax.f32 %v5393, 0.0
        %v5458 = vmax.f32 %v5395, 0.0
        %v5459 = vmax.f32 %v5398, 0.0
        %v5460 = vmax.f32 %v5400, 0.0
        %v5461 = vmax.f32 %v5403, 0.0
        %v5462 = vmax.f32 %v5405, 0.0
        %v5463 = vmax.f32 %v5408, 0.0
        %v5464 = vmax.f32 %v5410, 0.0
        %v5465 = vmax.f32 %v5413, 0.0
        %v5466 = vmax.f32 %v5415, 0.0
        %v5467 = vmax.f32 %v5418, 0.0
        %v5468 = vmax.f32 %v5420, 0.0
        %v5469 = vmax.f32 %v5423, 0.0
        %v5470 = vmax.f32 %v5425, 0.0
        %v5471 = vmax.f32 %v5428, 0.0
        %v5472 = vmax.f32 %v5430, 0.0
        %v5473 = vmax.f32 %v5433, 0.0
        %v5474 = vmax.f32 %v5435, 0.0
        %v5475 = vmax.f32 %v5438, 0.0
        %v5476 = vmax.f32 %v5440, 0.0
        %v5477 = vmax.f32 %v5443, 0.0
        %v5478 = vmax.f32 %v5445, 0.0
        %v5479 = vpack.c.bf16 %v5447, %v5447
        %v5480 = vpack.c.bf16 %v5448, %v5448
        %v5481 = vpack.c.bf16 %v5449, %v5449
        %v5482 = vpack.c.bf16 %v5450, %v5450
        %v5483 = vpack.c.bf16 %v5451, %v5451
        %v5484 = vpack.c.bf16 %v5452, %v5452
        %v5485 = vpack.c.bf16 %v5453, %v5453
        %v5486 = vpack.c.bf16 %v5454, %v5454
        %v5487 = vpack.c.bf16 %v5455, %v5455
        %v5488 = vpack.c.bf16 %v5456, %v5456
        %v5489 = vpack.c.bf16 %v5457, %v5457
        %v5490 = vpack.c.bf16 %v5458, %v5458
        %v5491 = vpack.c.bf16 %v5459, %v5459
        %v5492 = vpack.c.bf16 %v5460, %v5460
        %v5493 = vpack.c.bf16 %v5461, %v5461
        %v5494 = vpack.c.bf16 %v5462, %v5462
        %v5495 = vpack.c.bf16 %v5463, %v5463
        %v5496 = vpack.c.bf16 %v5464, %v5464
        %v5497 = vpack.c.bf16 %v5465, %v5465
        %v5498 = vpack.c.bf16 %v5466, %v5466
        %v5499 = vpack.c.bf16 %v5467, %v5467
        %v5500 = vpack.c.bf16 %v5468, %v5468
        %v5501 = vpack.c.bf16 %v5469, %v5469
        %v5502 = vpack.c.bf16 %v5470, %v5470
        %v5503 = vpack.c.bf16 %v5471, %v5471
        %v5504 = vpack.c.bf16 %v5472, %v5472
        %v5505 = vpack.c.bf16 %v5473, %v5473
        %v5506 = vpack.c.bf16 %v5474, %v5474
        %v5507 = vpack.c.bf16 %v5475, %v5475
        %v5508 = vpack.c.bf16 %v5476, %v5476
        %v5509 = vpack.c.bf16 %v5477, %v5477
        %v5510 = vpack.c.bf16 %v5478, %v5478
        %5511 = vst.msk [vmem:[#allocation4] sm:$0xf] %vm812, %v5479
        %5512 = vst.msk [vmem:[#allocation4 + $0x4] sm:$0xf] %vm812, %v5480
        %5513 = vst.msk [vmem:[#allocation4 + $0x8] sm:$0xf] %vm812, %v5481
        %5514 = vst.msk [vmem:[#allocation4 + $0xc] sm:$0xf] %vm812, %v5482
        %5515 = vst.msk [vmem:[#allocation4 + $0x10] sm:$0xf] %vm812, %v5483
        %5516 = vst.msk [vmem:[#allocation4 + $0x14] sm:$0xf] %vm812, %v5484
        %5517 = vst.msk [vmem:[#allocation4 + $0x18] sm:$0xf] %vm812, %v5485
        %5518 = vst.msk [vmem:[#allocation4 + $0x1c] sm:$0xf] %vm812, %v5486
        %5519 = vst.msk [vmem:[#allocation4 + $0x20] sm:$0xf] %vm812, %v5487
        %5520 = vst.msk [vmem:[#allocation4 + $0x24] sm:$0xf] %vm812, %v5488
        %5521 = vst.msk [vmem:[#allocation4 + $0x28] sm:$0xf] %vm812, %v5489
        %5522 = vst.msk [vmem:[#allocation4 + $0x2c] sm:$0xf] %vm812, %v5490
        %5523 = vst.msk [vmem:[#allocation4 + $0x30] sm:$0xf] %vm812, %v5491
        %5524 = vst.msk [vmem:[#allocation4 + $0x34] sm:$0xf] %vm812, %v5492
        %5525 = vst.msk [vmem:[#allocation4 + $0x38] sm:$0xf] %vm812, %v5493
        %5526 = vst.msk [vmem:[#allocation4 + $0x3c] sm:$0xf] %vm812, %v5494
        %5527 = vst.msk [vmem:[#allocation4 + $0x40] sm:$0xf] %vm812, %v5495
        %5528 = vst.msk [vmem:[#allocation4 + $0x44] sm:$0xf] %vm812, %v5496
        %5529 = vst.msk [vmem:[#allocation4 + $0x48] sm:$0xf] %vm812, %v5497
        %5530 = vst.msk [vmem:[#allocation4 + $0x4c] sm:$0xf] %vm812, %v5498
        %5531 = vst.msk [vmem:[#allocation4 + $0x50] sm:$0xf] %vm812, %v5499
        %5532 = vst.msk [vmem:[#allocation4 + $0x54] sm:$0xf] %vm812, %v5500
        %5533 = vst.msk [vmem:[#allocation4 + $0x58] sm:$0xf] %vm812, %v5501
        %5534 = vst.msk [vmem:[#allocation4 + $0x5c] sm:$0xf] %vm812, %v5502
        %5535 = vst.msk [vmem:[#allocation4 + $0x60] sm:$0xf] %vm812, %v5503
        %5536 = vst.msk [vmem:[#allocation4 + $0x64] sm:$0xf] %vm812, %v5504
        %5537 = vst.msk [vmem:[#allocation4 + $0x68] sm:$0xf] %vm812, %v5505
        %5538 = vst.msk [vmem:[#allocation4 + $0x6c] sm:$0xf] %vm812, %v5506
        %5539 = vst.msk [vmem:[#allocation4 + $0x70] sm:$0xf] %vm812, %v5507
        %5540 = vst.msk [vmem:[#allocation4 + $0x74] sm:$0xf] %vm812, %v5508
        %5541 = vst.msk [vmem:[#allocation4 + $0x78] sm:$0xf] %vm812, %v5509
        %5542 = vst.msk [vmem:[#allocation4 + $0x7c] sm:$0xf] %vm812, %v5510
        %v5543 = vld [vmem:[%s5] sm:$0xff]
        %v5544 = vld [vmem:[%s5 + $0x8] sm:$0xff]
        %v5545 = vld [vmem:[%s5 + $0x10] sm:$0xff]
        %v5546 = vld [vmem:[%s5 + $0x18] sm:$0xff]
        %v5547 = vld [vmem:[%s5 + $0x20] sm:$0xff]
        %v5548 = vld [vmem:[%s5 + $0x28] sm:$0xff]
        %v5549 = vld [vmem:[%s5 + $0x30] sm:$0xff]
        %v5550 = vld [vmem:[%s5 + $0x38] sm:$0xff]
        %v5551 = vld [vmem:[%s6] sm:$0x3]
        %v5552 = vld [vmem:[#allocation4] sm:$0xf]
        %v5553 = vld [vmem:[#allocation4 + $0x4] sm:$0xf]
        %v5554 = vld [vmem:[#allocation4 + $0x8] sm:$0xf]
        %v5555 = vld [vmem:[#allocation4 + $0xc] sm:$0xf]
        %v5556 = vld [vmem:[#allocation4 + $0x10] sm:$0xf]
        %v5557 = vld [vmem:[#allocation4 + $0x14] sm:$0xf]
        %v5558 = vld [vmem:[#allocation4 + $0x18] sm:$0xf]
        %v5559 = vld [vmem:[#allocation4 + $0x1c] sm:$0xf]
        %v5561 = vperm.slane %v5551, 0
        %v5562 = vperm.slane %v5551, 1
        %v5573 = vunpack.c.l.b16 %v5552
        %v5574 = vunpack.c.l.b16 %v5553
        %v5575 = vunpack.c.l.b16 %v5554
        %v5576 = vunpack.c.l.b16 %v5555
        %v5577 = vunpack.c.l.b16 %v5556
        %v5578 = vunpack.c.l.b16 %v5557
        %v5579 = vunpack.c.l.b16 %v5558
        %v5580 = vunpack.c.l.b16 %v5559
        %v5581 = vpack.c.b16 %v5574, %v5573
        %v5582 = vpack.c.b16 %v5576, %v5575
        %v5583 = vpack.c.b16 %v5578, %v5577
        %v5584 = vpack.c.b16 %v5580, %v5579
        %v5593 = vunpack.c.l.b16 %v5543
        %v5594 = vunpack.c.h.b16 %v5543
        %v5595 = vunpack.c.l.b16 %v5544
        %v5596 = vunpack.c.h.b16 %v5544
        %v5597 = vunpack.c.l.b16 %v5545
        %v5598 = vunpack.c.h.b16 %v5545
        %v5599 = vunpack.c.l.b16 %v5546
        %v5600 = vunpack.c.h.b16 %v5546
        %v5601 = vunpack.c.l.b16 %v5547
        %v5602 = vunpack.c.h.b16 %v5547
        %v5603 = vunpack.c.l.b16 %v5548
        %v5604 = vunpack.c.h.b16 %v5548
        %v5605 = vunpack.c.l.b16 %v5549
        %v5606 = vunpack.c.h.b16 %v5549
        %v5607 = vunpack.c.l.b16 %v5550
        %v5608 = vunpack.c.h.b16 %v5550
        %v5609 = vpack.c.b16 %v5595, %v5593
        %v5610 = vpack.c.b16 %v5596, %v5594
        %v5611 = vpack.c.b16 %v5599, %v5597
        %v5612 = vpack.c.b16 %v5600, %v5598
        %v5613 = vpack.c.b16 %v5603, %v5601
        %v5614 = vpack.c.b16 %v5604, %v5602
        %v5615 = vpack.c.b16 %v5607, %v5605
        %v5616 = vpack.c.b16 %v5608, %v5606
        %v5626 = vsel %vm4953, %v5581, 0
        %v5629 = vsel %vm4953, %v5582, 0
        %v5632 = vsel %vm4953, %v5583, 0
        %v5635 = vsel %vm4953, %v5584, 0
        %5637 = vmatpush.bf16.msra.mxu0 0
        %5638 = vmatpush.bf16.msra.mxu0 0
        %5639 = vmatpush.bf16.msra.mxu0 0
        %5640 = vmatpush.bf16.msra.mxu0 0
        %5641 = vmatpush.bf16.msra.mxu0 %v5615
        %5642 = vmatpush.bf16.msra.mxu0 %v5613
        %5643 = vmatpush.bf16.msra.mxu0 %v5611
        %5644 = vmatpush.bf16.msra.mxu0 %v5609
        %5645 = vmatmul.bf16.gmra.mxu0 %v5626
        %v5646 = vpop.f32.mrf.mxu0
        %v5647 = vadd.f32 %v5561, %v5646
        %v5648 = vpop.f32.mrf.mxu0
        %v5649 = vadd.f32 %v5561, %v5648
        %5650 = vmatmul.bf16.gmra.mxu0 %v5629
        %v5651 = vpop.f32.mrf.mxu0
        %v5652 = vadd.f32 %v5561, %v5651
        %v5653 = vpop.f32.mrf.mxu0
        %v5654 = vadd.f32 %v5561, %v5653
        %5655 = vmatmul.bf16.gmra.mxu0 %v5632
        %v5656 = vpop.f32.mrf.mxu0
        %v5657 = vadd.f32 %v5561, %v5656
        %v5658 = vpop.f32.mrf.mxu0
        %v5659 = vadd.f32 %v5561, %v5658
        %5660 = vmatmul.bf16.gmra.mxu0 %v5635
        %v5661 = vpop.f32.mrf.mxu0
        %v5662 = vadd.f32 %v5561, %v5661
        %v5663 = vpop.f32.mrf.mxu0
        %v5664 = vadd.f32 %v5561, %v5663
        %5665 = vdwg.mxu0
        %5666 = vmatpush.bf16.msra.mxu0 0
        %5667 = vmatpush.bf16.msra.mxu0 0
        %5668 = vmatpush.bf16.msra.mxu0 0
        %5669 = vmatpush.bf16.msra.mxu0 0
        %5670 = vmatpush.bf16.msra.mxu0 %v5616
        %5671 = vmatpush.bf16.msra.mxu0 %v5614
        %5672 = vmatpush.bf16.msra.mxu0 %v5612
        %5673 = vmatpush.bf16.msra.mxu0 %v5610
        %5674 = vmatmul.bf16.gmra.mxu0 %v5626
        %v5675 = vpop.f32.mrf.mxu0
        %v5676 = vadd.f32 %v5562, %v5675
        %v5677 = vpop.f32.mrf.mxu0
        %v5678 = vadd.f32 %v5562, %v5677
        %5679 = vmatmul.bf16.gmra.mxu0 %v5629
        %v5680 = vpop.f32.mrf.mxu0
        %v5681 = vadd.f32 %v5562, %v5680
        %v5682 = vpop.f32.mrf.mxu0
        %v5683 = vadd.f32 %v5562, %v5682
        %5684 = vmatmul.bf16.gmra.mxu0 %v5632
        %v5685 = vpop.f32.mrf.mxu0
        %v5686 = vadd.f32 %v5562, %v5685
        %v5687 = vpop.f32.mrf.mxu0
        %v5688 = vadd.f32 %v5562, %v5687
        %5689 = vmatmul.bf16.gmra.mxu0 %v5635
        %v5690 = vpop.f32.mrf.mxu0
        %v5691 = vadd.f32 %v5562, %v5690
        %v5692 = vpop.f32.mrf.mxu0
        %v5693 = vadd.f32 %v5562, %v5692
        %5694 = vdwg.mxu0
        %s5695 = smul.u32 0, 4
        %s5696 = smul.addr %s5695, 4
        %s5697 = scalar_lea.vmem %s276, %s5696
        %v5698 = vld [vmem:[%s5697] sm:$0xff]
        %v5699 = vld [vmem:[%s5697 + $0x8] sm:$0xff]
        %v5700 = vld [vmem:[%s5697 + $0x10] sm:$0xff]
        %v5701 = vld [vmem:[%s5697 + $0x18] sm:$0xff]
        %v5702 = vld [vmem:[%s5697 + $0x20] sm:$0xff]
        %v5703 = vld [vmem:[%s5697 + $0x28] sm:$0xff]
        %v5704 = vld [vmem:[%s5697 + $0x30] sm:$0xff]
        %v5705 = vld [vmem:[%s5697 + $0x38] sm:$0xff]
        %v5706 = vunpack.c.l.bf16 %v5698
        %v5707 = vunpack.c.h.bf16 %v5698
        %v5708 = vunpack.c.l.bf16 %v5699
        %v5709 = vunpack.c.h.bf16 %v5699
        %v5710 = vunpack.c.l.bf16 %v5700
        %v5711 = vunpack.c.h.bf16 %v5700
        %v5712 = vunpack.c.l.bf16 %v5701
        %v5713 = vunpack.c.h.bf16 %v5701
        %v5714 = vunpack.c.l.bf16 %v5702
        %v5715 = vunpack.c.h.bf16 %v5702
        %v5716 = vunpack.c.l.bf16 %v5703
        %v5717 = vunpack.c.h.bf16 %v5703
        %v5718 = vunpack.c.l.bf16 %v5704
        %v5719 = vunpack.c.h.bf16 %v5704
        %v5720 = vunpack.c.l.bf16 %v5705
        %v5721 = vunpack.c.h.bf16 %v5705
        %v5722 = vadd.f32 %v5647, %v5706
        %v5723 = vadd.f32 %v5676, %v5707
        %v5724 = vadd.f32 %v5649, %v5708
        %v5725 = vadd.f32 %v5678, %v5709
        %v5726 = vadd.f32 %v5652, %v5710
        %v5727 = vadd.f32 %v5681, %v5711
        %v5728 = vadd.f32 %v5654, %v5712
        %v5729 = vadd.f32 %v5683, %v5713
        %v5730 = vadd.f32 %v5657, %v5714
        %v5731 = vadd.f32 %v5686, %v5715
        %v5732 = vadd.f32 %v5659, %v5716
        %v5733 = vadd.f32 %v5688, %v5717
        %v5734 = vadd.f32 %v5662, %v5718
        %v5735 = vadd.f32 %v5691, %v5719
        %v5736 = vadd.f32 %v5664, %v5720
        %v5737 = vadd.f32 %v5693, %v5721
        %v5738 = vmax.f32 %v5722, 0.0
        %v5739 = vmax.f32 %v5723, 0.0
        %v5740 = vmax.f32 %v5724, 0.0
        %v5741 = vmax.f32 %v5725, 0.0
        %v5742 = vmax.f32 %v5726, 0.0
        %v5743 = vmax.f32 %v5727, 0.0
        %v5744 = vmax.f32 %v5728, 0.0
        %v5745 = vmax.f32 %v5729, 0.0
        %v5746 = vmax.f32 %v5730, 0.0
        %v5747 = vmax.f32 %v5731, 0.0
        %v5748 = vmax.f32 %v5732, 0.0
        %v5749 = vmax.f32 %v5733, 0.0
        %v5750 = vmax.f32 %v5734, 0.0
        %v5751 = vmax.f32 %v5735, 0.0
        %v5752 = vmax.f32 %v5736, 0.0
        %v5753 = vmax.f32 %v5737, 0.0
        %s5754 = smul.addr %s5695, 8
        %s5755 = scalar_lea.vmem %s271, %s5754 [#allocation5]
        %5756 = vst [vmem:[%s5755] sm:$0xff] %v5738
        %5757 = vst [vmem:[%s5755 + $0x8] sm:$0xff] %v5739
        %5758 = vst [vmem:[%s5755 + $0x10] sm:$0xff] %v5740
        %5759 = vst [vmem:[%s5755 + $0x18] sm:$0xff] %v5741
        %5760 = vst [vmem:[%s5755 + $0x20] sm:$0xff] %v5742
        %5761 = vst [vmem:[%s5755 + $0x28] sm:$0xff] %v5743
        %5762 = vst [vmem:[%s5755 + $0x30] sm:$0xff] %v5744
        %5763 = vst [vmem:[%s5755 + $0x38] sm:$0xff] %v5745
        %5764 = vst [vmem:[%s5755 + $0x40] sm:$0xff] %v5746
        %5765 = vst [vmem:[%s5755 + $0x48] sm:$0xff] %v5747
        %5766 = vst [vmem:[%s5755 + $0x50] sm:$0xff] %v5748
        %5767 = vst [vmem:[%s5755 + $0x58] sm:$0xff] %v5749
        %5768 = vst [vmem:[%s5755 + $0x60] sm:$0xff] %v5750
        %5769 = vst [vmem:[%s5755 + $0x68] sm:$0xff] %v5751
        %5770 = vst [vmem:[%s5755 + $0x70] sm:$0xff] %v5752
        %5771 = vst [vmem:[%s5755 + $0x78] sm:$0xff] %v5753
        %s5772 = scalar_lea.vmem [#allocation4], 32
        %v5773 = vld [vmem:[%s5772] sm:$0xf]
        %v5774 = vld [vmem:[%s5772 + $0x4] sm:$0xf]
        %v5775 = vld [vmem:[%s5772 + $0x8] sm:$0xf]
        %v5776 = vld [vmem:[%s5772 + $0xc] sm:$0xf]
        %v5777 = vld [vmem:[%s5772 + $0x10] sm:$0xf]
        %v5778 = vld [vmem:[%s5772 + $0x14] sm:$0xf]
        %v5779 = vld [vmem:[%s5772 + $0x18] sm:$0xf]
        %v5780 = vld [vmem:[%s5772 + $0x1c] sm:$0xf]
        %v5789 = vunpack.c.l.b16 %v5773
        %v5790 = vunpack.c.l.b16 %v5774
        %v5791 = vunpack.c.l.b16 %v5775
        %v5792 = vunpack.c.l.b16 %v5776
        %v5793 = vunpack.c.l.b16 %v5777
        %v5794 = vunpack.c.l.b16 %v5778
        %v5795 = vunpack.c.l.b16 %v5779
        %v5796 = vunpack.c.l.b16 %v5780
        %v5797 = vpack.c.b16 %v5790, %v5789
        %v5798 = vpack.c.b16 %v5792, %v5791
        %v5799 = vpack.c.b16 %v5794, %v5793
        %v5800 = vpack.c.b16 %v5796, %v5795
        %v5802 = vsel %vm4953, %v5797, 0
        %v5805 = vsel %vm4953, %v5798, 0
        %v5808 = vsel %vm4953, %v5799, 0
        %v5811 = vsel %vm4953, %v5800, 0
        %5813 = vmatpush.bf16.msra.mxu0 0
        %5814 = vmatpush.bf16.msra.mxu0 0
        %5815 = vmatpush.bf16.msra.mxu0 0
        %5816 = vmatpush.bf16.msra.mxu0 0
        %5817 = vmatpush.bf16.msra.mxu0 %v5615
        %5818 = vmatpush.bf16.msra.mxu0 %v5613
        %5819 = vmatpush.bf16.msra.mxu0 %v5611
        %5820 = vmatpush.bf16.msra.mxu0 %v5609
        %5821 = vmatmul.bf16.gmra.mxu0 %v5802
        %v5822 = vpop.f32.mrf.mxu0
        %v5823 = vadd.f32 %v5561, %v5822
        %v5824 = vpop.f32.mrf.mxu0
        %v5825 = vadd.f32 %v5561, %v5824
        %5826 = vmatmul.bf16.gmra.mxu0 %v5805
        %v5827 = vpop.f32.mrf.mxu0
        %v5828 = vadd.f32 %v5561, %v5827
        %v5829 = vpop.f32.mrf.mxu0
        %v5830 = vadd.f32 %v5561, %v5829
        %5831 = vmatmul.bf16.gmra.mxu0 %v5808
        %v5832 = vpop.f32.mrf.mxu0
        %v5833 = vadd.f32 %v5561, %v5832
        %v5834 = vpop.f32.mrf.mxu0
        %v5835 = vadd.f32 %v5561, %v5834
        %5836 = vmatmul.bf16.gmra.mxu0 %v5811
        %v5837 = vpop.f32.mrf.mxu0
        %v5838 = vadd.f32 %v5561, %v5837
        %v5839 = vpop.f32.mrf.mxu0
        %v5840 = vadd.f32 %v5561, %v5839
        %5841 = vdwg.mxu0
        %5842 = vmatpush.bf16.msra.mxu0 0
        %5843 = vmatpush.bf16.msra.mxu0 0
        %5844 = vmatpush.bf16.msra.mxu0 0
        %5845 = vmatpush.bf16.msra.mxu0 0
        %5846 = vmatpush.bf16.msra.mxu0 %v5616
        %5847 = vmatpush.bf16.msra.mxu0 %v5614
        %5848 = vmatpush.bf16.msra.mxu0 %v5612
        %5849 = vmatpush.bf16.msra.mxu0 %v5610
        %5850 = vmatmul.bf16.gmra.mxu0 %v5802
        %v5851 = vpop.f32.mrf.mxu0
        %v5852 = vadd.f32 %v5562, %v5851
        %v5853 = vpop.f32.mrf.mxu0
        %v5854 = vadd.f32 %v5562, %v5853
        %5855 = vmatmul.bf16.gmra.mxu0 %v5805
        %v5856 = vpop.f32.mrf.mxu0
        %v5857 = vadd.f32 %v5562, %v5856
        %v5858 = vpop.f32.mrf.mxu0
        %v5859 = vadd.f32 %v5562, %v5858
        %5860 = vmatmul.bf16.gmra.mxu0 %v5808
        %v5861 = vpop.f32.mrf.mxu0
        %v5862 = vadd.f32 %v5562, %v5861
        %v5863 = vpop.f32.mrf.mxu0
        %v5864 = vadd.f32 %v5562, %v5863
        %5865 = vmatmul.bf16.gmra.mxu0 %v5811
        %v5866 = vpop.f32.mrf.mxu0
        %v5867 = vadd.f32 %v5562, %v5866
        %v5868 = vpop.f32.mrf.mxu0
        %v5869 = vadd.f32 %v5562, %v5868
        %5870 = vdwg.mxu0
        %s5871 = smul.u32 4, 4
        %s5872 = smul.addr %s5871, 4
        %s5873 = scalar_lea.vmem %s276, %s5872
        %v5874 = vld [vmem:[%s5873] sm:$0xff]
        %v5875 = vld [vmem:[%s5873 + $0x8] sm:$0xff]
        %v5876 = vld [vmem:[%s5873 + $0x10] sm:$0xff]
        %v5877 = vld [vmem:[%s5873 + $0x18] sm:$0xff]
        %v5878 = vld [vmem:[%s5873 + $0x20] sm:$0xff]
        %v5879 = vld [vmem:[%s5873 + $0x28] sm:$0xff]
        %v5880 = vld [vmem:[%s5873 + $0x30] sm:$0xff]
        %v5881 = vld [vmem:[%s5873 + $0x38] sm:$0xff]
        %v5882 = vunpack.c.l.bf16 %v5874
        %v5883 = vunpack.c.h.bf16 %v5874
        %v5884 = vunpack.c.l.bf16 %v5875
        %v5885 = vunpack.c.h.bf16 %v5875
        %v5886 = vunpack.c.l.bf16 %v5876
        %v5887 = vunpack.c.h.bf16 %v5876
        %v5888 = vunpack.c.l.bf16 %v5877
        %v5889 = vunpack.c.h.bf16 %v5877
        %v5890 = vunpack.c.l.bf16 %v5878
        %v5891 = vunpack.c.h.bf16 %v5878
        %v5892 = vunpack.c.l.bf16 %v5879
        %v5893 = vunpack.c.h.bf16 %v5879
        %v5894 = vunpack.c.l.bf16 %v5880
        %v5895 = vunpack.c.h.bf16 %v5880
        %v5896 = vunpack.c.l.bf16 %v5881
        %v5897 = vunpack.c.h.bf16 %v5881
        %v5898 = vadd.f32 %v5823, %v5882
        %v5899 = vadd.f32 %v5852, %v5883
        %v5900 = vadd.f32 %v5825, %v5884
        %v5901 = vadd.f32 %v5854, %v5885
        %v5902 = vadd.f32 %v5828, %v5886
        %v5903 = vadd.f32 %v5857, %v5887
        %v5904 = vadd.f32 %v5830, %v5888
        %v5905 = vadd.f32 %v5859, %v5889
        %v5906 = vadd.f32 %v5833, %v5890
        %v5907 = vadd.f32 %v5862, %v5891
        %v5908 = vadd.f32 %v5835, %v5892
        %v5909 = vadd.f32 %v5864, %v5893
        %v5910 = vadd.f32 %v5838, %v5894
        %v5911 = vadd.f32 %v5867, %v5895
        %v5912 = vadd.f32 %v5840, %v5896
        %v5913 = vadd.f32 %v5869, %v5897
        %v5914 = vmax.f32 %v5898, 0.0
        %v5915 = vmax.f32 %v5899, 0.0
        %v5916 = vmax.f32 %v5900, 0.0
        %v5917 = vmax.f32 %v5901, 0.0
        %v5918 = vmax.f32 %v5902, 0.0
        %v5919 = vmax.f32 %v5903, 0.0
        %v5920 = vmax.f32 %v5904, 0.0
        %v5921 = vmax.f32 %v5905, 0.0
        %v5922 = vmax.f32 %v5906, 0.0
        %v5923 = vmax.f32 %v5907, 0.0
        %v5924 = vmax.f32 %v5908, 0.0
        %v5925 = vmax.f32 %v5909, 0.0
        %v5926 = vmax.f32 %v5910, 0.0
        %v5927 = vmax.f32 %v5911, 0.0
        %v5928 = vmax.f32 %v5912, 0.0
        %v5929 = vmax.f32 %v5913, 0.0
        %s5930 = smul.addr %s5871, 8
        %s5931 = scalar_lea.vmem %s271, %s5930 [#allocation5]
        %5932 = vst [vmem:[%s5931] sm:$0xff] %v5914
        %5933 = vst [vmem:[%s5931 + $0x8] sm:$0xff] %v5915
        %5934 = vst [vmem:[%s5931 + $0x10] sm:$0xff] %v5916
        %5935 = vst [vmem:[%s5931 + $0x18] sm:$0xff] %v5917
        %5936 = vst [vmem:[%s5931 + $0x20] sm:$0xff] %v5918
        %5937 = vst [vmem:[%s5931 + $0x28] sm:$0xff] %v5919
        %5938 = vst [vmem:[%s5931 + $0x30] sm:$0xff] %v5920
        %5939 = vst [vmem:[%s5931 + $0x38] sm:$0xff] %v5921
        %5940 = vst [vmem:[%s5931 + $0x40] sm:$0xff] %v5922
        %5941 = vst [vmem:[%s5931 + $0x48] sm:$0xff] %v5923
        %5942 = vst [vmem:[%s5931 + $0x50] sm:$0xff] %v5924
        %5943 = vst [vmem:[%s5931 + $0x58] sm:$0xff] %v5925
        %5944 = vst [vmem:[%s5931 + $0x60] sm:$0xff] %v5926
        %5945 = vst [vmem:[%s5931 + $0x68] sm:$0xff] %v5927
        %5946 = vst [vmem:[%s5931 + $0x70] sm:$0xff] %v5928
        %5947 = vst [vmem:[%s5931 + $0x78] sm:$0xff] %v5929
        %s5948 = scalar_lea.vmem [#allocation4], 64
        %v5949 = vld [vmem:[%s5948] sm:$0xf]
        %v5950 = vld [vmem:[%s5948 + $0x4] sm:$0xf]
        %v5951 = vld [vmem:[%s5948 + $0x8] sm:$0xf]
        %v5952 = vld [vmem:[%s5948 + $0xc] sm:$0xf]
        %v5953 = vld [vmem:[%s5948 + $0x10] sm:$0xf]
        %v5954 = vld [vmem:[%s5948 + $0x14] sm:$0xf]
        %v5955 = vld [vmem:[%s5948 + $0x18] sm:$0xf]
        %v5956 = vld [vmem:[%s5948 + $0x1c] sm:$0xf]
        %v5965 = vunpack.c.l.b16 %v5949
        %v5966 = vunpack.c.l.b16 %v5950
        %v5967 = vunpack.c.l.b16 %v5951
        %v5968 = vunpack.c.l.b16 %v5952
        %v5969 = vunpack.c.l.b16 %v5953
        %v5970 = vunpack.c.l.b16 %v5954
        %v5971 = vunpack.c.l.b16 %v5955
        %v5972 = vunpack.c.l.b16 %v5956
        %v5973 = vpack.c.b16 %v5966, %v5965
        %v5974 = vpack.c.b16 %v5968, %v5967
        %v5975 = vpack.c.b16 %v5970, %v5969
        %v5976 = vpack.c.b16 %v5972, %v5971
        %v5978 = vsel %vm4953, %v5973, 0
        %v5981 = vsel %vm4953, %v5974, 0
        %v5984 = vsel %vm4953, %v5975, 0
        %v5987 = vsel %vm4953, %v5976, 0
        %5989 = vmatpush.bf16.msra.mxu0 0
        %5990 = vmatpush.bf16.msra.mxu0 0
        %5991 = vmatpush.bf16.msra.mxu0 0
        %5992 = vmatpush.bf16.msra.mxu0 0
        %5993 = vmatpush.bf16.msra.mxu0 %v5615
        %5994 = vmatpush.bf16.msra.mxu0 %v5613
        %5995 = vmatpush.bf16.msra.mxu0 %v5611
        %5996 = vmatpush.bf16.msra.mxu0 %v5609
        %5997 = vmatmul.bf16.gmra.mxu0 %v5978
        %v5998 = vpop.f32.mrf.mxu0
        %v5999 = vadd.f32 %v5561, %v5998
        %v6000 = vpop.f32.mrf.mxu0
        %v6001 = vadd.f32 %v5561, %v6000
        %6002 = vmatmul.bf16.gmra.mxu0 %v5981
        %v6003 = vpop.f32.mrf.mxu0
        %v6004 = vadd.f32 %v5561, %v6003
        %v6005 = vpop.f32.mrf.mxu0
        %v6006 = vadd.f32 %v5561, %v6005
        %6007 = vmatmul.bf16.gmra.mxu0 %v5984
        %v6008 = vpop.f32.mrf.mxu0
        %v6009 = vadd.f32 %v5561, %v6008
        %v6010 = vpop.f32.mrf.mxu0
        %v6011 = vadd.f32 %v5561, %v6010
        %6012 = vmatmul.bf16.gmra.mxu0 %v5987
        %v6013 = vpop.f32.mrf.mxu0
        %v6014 = vadd.f32 %v5561, %v6013
        %v6015 = vpop.f32.mrf.mxu0
        %v6016 = vadd.f32 %v5561, %v6015
        %6017 = vdwg.mxu0
        %6018 = vmatpush.bf16.msra.mxu0 0
        %6019 = vmatpush.bf16.msra.mxu0 0
        %6020 = vmatpush.bf16.msra.mxu0 0
        %6021 = vmatpush.bf16.msra.mxu0 0
        %6022 = vmatpush.bf16.msra.mxu0 %v5616
        %6023 = vmatpush.bf16.msra.mxu0 %v5614
        %6024 = vmatpush.bf16.msra.mxu0 %v5612
        %6025 = vmatpush.bf16.msra.mxu0 %v5610
        %6026 = vmatmul.bf16.gmra.mxu0 %v5978
        %v6027 = vpop.f32.mrf.mxu0
        %v6028 = vadd.f32 %v5562, %v6027
        %v6029 = vpop.f32.mrf.mxu0
        %v6030 = vadd.f32 %v5562, %v6029
        %6031 = vmatmul.bf16.gmra.mxu0 %v5981
        %v6032 = vpop.f32.mrf.mxu0
        %v6033 = vadd.f32 %v5562, %v6032
        %v6034 = vpop.f32.mrf.mxu0
        %v6035 = vadd.f32 %v5562, %v6034
        %6036 = vmatmul.bf16.gmra.mxu0 %v5984
        %v6037 = vpop.f32.mrf.mxu0
        %v6038 = vadd.f32 %v5562, %v6037
        %v6039 = vpop.f32.mrf.mxu0
        %v6040 = vadd.f32 %v5562, %v6039
        %6041 = vmatmul.bf16.gmra.mxu0 %v5987
        %v6042 = vpop.f32.mrf.mxu0
        %v6043 = vadd.f32 %v5562, %v6042
        %v6044 = vpop.f32.mrf.mxu0
        %v6045 = vadd.f32 %v5562, %v6044
        %6046 = vdwg.mxu0
        %s6047 = smul.u32 8, 4
        %s6048 = smul.addr %s6047, 4
        %s6049 = scalar_lea.vmem %s276, %s6048
        %v6050 = vld [vmem:[%s6049] sm:$0xff]
        %v6051 = vld [vmem:[%s6049 + $0x8] sm:$0xff]
        %v6052 = vld [vmem:[%s6049 + $0x10] sm:$0xff]
        %v6053 = vld [vmem:[%s6049 + $0x18] sm:$0xff]
        %v6054 = vld [vmem:[%s6049 + $0x20] sm:$0xff]
        %v6055 = vld [vmem:[%s6049 + $0x28] sm:$0xff]
        %v6056 = vld [vmem:[%s6049 + $0x30] sm:$0xff]
        %v6057 = vld [vmem:[%s6049 + $0x38] sm:$0xff]
        %v6058 = vunpack.c.l.bf16 %v6050
        %v6059 = vunpack.c.h.bf16 %v6050
        %v6060 = vunpack.c.l.bf16 %v6051
        %v6061 = vunpack.c.h.bf16 %v6051
        %v6062 = vunpack.c.l.bf16 %v6052
        %v6063 = vunpack.c.h.bf16 %v6052
        %v6064 = vunpack.c.l.bf16 %v6053
        %v6065 = vunpack.c.h.bf16 %v6053
        %v6066 = vunpack.c.l.bf16 %v6054
        %v6067 = vunpack.c.h.bf16 %v6054
        %v6068 = vunpack.c.l.bf16 %v6055
        %v6069 = vunpack.c.h.bf16 %v6055
        %v6070 = vunpack.c.l.bf16 %v6056
        %v6071 = vunpack.c.h.bf16 %v6056
        %v6072 = vunpack.c.l.bf16 %v6057
        %v6073 = vunpack.c.h.bf16 %v6057
        %v6074 = vadd.f32 %v5999, %v6058
        %v6075 = vadd.f32 %v6028, %v6059
        %v6076 = vadd.f32 %v6001, %v6060
        %v6077 = vadd.f32 %v6030, %v6061
        %v6078 = vadd.f32 %v6004, %v6062
        %v6079 = vadd.f32 %v6033, %v6063
        %v6080 = vadd.f32 %v6006, %v6064
        %v6081 = vadd.f32 %v6035, %v6065
        %v6082 = vadd.f32 %v6009, %v6066
        %v6083 = vadd.f32 %v6038, %v6067
        %v6084 = vadd.f32 %v6011, %v6068
        %v6085 = vadd.f32 %v6040, %v6069
        %v6086 = vadd.f32 %v6014, %v6070
        %v6087 = vadd.f32 %v6043, %v6071
        %v6088 = vadd.f32 %v6016, %v6072
        %v6089 = vadd.f32 %v6045, %v6073
        %v6090 = vmax.f32 %v6074, 0.0
        %v6091 = vmax.f32 %v6075, 0.0
        %v6092 = vmax.f32 %v6076, 0.0
        %v6093 = vmax.f32 %v6077, 0.0
        %v6094 = vmax.f32 %v6078, 0.0
        %v6095 = vmax.f32 %v6079, 0.0
        %v6096 = vmax.f32 %v6080, 0.0
        %v6097 = vmax.f32 %v6081, 0.0
        %v6098 = vmax.f32 %v6082, 0.0
        %v6099 = vmax.f32 %v6083, 0.0
        %v6100 = vmax.f32 %v6084, 0.0
        %v6101 = vmax.f32 %v6085, 0.0
        %v6102 = vmax.f32 %v6086, 0.0
        %v6103 = vmax.f32 %v6087, 0.0
        %v6104 = vmax.f32 %v6088, 0.0
        %v6105 = vmax.f32 %v6089, 0.0
        %s6106 = smul.addr %s6047, 8
        %s6107 = scalar_lea.vmem %s271, %s6106 [#allocation5]
        %6108 = vst [vmem:[%s6107] sm:$0xff] %v6090
        %6109 = vst [vmem:[%s6107 + $0x8] sm:$0xff] %v6091
        %6110 = vst [vmem:[%s6107 + $0x10] sm:$0xff] %v6092
        %6111 = vst [vmem:[%s6107 + $0x18] sm:$0xff] %v6093
        %6112 = vst [vmem:[%s6107 + $0x20] sm:$0xff] %v6094
        %6113 = vst [vmem:[%s6107 + $0x28] sm:$0xff] %v6095
        %6114 = vst [vmem:[%s6107 + $0x30] sm:$0xff] %v6096
        %6115 = vst [vmem:[%s6107 + $0x38] sm:$0xff] %v6097
        %6116 = vst [vmem:[%s6107 + $0x40] sm:$0xff] %v6098
        %6117 = vst [vmem:[%s6107 + $0x48] sm:$0xff] %v6099
        %6118 = vst [vmem:[%s6107 + $0x50] sm:$0xff] %v6100
        %6119 = vst [vmem:[%s6107 + $0x58] sm:$0xff] %v6101
        %6120 = vst [vmem:[%s6107 + $0x60] sm:$0xff] %v6102
        %6121 = vst [vmem:[%s6107 + $0x68] sm:$0xff] %v6103
        %6122 = vst [vmem:[%s6107 + $0x70] sm:$0xff] %v6104
        %6123 = vst [vmem:[%s6107 + $0x78] sm:$0xff] %v6105
        %s6124 = scalar_lea.vmem [#allocation4], 96
        %v6125 = vld [vmem:[%s6124] sm:$0xf]
        %v6126 = vld [vmem:[%s6124 + $0x4] sm:$0xf]
        %v6127 = vld [vmem:[%s6124 + $0x8] sm:$0xf]
        %v6128 = vld [vmem:[%s6124 + $0xc] sm:$0xf]
        %v6129 = vld [vmem:[%s6124 + $0x10] sm:$0xf]
        %v6130 = vld [vmem:[%s6124 + $0x14] sm:$0xf]
        %v6131 = vld [vmem:[%s6124 + $0x18] sm:$0xf]
        %v6132 = vld [vmem:[%s6124 + $0x1c] sm:$0xf]
        %v6141 = vunpack.c.l.b16 %v6125
        %v6142 = vunpack.c.l.b16 %v6126
        %v6143 = vunpack.c.l.b16 %v6127
        %v6144 = vunpack.c.l.b16 %v6128
        %v6145 = vunpack.c.l.b16 %v6129
        %v6146 = vunpack.c.l.b16 %v6130
        %v6147 = vunpack.c.l.b16 %v6131
        %v6148 = vunpack.c.l.b16 %v6132
        %v6149 = vpack.c.b16 %v6142, %v6141
        %v6150 = vpack.c.b16 %v6144, %v6143
        %v6151 = vpack.c.b16 %v6146, %v6145
        %v6152 = vpack.c.b16 %v6148, %v6147
        %v6154 = vsel %vm4953, %v6149, 0
        %v6157 = vsel %vm4953, %v6150, 0
        %v6160 = vsel %vm4953, %v6151, 0
        %v6163 = vsel %vm4953, %v6152, 0
        %6165 = vmatpush.bf16.msra.mxu0 0
        %6166 = vmatpush.bf16.msra.mxu0 0
        %6167 = vmatpush.bf16.msra.mxu0 0
        %6168 = vmatpush.bf16.msra.mxu0 0
        %6169 = vmatpush.bf16.msra.mxu0 %v5615
        %6170 = vmatpush.bf16.msra.mxu0 %v5613
        %6171 = vmatpush.bf16.msra.mxu0 %v5611
        %6172 = vmatpush.bf16.msra.mxu0 %v5609
        %6173 = vmatmul.bf16.gmra.mxu0 %v6154
        %v6174 = vpop.f32.mrf.mxu0
        %v6175 = vadd.f32 %v5561, %v6174
        %v6176 = vpop.f32.mrf.mxu0
        %v6177 = vadd.f32 %v5561, %v6176
        %6178 = vmatmul.bf16.gmra.mxu0 %v6157
        %v6179 = vpop.f32.mrf.mxu0
        %v6180 = vadd.f32 %v5561, %v6179
        %v6181 = vpop.f32.mrf.mxu0
        %v6182 = vadd.f32 %v5561, %v6181
        %6183 = vmatmul.bf16.gmra.mxu0 %v6160
        %v6184 = vpop.f32.mrf.mxu0
        %v6185 = vadd.f32 %v5561, %v6184
        %v6186 = vpop.f32.mrf.mxu0
        %v6187 = vadd.f32 %v5561, %v6186
        %6188 = vmatmul.bf16.gmra.mxu0 %v6163
        %v6189 = vpop.f32.mrf.mxu0
        %v6190 = vadd.f32 %v5561, %v6189
        %v6191 = vpop.f32.mrf.mxu0
        %v6192 = vadd.f32 %v5561, %v6191
        %6193 = vdwg.mxu0
        %6194 = vmatpush.bf16.msra.mxu0 0
        %6195 = vmatpush.bf16.msra.mxu0 0
        %6196 = vmatpush.bf16.msra.mxu0 0
        %6197 = vmatpush.bf16.msra.mxu0 0
        %6198 = vmatpush.bf16.msra.mxu0 %v5616
        %6199 = vmatpush.bf16.msra.mxu0 %v5614
        %6200 = vmatpush.bf16.msra.mxu0 %v5612
        %6201 = vmatpush.bf16.msra.mxu0 %v5610
        %6202 = vmatmul.bf16.gmra.mxu0 %v6154
        %v6203 = vpop.f32.mrf.mxu0
        %v6204 = vadd.f32 %v5562, %v6203
        %v6205 = vpop.f32.mrf.mxu0
        %v6206 = vadd.f32 %v5562, %v6205
        %6207 = vmatmul.bf16.gmra.mxu0 %v6157
        %v6208 = vpop.f32.mrf.mxu0
        %v6209 = vadd.f32 %v5562, %v6208
        %v6210 = vpop.f32.mrf.mxu0
        %v6211 = vadd.f32 %v5562, %v6210
        %6212 = vmatmul.bf16.gmra.mxu0 %v6160
        %v6213 = vpop.f32.mrf.mxu0
        %v6214 = vadd.f32 %v5562, %v6213
        %v6215 = vpop.f32.mrf.mxu0
        %v6216 = vadd.f32 %v5562, %v6215
        %6217 = vmatmul.bf16.gmra.mxu0 %v6163
        %v6218 = vpop.f32.mrf.mxu0
        %v6219 = vadd.f32 %v5562, %v6218
        %v6220 = vpop.f32.mrf.mxu0
        %v6221 = vadd.f32 %v5562, %v6220
        %6222 = vdwg.mxu0
        %s6223 = smul.u32 12, 4
        %s6224 = smul.addr %s6223, 4
        %s6225 = scalar_lea.vmem %s276, %s6224
        %v6226 = vld [vmem:[%s6225] sm:$0xff]
        %v6227 = vld [vmem:[%s6225 + $0x8] sm:$0xff]
        %v6228 = vld [vmem:[%s6225 + $0x10] sm:$0xff]
        %v6229 = vld [vmem:[%s6225 + $0x18] sm:$0xff]
        %v6230 = vld [vmem:[%s6225 + $0x20] sm:$0xff]
        %v6231 = vld [vmem:[%s6225 + $0x28] sm:$0xff]
        %v6232 = vld [vmem:[%s6225 + $0x30] sm:$0xff]
        %v6233 = vld [vmem:[%s6225 + $0x38] sm:$0xff]
        %v6234 = vunpack.c.l.bf16 %v6226
        %v6235 = vunpack.c.h.bf16 %v6226
        %v6236 = vunpack.c.l.bf16 %v6227
        %v6237 = vunpack.c.h.bf16 %v6227
        %v6238 = vunpack.c.l.bf16 %v6228
        %v6239 = vunpack.c.h.bf16 %v6228
        %v6240 = vunpack.c.l.bf16 %v6229
        %v6241 = vunpack.c.h.bf16 %v6229
        %v6242 = vunpack.c.l.bf16 %v6230
        %v6243 = vunpack.c.h.bf16 %v6230
        %v6244 = vunpack.c.l.bf16 %v6231
        %v6245 = vunpack.c.h.bf16 %v6231
        %v6246 = vunpack.c.l.bf16 %v6232
        %v6247 = vunpack.c.h.bf16 %v6232
        %v6248 = vunpack.c.l.bf16 %v6233
        %v6249 = vunpack.c.h.bf16 %v6233
        %v6250 = vadd.f32 %v6175, %v6234
        %v6251 = vadd.f32 %v6204, %v6235
        %v6252 = vadd.f32 %v6177, %v6236
        %v6253 = vadd.f32 %v6206, %v6237
        %v6254 = vadd.f32 %v6180, %v6238
        %v6255 = vadd.f32 %v6209, %v6239
        %v6256 = vadd.f32 %v6182, %v6240
        %v6257 = vadd.f32 %v6211, %v6241
        %v6258 = vadd.f32 %v6185, %v6242
        %v6259 = vadd.f32 %v6214, %v6243
        %v6260 = vadd.f32 %v6187, %v6244
        %v6261 = vadd.f32 %v6216, %v6245
        %v6262 = vadd.f32 %v6190, %v6246
        %v6263 = vadd.f32 %v6219, %v6247
        %v6264 = vadd.f32 %v6192, %v6248
        %v6265 = vadd.f32 %v6221, %v6249
        %v6266 = vmax.f32 %v6250, 0.0
        %v6267 = vmax.f32 %v6251, 0.0
        %v6268 = vmax.f32 %v6252, 0.0
        %v6269 = vmax.f32 %v6253, 0.0
        %v6270 = vmax.f32 %v6254, 0.0
        %v6271 = vmax.f32 %v6255, 0.0
        %v6272 = vmax.f32 %v6256, 0.0
        %v6273 = vmax.f32 %v6257, 0.0
        %v6274 = vmax.f32 %v6258, 0.0
        %v6275 = vmax.f32 %v6259, 0.0
        %v6276 = vmax.f32 %v6260, 0.0
        %v6277 = vmax.f32 %v6261, 0.0
        %v6278 = vmax.f32 %v6262, 0.0
        %v6279 = vmax.f32 %v6263, 0.0
        %v6280 = vmax.f32 %v6264, 0.0
        %v6281 = vmax.f32 %v6265, 0.0
        %s6282 = smul.addr %s6223, 8
        %s6283 = scalar_lea.vmem %s271, %s6282 [#allocation5]
        %6284 = vst [vmem:[%s6283] sm:$0xff] %v6266
        %6285 = vst [vmem:[%s6283 + $0x8] sm:$0xff] %v6267
        %6286 = vst [vmem:[%s6283 + $0x10] sm:$0xff] %v6268
        %6287 = vst [vmem:[%s6283 + $0x18] sm:$0xff] %v6269
        %6288 = vst [vmem:[%s6283 + $0x20] sm:$0xff] %v6270
        %6289 = vst [vmem:[%s6283 + $0x28] sm:$0xff] %v6271
        %6290 = vst [vmem:[%s6283 + $0x30] sm:$0xff] %v6272
        %6291 = vst [vmem:[%s6283 + $0x38] sm:$0xff] %v6273
        %6292 = vst [vmem:[%s6283 + $0x40] sm:$0xff] %v6274
        %6293 = vst [vmem:[%s6283 + $0x48] sm:$0xff] %v6275
        %6294 = vst [vmem:[%s6283 + $0x50] sm:$0xff] %v6276
        %6295 = vst [vmem:[%s6283 + $0x58] sm:$0xff] %v6277
        %6296 = vst [vmem:[%s6283 + $0x60] sm:$0xff] %v6278
        %6297 = vst [vmem:[%s6283 + $0x68] sm:$0xff] %v6279
        %6298 = vst [vmem:[%s6283 + $0x70] sm:$0xff] %v6280
        %6299 = vst [vmem:[%s6283 + $0x78] sm:$0xff] %v6281
        %s6300 = sand.u32 %s181, 1
        %s6301 = scalar_lea.sflag [#allocation6], %s6300
        %s6302 = sand.u32 %s181, 1
        %s6303 = smul.addr %s6302, 512
        %s6304 = scalar_lea.vmem [#allocation5], %s6303
        // Predicated region
        $region49: #{bottleneck_forward.1} parent=47 // pred_check
          %p6305 = pneg %p191
        $region50: #{bottleneck_forward.1} parent=47 // pred_check_branch
          %6307 = sbr.rel (%p6305) target = $region52
        $region51: #{bottleneck_forward.1} parent=47 // pred_region
          %6309 = vsyncadd %s6301, 0
          %s6310 = smul.addr %s21, 64
          %s6311 = smul.addr %s6310, 8
          %s6312 = scalar_lea.hbm %s7, %s6311
          %s6313 = sshll.u32 %s6304, 4
          %s6314 = int_to_ptr.vmem [resolvable:$true] %s6313
          %s6315 = sshll.u32 %s6312, 4
          %s6316 = int_to_ptr.hbm [resolvable:$true] %s6315
          %6321 = dma.vmem_to_hbm [thread:$0]  %s6314, 8192, %s6316, %s6301, 256, 256, 16
        $region52: #{bottleneck_forward.1} parent=47 // pred_fallthru
          _
      $region48: #{bottleneck_forward.1} parent=5 // pred_fallthru
        _
      %p6322 = scmp.le.s32.totalorder 2, %s16
      // Predicated region
      $region53: #{bottleneck_forward.1} parent=5 // pred_check
        %p6323 = pneg %p6322
      $region54: #{bottleneck_forward.1} parent=5 // pred_check_branch
        %6325 = sbr.rel (%p6323) target = $region56
      $region55: #{bottleneck_forward.1} parent=5 // pred_region
        %s6326 = ssub.s32 %s16, 2
        // Predicated region
        $region57: #{bottleneck_forward.1} parent=55 // pred_check
          %p6327 = pneg %p197
        $region58: #{bottleneck_forward.1} parent=55 // pred_check_branch
          %6329 = sbr.rel (%p6327) target = $region60
        $region59: #{bottleneck_forward.1} parent=55 // pred_region
          %s6330 = sand.u32 %s182, 1
          %s6331 = scalar_lea.sflag [#allocation6], %s6330
          %s6332 = sand.u32 %s182, 1
          %s6333 = smul.addr %s6332, 512
          %s6334 = scalar_lea.vmem [#allocation5], %s6333
          %6336 = dma.done %s6331, 8192
        $region60: #{bottleneck_forward.1} parent=55 // pred_fallthru
          _
      $region56: #{bottleneck_forward.1} parent=5 // pred_fallthru
        _
    $region6: #{bottleneck_forward.1} parent=1 // loop_footer
      %s20 = sadd.s32 1, %s16
    $region7: #{bottleneck_forward.1} parent=1 // loop_footer_branch
      %15 = sbr.rel target = $region3
    $region8: #{bottleneck_forward.1} parent=1 // loop_exit
      _
    %6337 = vsyncpa [#allocation6], 1
    %s6338 = scalar_lea.sflag [#allocation6], 1
    %6339 = vsyncpa %s6338, 1

</llo_original>
